<compile_context>
chip_gen: v5e
topology: v5e:2x2
jax: 0.10.0
libtpu: 0.0.40
codegen_flags: <defaults>
</compile_context>

<pallas_src>
from functools import partial

import jax
import jax.numpy as jnp
import numpy as np
from jax.experimental import pallas as pl
from jax.experimental.pallas import tpu as pltpu

_BN_EPS = 1e-5
_LANE = 128


def _round_up(x, m):
    return (x + m - 1) // m * m


def _default_vmem_limit():
    # generation-aware scoped-VMEM budget: ~3/4 of physical, capped at 100 MiB
    # (=> ~48 MiB on v7x's 64 MiB VMEM, ~96-100 MiB on v5e/v6e's 128 MiB).
    try:
        cap = pltpu.get_tpu_info().vmem_capacity_bytes
        return int(min(cap * 3 // 4, 100 * 1024 * 1024))
    except Exception:
        return 32 * 1024 * 1024


_VMEM_LIMIT = _default_vmem_limit()


# ------------------------------ Pallas kernels ------------------------------ #

def _mm_bn_stats_kernel(x_ref, scale_ref, shift_ref, w_ref,
                        y_ref, sum_ref, sq_ref, *, apply_preact, m_true,
                        block_m):
    """Row-tiled 1x1 conv (matmul) with optional fused pre-activation BN+ReLU.

    BN statistics are emitted as a per-block (1, 1, C) slab (no resident
    accumulator) so the grid axis can be "parallel".  The ragged last tile is
    masked in-kernel; mask code is only generated when statically needed.
    """
    needs_mask = (m_true % block_m) != 0
    if needs_mask:
        row = (jax.lax.broadcasted_iota(jnp.int32, (block_m, 1), 0)
               + pl.program_id(0) * block_m)
        valid = row < m_true

    if apply_preact:                       # BN+ReLU of the previous stage (f32)
        a = x_ref[...].astype(jnp.float32)
        a = jnp.maximum(a * scale_ref[...] + shift_ref[...], 0.0)
        if needs_mask:
            a = jnp.where(valid, a, 0.0)
        a = a.astype(jnp.bfloat16)
    else:                                   # input is already bf16; no upcast
        a = x_ref[...]
        if needs_mask:
            a = jnp.where(valid, a, jnp.zeros_like(a))

    acc = jnp.dot(a, w_ref[...], preferred_element_type=jnp.float32)
    y_ref[...] = acc.astype(y_ref.dtype)
    sum_ref[...] = jnp.sum(acc, axis=0, keepdims=True).reshape(1, 1, -1)
    sq_ref[...] = jnp.sum(acc * acc, axis=0, keepdims=True).reshape(1, 1, -1)


def _conv3x3_stats_kernel(x_ref, scale_ref, shift_ref, w_ref,
                          y_ref, sum_ref, sq_ref, *, stride, cpad, ppad):
    """3x3 conv for one image with fused BN1+ReLU and in-VMEM zero padding.

    For stride==1 the 3 dx-shifted tensors are lane-concatenated so each dy
    tap is one (Ho*Wo, 3*C) x (3*C, P) matmul (3 MXU calls/image, not 9).
    """
    h, w = x_ref.shape[1], x_ref.shape[2]
    ho, wo = y_ref.shape[1], y_ref.shape[2]
    kcat = 3 * cpad

    # fused BN1 + ReLU (f32 affine math, bf16 activation for the MXU)
    a = x_ref[...].reshape(h, w, cpad).astype(jnp.float32)
    act = jnp.maximum(a * scale_ref[...].reshape(1, 1, cpad)
                      + shift_ref[...].reshape(1, 1, cpad), 0.0)
    act = act.astype(jnp.bfloat16)

    # vertical zero padding built at the value level (no HBM round trip)
    zrow = jnp.zeros((1, w, cpad), jnp.bfloat16)
    padv = jnp.concatenate([zrow, act, zrow], axis=0)        # (h+2, w, cpad)
    zcol = jnp.zeros((h + 2, 1, cpad), jnp.bfloat16)

    acc = jnp.zeros((ho * wo, ppad), jnp.float32)
    if stride == 1:
        win_l = jnp.concatenate([zcol, padv[:, :w - 1, :]], axis=1)   # dx = 0
        win_r = jnp.concatenate([padv[:, 1:, :], zcol], axis=1)       # dx = 2
        dx_cat = jnp.concatenate([win_l, padv, win_r], axis=-1)
        # dx_cat: (h+2, wo, 3*cpad); weight rows are ordered (dy, dx, c).
        for dy in range(3):
            win = dx_cat[dy:dy + ho, :, :].reshape(ho * wo, kcat)
            acc = acc + jnp.dot(win, w_ref[dy * kcat:(dy + 1) * kcat, :],
                                preferred_element_type=jnp.float32)
    else:
        # TODO(synk): stride > 1 fallback uses value-level strided slices
        # (slow sublane gathers) and is not exercised by the test below.
        full = jnp.concatenate([zcol, padv, zcol], axis=1)    # (h+2, w+2, cpad)
        for dy in range(3):
            for dx in range(3):
                winv = full[dy:dy + (ho - 1) * stride + 1:stride,
                            dx:dx + (wo - 1) * stride + 1:stride, :]
                k = dy * 3 + dx
                acc = acc + jnp.dot(winv.reshape(ho * wo, cpad),
                                    w_ref[k * cpad:(k + 1) * cpad, :],
                                    preferred_element_type=jnp.float32)

    y_ref[...] = acc.reshape(1, ho, wo, ppad).astype(y_ref.dtype)
    sum_ref[...] = jnp.sum(acc, axis=0, keepdims=True).reshape(1, 1, ppad)
    sq_ref[...] = jnp.sum(acc * acc, axis=0, keepdims=True).reshape(1, 1, ppad)


def _avgpool_bn_kernel(y_ref, scale_ref, shift_ref, o_ref, *, k):
    """Fused BN3 + ReLU + separable k x k stride-1 average pool (per image).
    The 1/k^2 normalization is pre-folded into scale/shift by the caller."""
    ho, wo, c = y_ref.shape[1], y_ref.shape[2], y_ref.shape[3]
    hp, wp = ho - k + 1, wo - k + 1
    a = y_ref[...].reshape(ho, wo, c).astype(jnp.float32)
    sc = scale_ref[...].reshape(1, 1, c)
    sh = shift_ref[...].reshape(1, 1, c)
    a = jnp.maximum(a * sc + sh, 0.0)
    tmp = a[:, 0:wp, :]
    for dj in range(1, k):                                   # k column adds
        tmp = tmp + a[:, dj:dj + wp, :]
    out = tmp[0:hp, :, :]
    for di in range(1, k):                                   # k row adds
        out = out + tmp[di:di + hp, :, :]
    o_ref[...] = out.reshape(1, hp, wp, c).astype(o_ref.dtype)


# -------------------------------- wrappers ---------------------------------- #

def _bn_scale_shift(sum_slabs, sq_slabs, m, gamma_pad, beta_pad):
    # training-mode BatchNorm: batch mean, biased variance over all m rows.
    # NOTE: E[x^2]-E[x]^2 in f32 (cancellation-prone at extreme scales; fine
    # here and matches the streamed one-pass statistics).
    s = jnp.sum(sum_slabs, axis=0)                          # (1, Ppad)
    q = jnp.sum(sq_slabs, axis=0)
    mean = s / float(m)
    var = jnp.maximum(q / float(m) - mean * mean, 0.0)
    inv = jax.lax.rsqrt(var + _BN_EPS)
    scale = gamma_pad * inv
    shift = beta_pad - mean * scale
    return scale, shift                                     # (1, Ppad) f32


def _matmul_bn_stats(x2d, scale_in, shift_in, w_pad, *, m_true, block_m,
                     apply_preact):
    kdim = x2d.shape[1]
    ppad = w_pad.shape[1]
    nblk = pl.cdiv(m_true, block_m)
    y, s, sq = pl.pallas_call(
        partial(_mm_bn_stats_kernel, apply_preact=apply_preact,
                m_true=m_true, block_m=block_m),
        grid=(nblk,),
        in_specs=[pl.BlockSpec((block_m, kdim), lambda i: (i, 0)),
                  pl.BlockSpec((1, kdim), lambda i: (0, 0)),
                  pl.BlockSpec((1, kdim), lambda i: (0, 0)),
                  pl.BlockSpec((kdim, ppad), lambda i: (0, 0))],
        out_specs=(pl.BlockSpec((block_m, ppad), lambda i: (i, 0)),
                   pl.BlockSpec((1, 1, ppad), lambda i: (i, 0, 0)),
                   pl.BlockSpec((1, 1, ppad), lambda i: (i, 0, 0))),
        out_shape=(jax.ShapeDtypeStruct((m_true, ppad), jnp.bfloat16),
                   jax.ShapeDtypeStruct((nblk, 1, ppad), jnp.float32),
                   jax.ShapeDtypeStruct((nblk, 1, ppad), jnp.float32)),
        compiler_params=pltpu.CompilerParams(
            dimension_semantics=("parallel",),
            vmem_limit_bytes=_VMEM_LIMIT),
    )(x2d, scale_in, shift_in, w_pad)
    return y, s, sq


def _conv3x3_stats(y1_nhwc, scale, shift, w_pad, *, stride):
    n, h, w, cpad = y1_nhwc.shape
    ppad = w_pad.shape[1]
    ho = (h + 2 - 3) // stride + 1
    wo = (w + 2 - 3) // stride + 1
    y, s, sq = pl.pallas_call(
        partial(_conv3x3_stats_kernel, stride=stride, cpad=cpad, ppad=ppad),
        grid=(n,),
        in_specs=[pl.BlockSpec((1, h, w, cpad), lambda i: (i, 0, 0, 0)),
                  pl.BlockSpec((1, cpad), lambda i: (0, 0)),
                  pl.BlockSpec((1, cpad), lambda i: (0, 0)),
                  pl.BlockSpec((9 * cpad, ppad), lambda i: (0, 0))],
        out_specs=(pl.BlockSpec((1, ho, wo, ppad), lambda i: (i, 0, 0, 0)),
                   pl.BlockSpec((1, 1, ppad), lambda i: (i, 0, 0)),
                   pl.BlockSpec((1, 1, ppad), lambda i: (i, 0, 0))),
        out_shape=(jax.ShapeDtypeStruct((n, ho, wo, ppad), jnp.bfloat16),
                   jax.ShapeDtypeStruct((n, 1, ppad), jnp.float32),
                   jax.ShapeDtypeStruct((n, 1, ppad), jnp.float32)),
        compiler_params=pltpu.CompilerParams(
            dimension_semantics=("parallel",),
            vmem_limit_bytes=_VMEM_LIMIT),
    )(y1_nhwc, scale, shift, w_pad)
    return y, s, sq


def _avgpool_bn(y_nhwc, scale, shift, *, k=7):
    n, ho, wo, ppad = y_nhwc.shape
    hp, wp = ho - k + 1, wo - k + 1
    return pl.pallas_call(
        partial(_avgpool_bn_kernel, k=k),
        grid=(n,),
        in_specs=[pl.BlockSpec((1, ho, wo, ppad), lambda i: (i, 0, 0, 0)),
                  pl.BlockSpec((1, ppad), lambda i: (0, 0)),
                  pl.BlockSpec((1, ppad), lambda i: (0, 0))],
        out_specs=pl.BlockSpec((1, hp, wp, ppad), lambda i: (i, 0, 0, 0)),
        out_shape=jax.ShapeDtypeStruct((n, hp, wp, ppad), jnp.bfloat16),
        compiler_params=pltpu.CompilerParams(
            dimension_semantics=("parallel",),
            vmem_limit_bytes=_VMEM_LIMIT),
    )(y_nhwc, scale, shift)


@partial(jax.jit, static_argnames=("stride", "block_m"))
def conv_bottle_forward(x_nchw, params, stride=1, block_m=1024):
    (w1, g1, b1, w2, g2, b2, w3, g3, b3) = params
    n, cin, h, w = x_nchw.shape
    p = w1.shape[0]
    ppad = _round_up(p, _LANE)                 # lane-dense output channels

    # ---- parameter prep (tiny, once per call) ----
    wm1 = jnp.zeros((cin, ppad), jnp.float32).at[:, :p].set(w1[:, :, 0, 0].T)
    wt2 = jnp.transpose(w2, (2, 3, 1, 0))                       # (dy,dx,in,out)
    wm2 = jnp.zeros((3, 3, ppad, ppad), jnp.float32).at[:, :, :p, :p].set(wt2)
    wm2 = wm2.reshape(9 * ppad, ppad)          # rows ordered (dy, dx, c_in)
    wm3 = jnp.zeros((ppad, ppad), jnp.float32).at[:p, :p].set(w3[:, :, 0, 0].T)
    wm1 = wm1.astype(jnp.bfloat16)
    wm2 = wm2.astype(jnp.bfloat16)
    wm3 = wm3.astype(jnp.bfloat16)

    def pad_param(v):
        return jnp.zeros((1, ppad), jnp.float32).at[0, :p].set(
            v.astype(jnp.float32))
    g1p, b1p, g2p, b2p, g3p, b3p = map(pad_param, (g1, b1, g2, b2, g3, b3))

    # ---- stage 1: 1x1 conv, streamed BN1 statistics ----
    x = jnp.transpose(x_nchw, (0, 2, 3, 1)).astype(jnp.bfloat16)   # NHWC
    m1 = n * h * w
    bm1 = min(block_m, _round_up(m1, 8))
    x2d = x.reshape(m1, cin)
    y1, s1, q1 = _matmul_bn_stats(
        x2d, jnp.ones((1, cin), jnp.float32), jnp.zeros((1, cin), jnp.float32),
        wm1, m_true=m1, block_m=bm1, apply_preact=False)
    sc1, sh1 = _bn_scale_shift(s1, q1, m1, g1p, b1p)

    # ---- stage 2: 3x3 conv with fused BN1+ReLU + in-kernel zero padding ----
    y1_nhwc = y1.reshape(n, h, w, ppad)                          # free reshape
    y2, s2, q2 = _conv3x3_stats(y1_nhwc, sc1, sh1, wm2, stride=stride)
    ho, wo = y2.shape[1], y2.shape[2]
    m2 = n * ho * wo
    sc2, sh2 = _bn_scale_shift(s2, q2, m2, g2p, b2p)

    # ---- stage 3: 1x1 conv with fused BN2+ReLU pre-activation ----
    bm2 = min(block_m, _round_up(m2, 8))
    y2_2d = y2.reshape(m2, ppad)                                 # free reshape
    y3, s3, q3 = _matmul_bn_stats(y2_2d, sc2, sh2, wm3,
                                  m_true=m2, block_m=bm2, apply_preact=True)
    sc3, sh3 = _bn_scale_shift(s3, q3, m2, g3p, b3p)

    # ---- stage 4: fused BN3+ReLU + separable AvgPool(7); 1/49 pre-folded ----
    inv_k2 = 1.0 / 49.0
    y3_nhwc = y3.reshape(n, ho, wo, ppad)                        # free reshape
    pooled = _avgpool_bn(y3_nhwc, sc3 * inv_k2, sh3 * inv_k2, k=7)

    # flatten in NCHW order to match torch's out.view(N, -1); transpose/cast
    # act on the small pooled tensor only.
    pooled = pooled[:, :, :, :p].astype(jnp.float32)
    return jnp.transpose(pooled, (0, 3, 1, 2)).reshape(n, -1)


# --------------------------- pure-JAX f32 reference -------------------------- #

def _reference_forward(x_nchw, params, stride=1):
    (w1, g1, b1, w2, g2, b2, w3, g3, b3) = params

    def bn_relu(y, g, b):
        mean = jnp.mean(y, axis=(0, 2, 3), keepdims=True)
        var = jnp.mean(jnp.square(y - mean), axis=(0, 2, 3), keepdims=True)
        yn = (y - mean) * jax.lax.rsqrt(var + _BN_EPS)
        return jnp.maximum(yn * g.reshape(1, -1, 1, 1) + b.reshape(1, -1, 1, 1),
                           0.0)

    y = jax.lax.conv_general_dilated(x_nchw, w1, (1, 1), "VALID")
    y = bn_relu(y, g1, b1)
    y = jax.lax.conv_general_dilated(y, w2, (stride, stride), ((1, 1), (1, 1)))
    y = bn_relu(y, g2, b2)
    y = jax.lax.conv_general_dilated(y, w3, (1, 1), "VALID")
    y = bn_relu(y, g3, b3)
    y = jax.lax.reduce_window(y, 0.0, jax.lax.add, (1, 1, 7, 7), (1, 1, 1, 1),
                              "VALID")
    return (y / 49.0).reshape(y.shape[0], -1)


if __name__ == "__main__":
    key = jax.random.PRNGKey(0)
    ks = jax.random.split(key, 10)

    N, Cin, H, W = 2, 4, 16, 16
    planes = 8
    stride = 1

    x = jax.random.normal(ks[0], (N, Cin, H, W), dtype=jnp.float32)

    # Conv weights in PyTorch (out, in, kh, kw) convention, bias=False.
    w1 = 0.1 * jax.random.normal(ks[1], (planes, Cin, 1, 1), jnp.float32)
    w2 = 0.1 * jax.random.normal(ks[2], (planes, planes, 3, 3), jnp.float32)
    w3 = 0.1 * jax.random.normal(ks[3], (planes, planes, 1, 1), jnp.float32)

    g1 = 1.0 + 0.1 * jax.random.normal(ks[4], (planes,), jnp.float32)
    b1 = 0.1 * jax.random.normal(ks[5], (planes,), jnp.float32)
    g2 = 1.0 + 0.1 * jax.random.normal(ks[6], (planes,), jnp.float32)
    b2 = 0.1 * jax.random.normal(ks[7], (planes,), jnp.float32)
    g3 = 1.0 + 0.1 * jax.random.normal(ks[8], (planes,), jnp.float32)
    b3 = 0.1 * jax.random.normal(ks[9], (planes,), jnp.float32)

    params = (w1, g1, b1, w2, g2, b2, w3, g3, b3)

    # block_m=192 exercises the multi-tile + ragged-last-tile BN-statistics
    # path at toy shapes; the default (1024) is used at real scale.
    out = conv_bottle_forward(x, params, stride=stride, block_m=192)
    out = jax.block_until_ready(out)

    expected_cols = planes * (H - 6) * (W - 6)   # stride=1 -> 8*10*10 = 800
    assert out.shape == (N, expected_cols), out.shape
    assert bool(jnp.all(jnp.isfinite(out)))

    # Loose tolerance: kernel path uses bf16 activations/weights on the MXU
    # (f32 accumulation, f32 BN math); reference is full f32.
    ref = _reference_forward(x, params, stride=stride)
    np.testing.assert_allclose(np.asarray(out), np.asarray(ref),
                               rtol=0.1, atol=0.1)

    print("KERNEL_OK")
</pallas_src>

<mosaic_0001>
module attributes {stable_mosaic.version = 11 : i64} {
  func.func @_mm_bn_stats_kernel(%arg0: i32, %arg1: memref<192x4xbf16, #tpu.memory_space<vmem>>, %arg2: memref<1x4xf32, #tpu.memory_space<vmem>>, %arg3: memref<1x4xf32, #tpu.memory_space<vmem>>, %arg4: memref<4x128xbf16, #tpu.memory_space<vmem>>, %arg5: memref<192x128xbf16, #tpu.memory_space<vmem>>, %arg6: memref<1x1x128xf32, #tpu.memory_space<vmem>>, %arg7: memref<1x1x128xf32, #tpu.memory_space<vmem>>) attributes {dimension_semantics = [#tpu.dimension_semantics<parallel>], iteration_bounds = array<i64: 3>, scalar_prefetch = 0 : i64, scratch_operands = 0 : i64, tpu.core_type = #tpu.core_type<tc>, window_params = [{transform_indices = @transform_0, window_bounds = array<i64: 192, 4>}, {pipeline_mode = #tpu.pipeline_mode<synchronous>, transform_indices = @transform_1, window_bounds = array<i64: 1, 4>}, {pipeline_mode = #tpu.pipeline_mode<synchronous>, transform_indices = @transform_2, window_bounds = array<i64: 1, 4>}, {pipeline_mode = #tpu.pipeline_mode<synchronous>, transform_indices = @transform_3, window_bounds = array<i64: 4, 128>}, {transform_indices = @transform_4, window_bounds = array<i64: 192, 128>}, {transform_indices = @transform_5, window_bounds = array<i64: 1, 1, 128>}, {transform_indices = @transform_6, window_bounds = array<i64: 1, 1, 128>}]} {
    %0 = tpu.iota {dimensions = array<i32: 0>} : vector<192x1xi32>
    %c192_i32 = arith.constant 192 : i32
    %1 = arith.muli %arg0, %c192_i32 : i32
    %2 = vector.broadcast %1 : i32 to vector<192x1xi32>
    %3 = arith.addi %0, %2 : vector<192x1xi32>
    %c512_i32 = arith.constant 512 : i32
    %4 = vector.broadcast %c512_i32 : i32 to vector<192x1xi32>
    %5 = arith.cmpi slt, %3, %4 : vector<192x1xi32>
    %c0 = arith.constant 0 : index
    %c0_0 = arith.constant 0 : index
    %6 = vector.load %arg1[%c0, %c0_0] : memref<192x4xbf16, #tpu.memory_space<vmem>>, vector<192x4xbf16>
    %cst = arith.constant 0.000000e+00 : bf16
    %7 = vector.broadcast %cst : bf16 to vector<192x4xbf16>
    %8 = vector.shape_cast %5 : vector<192x1xi1> to vector<192x1xi1>
    %9 = vector.broadcast %8 : vector<192x1xi1> to vector<192x4xi1>
    %10 = arith.select %9, %6, %7 : vector<192x4xi1>, vector<192x4xbf16>
    %c0_1 = arith.constant 0 : index
    %c0_2 = arith.constant 0 : index
    %11 = vector.load %arg4[%c0_1, %c0_2] : memref<4x128xbf16, #tpu.memory_space<vmem>>, vector<4x128xbf16>
    %cst_3 = arith.constant dense<0.000000e+00> : vector<192x128xf32>
    %12 = tpu.matmul %10, %11, %cst_3 {dimension_numbers = #tpu.dot_dimension_numbers<[1], [0], [0], [1], [0, 0, 1, 1], [], []>} : vector<192x4xbf16>, vector<4x128xbf16>, vector<192x128xf32> -> vector<192x128xf32>
    %13 = arith.truncf %12 : vector<192x128xf32> to vector<192x128xbf16>
    %c0_4 = arith.constant 0 : index
    %c0_5 = arith.constant 0 : index
    %14 = vector.load %arg5[%c0_4, %c0_5] : memref<192x128xbf16, #tpu.memory_space<vmem>>, vector<192x128xbf16>
    tpu.vector_store %arg5[%c0_4, %c0_5], %13 {strides = array<i32>} : memref<192x128xbf16, #tpu.memory_space<vmem>>, vector<192x128xbf16>,
    %cst_6 = arith.constant dense<0.000000e+00> : vector<128xf32>
    %15 = vector.multi_reduction <add>, %12, %cst_6 [0] : vector<192x128xf32> to vector<128xf32>
    %16 = vector.shape_cast %15 : vector<128xf32> to vector<1x128xf32>
    %17 = vector.shape_cast %16 : vector<1x128xf32> to vector<1x1x128xf32>
    %c0_7 = arith.constant 0 : index
    %c0_8 = arith.constant 0 : index
    %c0_9 = arith.constant 0 : index
    %18 = vector.load %arg6[%c0_7, %c0_8, %c0_9] : memref<1x1x128xf32, #tpu.memory_space<vmem>>, vector<1x1x128xf32>
    tpu.vector_store %arg6[%c0_7, %c0_8, %c0_9], %17 {strides = array<i32>} : memref<1x1x128xf32, #tpu.memory_space<vmem>>, vector<1x1x128xf32>,
    %19 = arith.mulf %12, %12 : vector<192x128xf32>
    %cst_10 = arith.constant dense<0.000000e+00> : vector<128xf32>
    %20 = vector.multi_reduction <add>, %19, %cst_10 [0] : vector<192x128xf32> to vector<128xf32>
    %21 = vector.shape_cast %20 : vector<128xf32> to vector<1x128xf32>
    %22 = vector.shape_cast %21 : vector<1x128xf32> to vector<1x1x128xf32>
    %c0_11 = arith.constant 0 : index
    %c0_12 = arith.constant 0 : index
    %c0_13 = arith.constant 0 : index
    %23 = vector.load %arg7[%c0_11, %c0_12, %c0_13] : memref<1x1x128xf32, #tpu.memory_space<vmem>>, vector<1x1x128xf32>
    tpu.vector_store %arg7[%c0_11, %c0_12, %c0_13], %22 {strides = array<i32>} : memref<1x1x128xf32, #tpu.memory_space<vmem>>, vector<1x1x128xf32>,
    return
  }
  func.func @transform_0(%arg0: i32) -> (i32, i32) {
    %c0_i32 = arith.constant 0 : i32
    %c0_i32_0 = arith.constant 0 : i32
    return %arg0, %c0_i32 : i32, i32
  }
  func.func @transform_1(%arg0: i32) -> (i32, i32) {
    %c0_i32 = arith.constant 0 : i32
    %c0_i32_0 = arith.constant 0 : i32
    %c0_i32_1 = arith.constant 0 : i32
    return %c0_i32, %c0_i32_0 : i32, i32
  }
  func.func @transform_2(%arg0: i32) -> (i32, i32) {
    %c0_i32 = arith.constant 0 : i32
    %c0_i32_0 = arith.constant 0 : i32
    %c0_i32_1 = arith.constant 0 : i32
    return %c0_i32, %c0_i32_0 : i32, i32
  }
  func.func @transform_3(%arg0: i32) -> (i32, i32) {
    %c0_i32 = arith.constant 0 : i32
    %c0_i32_0 = arith.constant 0 : i32
    %c0_i32_1 = arith.constant 0 : i32
    return %c0_i32, %c0_i32_0 : i32, i32
  }
  func.func @transform_4(%arg0: i32) -> (i32, i32) {
    %c0_i32 = arith.constant 0 : i32
    %c0_i32_0 = arith.constant 0 : i32
    return %arg0, %c0_i32 : i32, i32
  }
  func.func @transform_5(%arg0: i32) -> (i32, i32, i32) {
    %c0_i32 = arith.constant 0 : i32
    %c0_i32_0 = arith.constant 0 : i32
    %c0_i32_1 = arith.constant 0 : i32
    return %arg0, %c0_i32, %c0_i32_0 : i32, i32, i32
  }
  func.func @transform_6(%arg0: i32) -> (i32, i32, i32) {
    %c0_i32 = arith.constant 0 : i32
    %c0_i32_0 = arith.constant 0 : i32
    %c0_i32_1 = arith.constant 0 : i32
    return %arg0, %c0_i32, %c0_i32_0 : i32, i32, i32
  }
}

module attributes {stable_mosaic.version = 11 : i64} {
  func.func @_conv3x3_stats_kernel(%arg0: i32, %arg1: memref<1x16x16x128xbf16, #tpu.memory_space<vmem>>, %arg2: memref<1x128xf32, #tpu.memory_space<vmem>>, %arg3: memref<1x128xf32, #tpu.memory_space<vmem>>, %arg4: memref<1152x128xbf16, #tpu.memory_space<vmem>>, %arg5: memref<1x16x16x128xbf16, #tpu.memory_space<vmem>>, %arg6: memref<1x1x128xf32, #tpu.memory_space<vmem>>, %arg7: memref<1x1x128xf32, #tpu.memory_space<vmem>>) attributes {dimension_semantics = [#tpu.dimension_semantics<parallel>], iteration_bounds = array<i64: 2>, scalar_prefetch = 0 : i64, scratch_operands = 0 : i64, tpu.core_type = #tpu.core_type<tc>, window_params = [{transform_indices = @transform_0, window_bounds = array<i64: 1, 16, 16, 128>}, {pipeline_mode = #tpu.pipeline_mode<synchronous>, transform_indices = @transform_1, window_bounds = array<i64: 1, 128>}, {pipeline_mode = #tpu.pipeline_mode<synchronous>, transform_indices = @transform_2, window_bounds = array<i64: 1, 128>}, {pipeline_mode = #tpu.pipeline_mode<synchronous>, transform_indices = @transform_3, window_bounds = array<i64: 1152, 128>}, {transform_indices = @transform_4, window_bounds = array<i64: 1, 16, 16, 128>}, {transform_indices = @transform_5, window_bounds = array<i64: 1, 1, 128>}, {transform_indices = @transform_6, window_bounds = array<i64: 1, 1, 128>}]} {
    %c0 = arith.constant 0 : index
    %c0_0 = arith.constant 0 : index
    %c0_1 = arith.constant 0 : index
    %c0_2 = arith.constant 0 : index
    %0 = vector.load %arg1[%c0, %c0_0, %c0_1, %c0_2] : memref<1x16x16x128xbf16, #tpu.memory_space<vmem>>, vector<1x16x16x128xbf16>
    %1 = vector.shape_cast %0 : vector<1x16x16x128xbf16> to vector<16x16x128xbf16>
    %2 = arith.extf %1 : vector<16x16x128xbf16> to vector<16x16x128xf32>
    %c0_3 = arith.constant 0 : index
    %c0_4 = arith.constant 0 : index
    %3 = vector.load %arg2[%c0_3, %c0_4] : memref<1x128xf32, #tpu.memory_space<vmem>>, vector<1x128xf32>
    %4 = vector.shape_cast %3 : vector<1x128xf32> to vector<1x1x128xf32>
    %5 = vector.broadcast %4 : vector<1x1x128xf32> to vector<16x16x128xf32>
    %6 = arith.mulf %2, %5 : vector<16x16x128xf32>
    %c0_5 = arith.constant 0 : index
    %c0_6 = arith.constant 0 : index
    %7 = vector.load %arg3[%c0_5, %c0_6] : memref<1x128xf32, #tpu.memory_space<vmem>>, vector<1x128xf32>
    %8 = vector.shape_cast %7 : vector<1x128xf32> to vector<1x1x128xf32>
    %9 = vector.broadcast %8 : vector<1x1x128xf32> to vector<16x16x128xf32>
    %10 = arith.addf %6, %9 : vector<16x16x128xf32>
    %cst = arith.constant 0.000000e+00 : f32
    %11 = vector.broadcast %cst : f32 to vector<16x16x128xf32>
    %12 = arith.maximumf %10, %11 : vector<16x16x128xf32>
    %13 = arith.truncf %12 : vector<16x16x128xf32> to vector<16x16x128xbf16>
    %cst_7 = arith.constant 0.000000e+00 : bf16
    %14 = vector.broadcast %cst_7 : bf16 to vector<1x16x128xbf16>
    %15 = tpu.concatenate %14, %13, %14 in 0 : vector<1x16x128xbf16>, vector<16x16x128xbf16>, vector<1x16x128xbf16> -> vector<18x16x128xbf16>
    %cst_8 = arith.constant 0.000000e+00 : bf16
    %16 = vector.broadcast %cst_8 : bf16 to vector<18x1x128xbf16>
    %cst_9 = arith.constant 0.000000e+00 : f32
    %17 = vector.broadcast %cst_9 : f32 to vector<256x128xf32>
    %18 = vector.extract_strided_slice %15 {offsets = [0, 0, 0], sizes = [18, 15, 128], strides = [1, 1, 1]} : vector<18x16x128xbf16> to vector<18x15x128xbf16>
    %19 = tpu.concatenate %16, %18 in 1 : vector<18x1x128xbf16>, vector<18x15x128xbf16> -> vector<18x16x128xbf16>
    %20 = vector.extract_strided_slice %15 {offsets = [0, 1, 0], sizes = [18, 15, 128], strides = [1, 1, 1]} : vector<18x16x128xbf16> to vector<18x15x128xbf16>
    %21 = tpu.concatenate %20, %16 in 1 : vector<18x15x128xbf16>, vector<18x1x128xbf16> -> vector<18x16x128xbf16>
    %22 = tpu.concatenate %19, %15, %21 in 2 : vector<18x16x128xbf16>, vector<18x16x128xbf16>, vector<18x16x128xbf16> -> vector<18x16x384xbf16>
    %23 = vector.extract_strided_slice %22 {offsets = [0, 0, 0], sizes = [16, 16, 384], strides = [1, 1, 1]} : vector<18x16x384xbf16> to vector<16x16x384xbf16>
    %24 = vector.shape_cast %23 : vector<16x16x384xbf16> to vector<256x384xbf16>
    %c0_10 = arith.constant 0 : index
    %c0_11 = arith.constant 0 : index
    %25 = vector.load %arg4[%c0_10, %c0_11] : memref<1152x128xbf16, #tpu.memory_space<vmem>>, vector<384x128xbf16>
    %cst_12 = arith.constant dense<0.000000e+00> : vector<256x128xf32>
    %26 = tpu.matmul %24, %25, %cst_12 {dimension_numbers = #tpu.dot_dimension_numbers<[1], [0], [0], [1], [0, 0, 1, 1], [], []>} : vector<256x384xbf16>, vector<384x128xbf16>, vector<256x128xf32> -> vector<256x128xf32>
    %27 = arith.addf %17, %26 : vector<256x128xf32>
    %28 = vector.extract_strided_slice %22 {offsets = [1, 0, 0], sizes = [16, 16, 384], strides = [1, 1, 1]} : vector<18x16x384xbf16> to vector<16x16x384xbf16>
    %29 = vector.shape_cast %28 : vector<16x16x384xbf16> to vector<256x384xbf16>
    %c384 = arith.constant 384 : index
    %c0_13 = arith.constant 0 : index
    %30 = vector.load %arg4[%c384, %c0_13] : memref<1152x128xbf16, #tpu.memory_space<vmem>>, vector<384x128xbf16>
    %cst_14 = arith.constant dense<0.000000e+00> : vector<256x128xf32>
    %31 = tpu.matmul %29, %30, %cst_14 {dimension_numbers = #tpu.dot_dimension_numbers<[1], [0], [0], [1], [0, 0, 1, 1], [], []>} : vector<256x384xbf16>, vector<384x128xbf16>, vector<256x128xf32> -> vector<256x128xf32>
    %32 = arith.addf %27, %31 : vector<256x128xf32>
    %33 = vector.extract_strided_slice %22 {offsets = [2, 0, 0], sizes = [16, 16, 384], strides = [1, 1, 1]} : vector<18x16x384xbf16> to vector<16x16x384xbf16>
    %34 = vector.shape_cast %33 : vector<16x16x384xbf16> to vector<256x384xbf16>
    %c768 = arith.constant 768 : index
    %c0_15 = arith.constant 0 : index
    %35 = vector.load %arg4[%c768, %c0_15] : memref<1152x128xbf16, #tpu.memory_space<vmem>>, vector<384x128xbf16>
    %cst_16 = arith.constant dense<0.000000e+00> : vector<256x128xf32>
    %36 = tpu.matmul %34, %35, %cst_16 {dimension_numbers = #tpu.dot_dimension_numbers<[1], [0], [0], [1], [0, 0, 1, 1], [], []>} : vector<256x384xbf16>, vector<384x128xbf16>, vector<256x128xf32> -> vector<256x128xf32>
    %37 = arith.addf %32, %36 : vector<256x128xf32>
    %38 = vector.shape_cast %37 : vector<256x128xf32> to vector<1x16x16x128xf32>
    %39 = arith.truncf %38 : vector<1x16x16x128xf32> to vector<1x16x16x128xbf16>
    %c0_17 = arith.constant 0 : index
    %c0_18 = arith.constant 0 : index
    %c0_19 = arith.constant 0 : index
    %c0_20 = arith.constant 0 : index
    %40 = vector.load %arg5[%c0_17, %c0_18, %c0_19, %c0_20] : memref<1x16x16x128xbf16, #tpu.memory_space<vmem>>, vector<1x16x16x128xbf16>
    tpu.vector_store %arg5[%c0_17, %c0_18, %c0_19, %c0_20], %39 {strides = array<i32>} : memref<1x16x16x128xbf16, #tpu.memory_space<vmem>>, vector<1x16x16x128xbf16>,
    %cst_21 = arith.constant dense<0.000000e+00> : vector<128xf32>
    %41 = vector.multi_reduction <add>, %37, %cst_21 [0] : vector<256x128xf32> to vector<128xf32>
    %42 = vector.shape_cast %41 : vector<128xf32> to vector<1x128xf32>
    %43 = vector.shape_cast %42 : vector<1x128xf32> to vector<1x1x128xf32>
    %c0_22 = arith.constant 0 : index
    %c0_23 = arith.constant 0 : index
    %c0_24 = arith.constant 0 : index
    %44 = vector.load %arg6[%c0_22, %c0_23, %c0_24] : memref<1x1x128xf32, #tpu.memory_space<vmem>>, vector<1x1x128xf32>
    tpu.vector_store %arg6[%c0_22, %c0_23, %c0_24], %43 {strides = array<i32>} : memref<1x1x128xf32, #tpu.memory_space<vmem>>, vector<1x1x128xf32>,
    %45 = arith.mulf %37, %37 : vector<256x128xf32>
    %cst_25 = arith.constant dense<0.000000e+00> : vector<128xf32>
    %46 = vector.multi_reduction <add>, %45, %cst_25 [0] : vector<256x128xf32> to vector<128xf32>
    %47 = vector.shape_cast %46 : vector<128xf32> to vector<1x128xf32>
    %48 = vector.shape_cast %47 : vector<1x128xf32> to vector<1x1x128xf32>
    %c0_26 = arith.constant 0 : index
    %c0_27 = arith.constant 0 : index
    %c0_28 = arith.constant 0 : index
    %49 = vector.load %arg7[%c0_26, %c0_27, %c0_28] : memref<1x1x128xf32, #tpu.memory_space<vmem>>, vector<1x1x128xf32>
    tpu.vector_store %arg7[%c0_26, %c0_27, %c0_28], %48 {strides = array<i32>} : memref<1x1x128xf32, #tpu.memory_space<vmem>>, vector<1x1x128xf32>,
    return
  }
  func.func @transform_0(%arg0: i32) -> (i32, i32, i32, i32) {
    %c0_i32 = arith.constant 0 : i32
    %c0_i32_0 = arith.constant 0 : i32
    %c0_i32_1 = arith.constant 0 : i32
    %c0_i32_2 = arith.constant 0 : i32
    return %arg0, %c0_i32, %c0_i32_0, %c0_i32_1 : i32, i32, i32, i32
  }
  func.func @transform_1(%arg0: i32) -> (i32, i32) {
    %c0_i32 = arith.constant 0 : i32
    %c0_i32_0 = arith.constant 0 : i32
    %c0_i32_1 = arith.constant 0 : i32
    return %c0_i32, %c0_i32_0 : i32, i32
  }
  func.func @transform_2(%arg0: i32) -> (i32, i32) {
    %c0_i32 = arith.constant 0 : i32
    %c0_i32_0 = arith.constant 0 : i32
    %c0_i32_1 = arith.constant 0 : i32
    return %c0_i32, %c0_i32_0 : i32, i32
  }
  func.func @transform_3(%arg0: i32) -> (i32, i32) {
    %c0_i32 = arith.constant 0 : i32
    %c0_i32_0 = arith.constant 0 : i32
    %c0_i32_1 = arith.constant 0 : i32
    return %c0_i32, %c0_i32_0 : i32, i32
  }
  func.func @transform_4(%arg0: i32) -> (i32, i32, i32, i32) {
    %c0_i32 = arith.constant 0 : i32
    %c0_i32_0 = arith.constant 0 : i32
    %c0_i32_1 = arith.constant 0 : i32
    %c0_i32_2 = arith.constant 0 : i32
    return %arg0, %c0_i32, %c0_i32_0, %c0_i32_1 : i32, i32, i32, i32
  }
  func.func @transform_5(%arg0: i32) -> (i32, i32, i32) {
    %c0_i32 = arith.constant 0 : i32
    %c0_i32_0 = arith.constant 0 : i32
    %c0_i32_1 = arith.constant 0 : i32
    return %arg0, %c0_i32, %c0_i32_0 : i32, i32, i32
  }
  func.func @transform_6(%arg0: i32) -> (i32, i32, i32) {
    %c0_i32 = arith.constant 0 : i32
    %c0_i32_0 = arith.constant 0 : i32
    %c0_i32_1 = arith.constant 0 : i32
    return %arg0, %c0_i32, %c0_i32_0 : i32, i32, i32
  }
}

module attributes {stable_mosaic.version = 11 : i64} {
  func.func @_mm_bn_stats_kernel(%arg0: i32, %arg1: memref<192x128xbf16, #tpu.memory_space<vmem>>, %arg2: memref<1x128xf32, #tpu.memory_space<vmem>>, %arg3: memref<1x128xf32, #tpu.memory_space<vmem>>, %arg4: memref<128x128xbf16, #tpu.memory_space<vmem>>, %arg5: memref<192x128xbf16, #tpu.memory_space<vmem>>, %arg6: memref<1x1x128xf32, #tpu.memory_space<vmem>>, %arg7: memref<1x1x128xf32, #tpu.memory_space<vmem>>) attributes {dimension_semantics = [#tpu.dimension_semantics<parallel>], iteration_bounds = array<i64: 3>, scalar_prefetch = 0 : i64, scratch_operands = 0 : i64, tpu.core_type = #tpu.core_type<tc>, window_params = [{transform_indices = @transform_0, window_bounds = array<i64: 192, 128>}, {pipeline_mode = #tpu.pipeline_mode<synchronous>, transform_indices = @transform_1, window_bounds = array<i64: 1, 128>}, {pipeline_mode = #tpu.pipeline_mode<synchronous>, transform_indices = @transform_2, window_bounds = array<i64: 1, 128>}, {pipeline_mode = #tpu.pipeline_mode<synchronous>, transform_indices = @transform_3, window_bounds = array<i64: 128, 128>}, {transform_indices = @transform_4, window_bounds = array<i64: 192, 128>}, {transform_indices = @transform_5, window_bounds = array<i64: 1, 1, 128>}, {transform_indices = @transform_6, window_bounds = array<i64: 1, 1, 128>}]} {
    %0 = tpu.iota {dimensions = array<i32: 0>} : vector<192x1xi32>
    %c192_i32 = arith.constant 192 : i32
    %1 = arith.muli %arg0, %c192_i32 : i32
    %2 = vector.broadcast %1 : i32 to vector<192x1xi32>
    %3 = arith.addi %0, %2 : vector<192x1xi32>
    %c512_i32 = arith.constant 512 : i32
    %4 = vector.broadcast %c512_i32 : i32 to vector<192x1xi32>
    %5 = arith.cmpi slt, %3, %4 : vector<192x1xi32>
    %c0 = arith.constant 0 : index
    %c0_0 = arith.constant 0 : index
    %6 = vector.load %arg1[%c0, %c0_0] : memref<192x128xbf16, #tpu.memory_space<vmem>>, vector<192x128xbf16>
    %7 = arith.extf %6 : vector<192x128xbf16> to vector<192x128xf32>
    %c0_1 = arith.constant 0 : index
    %c0_2 = arith.constant 0 : index
    %8 = vector.load %arg2[%c0_1, %c0_2] : memref<1x128xf32, #tpu.memory_space<vmem>>, vector<1x128xf32>
    %9 = vector.broadcast %8 : vector<1x128xf32> to vector<192x128xf32>
    %10 = arith.mulf %7, %9 : vector<192x128xf32>
    %c0_3 = arith.constant 0 : index
    %c0_4 = arith.constant 0 : index
    %11 = vector.load %arg3[%c0_3, %c0_4] : memref<1x128xf32, #tpu.memory_space<vmem>>, vector<1x128xf32>
    %12 = vector.broadcast %11 : vector<1x128xf32> to vector<192x128xf32>
    %13 = arith.addf %10, %12 : vector<192x128xf32>
    %cst = arith.constant 0.000000e+00 : f32
    %14 = vector.broadcast %cst : f32 to vector<192x128xf32>
    %15 = arith.maximumf %13, %14 : vector<192x128xf32>
    %cst_5 = arith.constant 0.000000e+00 : f32
    %16 = vector.shape_cast %5 : vector<192x1xi1> to vector<192x1xi1>
    %17 = vector.broadcast %16 : vector<192x1xi1> to vector<192x128xi1>
    %18 = vector.broadcast %cst_5 : f32 to vector<192x128xf32>
    %19 = arith.select %17, %15, %18 : vector<192x128xi1>, vector<192x128xf32>
    %20 = arith.truncf %19 : vector<192x128xf32> to vector<192x128xbf16>
    %c0_6 = arith.constant 0 : index
    %c0_7 = arith.constant 0 : index
    %21 = vector.load %arg4[%c0_6, %c0_7] : memref<128x128xbf16, #tpu.memory_space<vmem>>, vector<128x128xbf16>
    %cst_8 = arith.constant dense<0.000000e+00> : vector<192x128xf32>
    %22 = tpu.matmul %20, %21, %cst_8 {dimension_numbers = #tpu.dot_dimension_numbers<[1], [0], [0], [1], [0, 0, 1, 1], [], []>} : vector<192x128xbf16>, vector<128x128xbf16>, vector<192x128xf32> -> vector<192x128xf32>
    %23 = arith.truncf %22 : vector<192x128xf32> to vector<192x128xbf16>
    %c0_9 = arith.constant 0 : index
    %c0_10 = arith.constant 0 : index
    %24 = vector.load %arg5[%c0_9, %c0_10] : memref<192x128xbf16, #tpu.memory_space<vmem>>, vector<192x128xbf16>
    tpu.vector_store %arg5[%c0_9, %c0_10], %23 {strides = array<i32>} : memref<192x128xbf16, #tpu.memory_space<vmem>>, vector<192x128xbf16>,
    %cst_11 = arith.constant dense<0.000000e+00> : vector<128xf32>
    %25 = vector.multi_reduction <add>, %22, %cst_11 [0] : vector<192x128xf32> to vector<128xf32>
    %26 = vector.shape_cast %25 : vector<128xf32> to vector<1x128xf32>
    %27 = vector.shape_cast %26 : vector<1x128xf32> to vector<1x1x128xf32>
    %c0_12 = arith.constant 0 : index
    %c0_13 = arith.constant 0 : index
    %c0_14 = arith.constant 0 : index
    %28 = vector.load %arg6[%c0_12, %c0_13, %c0_14] : memref<1x1x128xf32, #tpu.memory_space<vmem>>, vector<1x1x128xf32>
    tpu.vector_store %arg6[%c0_12, %c0_13, %c0_14], %27 {strides = array<i32>} : memref<1x1x128xf32, #tpu.memory_space<vmem>>, vector<1x1x128xf32>,
    %29 = arith.mulf %22, %22 : vector<192x128xf32>
    %cst_15 = arith.constant dense<0.000000e+00> : vector<128xf32>
    %30 = vector.multi_reduction <add>, %29, %cst_15 [0] : vector<192x128xf32> to vector<128xf32>
    %31 = vector.shape_cast %30 : vector<128xf32> to vector<1x128xf32>
    %32 = vector.shape_cast %31 : vector<1x128xf32> to vector<1x1x128xf32>
    %c0_16 = arith.constant 0 : index
    %c0_17 = arith.constant 0 : index
    %c0_18 = arith.constant 0 : index
    %33 = vector.load %arg7[%c0_16, %c0_17, %c0_18] : memref<1x1x128xf32, #tpu.memory_space<vmem>>, vector<1x1x128xf32>
    tpu.vector_store %arg7[%c0_16, %c0_17, %c0_18], %32 {strides = array<i32>} : memref<1x1x128xf32, #tpu.memory_space<vmem>>, vector<1x1x128xf32>,
    return
  }
  func.func @transform_0(%arg0: i32) -> (i32, i32) {
    %c0_i32 = arith.constant 0 : i32
    %c0_i32_0 = arith.constant 0 : i32
    return %arg0, %c0_i32 : i32, i32
  }
  func.func @transform_1(%arg0: i32) -> (i32, i32) {
    %c0_i32 = arith.constant 0 : i32
    %c0_i32_0 = arith.constant 0 : i32
    %c0_i32_1 = arith.constant 0 : i32
    return %c0_i32, %c0_i32_0 : i32, i32
  }
  func.func @transform_2(%arg0: i32) -> (i32, i32) {
    %c0_i32 = arith.constant 0 : i32
    %c0_i32_0 = arith.constant 0 : i32
    %c0_i32_1 = arith.constant 0 : i32
    return %c0_i32, %c0_i32_0 : i32, i32
  }
  func.func @transform_3(%arg0: i32) -> (i32, i32) {
    %c0_i32 = arith.constant 0 : i32
    %c0_i32_0 = arith.constant 0 : i32
    %c0_i32_1 = arith.constant 0 : i32
    return %c0_i32, %c0_i32_0 : i32, i32
  }
  func.func @transform_4(%arg0: i32) -> (i32, i32) {
    %c0_i32 = arith.constant 0 : i32
    %c0_i32_0 = arith.constant 0 : i32
    return %arg0, %c0_i32 : i32, i32
  }
  func.func @transform_5(%arg0: i32) -> (i32, i32, i32) {
    %c0_i32 = arith.constant 0 : i32
    %c0_i32_0 = arith.constant 0 : i32
    %c0_i32_1 = arith.constant 0 : i32
    return %arg0, %c0_i32, %c0_i32_0 : i32, i32, i32
  }
  func.func @transform_6(%arg0: i32) -> (i32, i32, i32) {
    %c0_i32 = arith.constant 0 : i32
    %c0_i32_0 = arith.constant 0 : i32
    %c0_i32_1 = arith.constant 0 : i32
    return %arg0, %c0_i32, %c0_i32_0 : i32, i32, i32
  }
}

module attributes {stable_mosaic.version = 11 : i64} {
  func.func @_avgpool_bn_kernel(%arg0: i32, %arg1: memref<1x16x16x128xbf16, #tpu.memory_space<vmem>>, %arg2: memref<1x128xf32, #tpu.memory_space<vmem>>, %arg3: memref<1x128xf32, #tpu.memory_space<vmem>>, %arg4: memref<1x10x10x128xbf16, #tpu.memory_space<vmem>>) attributes {dimension_semantics = [#tpu.dimension_semantics<parallel>], iteration_bounds = array<i64: 2>, scalar_prefetch = 0 : i64, scratch_operands = 0 : i64, tpu.core_type = #tpu.core_type<tc>, window_params = [{transform_indices = @transform_0, window_bounds = array<i64: 1, 16, 16, 128>}, {pipeline_mode = #tpu.pipeline_mode<synchronous>, transform_indices = @transform_1, window_bounds = array<i64: 1, 128>}, {pipeline_mode = #tpu.pipeline_mode<synchronous>, transform_indices = @transform_2, window_bounds = array<i64: 1, 128>}, {transform_indices = @transform_3, window_bounds = array<i64: 1, 10, 10, 128>}]} {
    %c0 = arith.constant 0 : index
    %c0_0 = arith.constant 0 : index
    %c0_1 = arith.constant 0 : index
    %c0_2 = arith.constant 0 : index
    %0 = vector.load %arg1[%c0, %c0_0, %c0_1, %c0_2] : memref<1x16x16x128xbf16, #tpu.memory_space<vmem>>, vector<1x16x16x128xbf16>
    %1 = vector.shape_cast %0 : vector<1x16x16x128xbf16> to vector<16x16x128xbf16>
    %2 = arith.extf %1 : vector<16x16x128xbf16> to vector<16x16x128xf32>
    %c0_3 = arith.constant 0 : index
    %c0_4 = arith.constant 0 : index
    %3 = vector.load %arg2[%c0_3, %c0_4] : memref<1x128xf32, #tpu.memory_space<vmem>>, vector<1x128xf32>
    %4 = vector.shape_cast %3 : vector<1x128xf32> to vector<1x1x128xf32>
    %c0_5 = arith.constant 0 : index
    %c0_6 = arith.constant 0 : index
    %5 = vector.load %arg3[%c0_5, %c0_6] : memref<1x128xf32, #tpu.memory_space<vmem>>, vector<1x128xf32>
    %6 = vector.shape_cast %5 : vector<1x128xf32> to vector<1x1x128xf32>
    %7 = vector.broadcast %4 : vector<1x1x128xf32> to vector<16x16x128xf32>
    %8 = arith.mulf %2, %7 : vector<16x16x128xf32>
    %9 = vector.broadcast %6 : vector<1x1x128xf32> to vector<16x16x128xf32>
    %10 = arith.addf %8, %9 : vector<16x16x128xf32>
    %cst = arith.constant 0.000000e+00 : f32
    %11 = vector.broadcast %cst : f32 to vector<16x16x128xf32>
    %12 = arith.maximumf %10, %11 : vector<16x16x128xf32>
    %13 = vector.extract_strided_slice %12 {offsets = [0, 0, 0], sizes = [16, 10, 128], strides = [1, 1, 1]} : vector<16x16x128xf32> to vector<16x10x128xf32>
    %14 = vector.extract_strided_slice %12 {offsets = [0, 1, 0], sizes = [16, 10, 128], strides = [1, 1, 1]} : vector<16x16x128xf32> to vector<16x10x128xf32>
    %15 = arith.addf %13, %14 : vector<16x10x128xf32>
    %16 = vector.extract_strided_slice %12 {offsets = [0, 2, 0], sizes = [16, 10, 128], strides = [1, 1, 1]} : vector<16x16x128xf32> to vector<16x10x128xf32>
    %17 = arith.addf %15, %16 : vector<16x10x128xf32>
    %18 = vector.extract_strided_slice %12 {offsets = [0, 3, 0], sizes = [16, 10, 128], strides = [1, 1, 1]} : vector<16x16x128xf32> to vector<16x10x128xf32>
    %19 = arith.addf %17, %18 : vector<16x10x128xf32>
    %20 = vector.extract_strided_slice %12 {offsets = [0, 4, 0], sizes = [16, 10, 128], strides = [1, 1, 1]} : vector<16x16x128xf32> to vector<16x10x128xf32>
    %21 = arith.addf %19, %20 : vector<16x10x128xf32>
    %22 = vector.extract_strided_slice %12 {offsets = [0, 5, 0], sizes = [16, 10, 128], strides = [1, 1, 1]} : vector<16x16x128xf32> to vector<16x10x128xf32>
    %23 = arith.addf %21, %22 : vector<16x10x128xf32>
    %24 = vector.extract_strided_slice %12 {offsets = [0, 6, 0], sizes = [16, 10, 128], strides = [1, 1, 1]} : vector<16x16x128xf32> to vector<16x10x128xf32>
    %25 = arith.addf %23, %24 : vector<16x10x128xf32>
    %26 = vector.extract_strided_slice %25 {offsets = [0, 0, 0], sizes = [10, 10, 128], strides = [1, 1, 1]} : vector<16x10x128xf32> to vector<10x10x128xf32>
    %27 = vector.extract_strided_slice %25 {offsets = [1, 0, 0], sizes = [10, 10, 128], strides = [1, 1, 1]} : vector<16x10x128xf32> to vector<10x10x128xf32>
    %28 = arith.addf %26, %27 : vector<10x10x128xf32>
    %29 = vector.extract_strided_slice %25 {offsets = [2, 0, 0], sizes = [10, 10, 128], strides = [1, 1, 1]} : vector<16x10x128xf32> to vector<10x10x128xf32>
    %30 = arith.addf %28, %29 : vector<10x10x128xf32>
    %31 = vector.extract_strided_slice %25 {offsets = [3, 0, 0], sizes = [10, 10, 128], strides = [1, 1, 1]} : vector<16x10x128xf32> to vector<10x10x128xf32>
    %32 = arith.addf %30, %31 : vector<10x10x128xf32>
    %33 = vector.extract_strided_slice %25 {offsets = [4, 0, 0], sizes = [10, 10, 128], strides = [1, 1, 1]} : vector<16x10x128xf32> to vector<10x10x128xf32>
    %34 = arith.addf %32, %33 : vector<10x10x128xf32>
    %35 = vector.extract_strided_slice %25 {offsets = [5, 0, 0], sizes = [10, 10, 128], strides = [1, 1, 1]} : vector<16x10x128xf32> to vector<10x10x128xf32>
    %36 = arith.addf %34, %35 : vector<10x10x128xf32>
    %37 = vector.extract_strided_slice %25 {offsets = [6, 0, 0], sizes = [10, 10, 128], strides = [1, 1, 1]} : vector<16x10x128xf32> to vector<10x10x128xf32>
    %38 = arith.addf %36, %37 : vector<10x10x128xf32>
    %39 = vector.shape_cast %38 : vector<10x10x128xf32> to vector<1x10x10x128xf32>
    %40 = arith.truncf %39 : vector<1x10x10x128xf32> to vector<1x10x10x128xbf16>
    %c0_7 = arith.constant 0 : index
    %c0_8 = arith.constant 0 : index
    %c0_9 = arith.constant 0 : index
    %c0_10 = arith.constant 0 : index
    %41 = vector.load %arg4[%c0_7, %c0_8, %c0_9, %c0_10] : memref<1x10x10x128xbf16, #tpu.memory_space<vmem>>, vector<1x10x10x128xbf16>
    tpu.vector_store %arg4[%c0_7, %c0_8, %c0_9, %c0_10], %40 {strides = array<i32>} : memref<1x10x10x128xbf16, #tpu.memory_space<vmem>>, vector<1x10x10x128xbf16>,
    return
  }
  func.func @transform_0(%arg0: i32) -> (i32, i32, i32, i32) {
    %c0_i32 = arith.constant 0 : i32
    %c0_i32_0 = arith.constant 0 : i32
    %c0_i32_1 = arith.constant 0 : i32
    %c0_i32_2 = arith.constant 0 : i32
    return %arg0, %c0_i32, %c0_i32_0, %c0_i32_1 : i32, i32, i32, i32
  }
  func.func @transform_1(%arg0: i32) -> (i32, i32) {
    %c0_i32 = arith.constant 0 : i32
    %c0_i32_0 = arith.constant 0 : i32
    %c0_i32_1 = arith.constant 0 : i32
    return %c0_i32, %c0_i32_0 : i32, i32
  }
  func.func @transform_2(%arg0: i32) -> (i32, i32) {
    %c0_i32 = arith.constant 0 : i32
    %c0_i32_0 = arith.constant 0 : i32
    %c0_i32_1 = arith.constant 0 : i32
    return %c0_i32, %c0_i32_0 : i32, i32
  }
  func.func @transform_3(%arg0: i32) -> (i32, i32, i32, i32) {
    %c0_i32 = arith.constant 0 : i32
    %c0_i32_0 = arith.constant 0 : i32
    %c0_i32_1 = arith.constant 0 : i32
    %c0_i32_2 = arith.constant 0 : i32
    return %arg0, %c0_i32, %c0_i32_0, %c0_i32_1 : i32, i32, i32, i32
  }
}

</mosaic_0001>

<llo_original>
// kernel: conv_bottle_forward.4
$region0: #{conv_bottle_forward.4}
  #allocation0 [shape = 'u32[]', space=smem, size = 0x4, offset = 0x4, fixed_abs, tag = 'smem constant byte address 0x4 - core index']
  #allocation1 [shape = 'u32[72,128]{1,0:T(1,128)}', space=vmem, size = 0x9000, scoped, tag = 'internal scratch']
  %s0 = inlined_call_operand.vmem [shape: bf16[512,4], index: 0, kind: input, shape index: {}]
  %s1 = inlined_call_operand.vmem [shape: f32[1,4], index: 1, kind: input, shape index: {}]
  %s2 = inlined_call_operand.vmem [shape: f32[1,4], index: 2, kind: input, shape index: {}]
  %s3 = inlined_call_operand.vmem [shape: bf16[4,128], index: 3, kind: input, shape index: {}]
  %s4 = inlined_call_operand.vmem [shape: bf16[512,128], index: 4, kind: output, shape index: {0}]
  %s5 = inlined_call_operand.vmem [shape: f32[3,1,128], index: 5, kind: output, shape index: {1}]
  %s6 = inlined_call_operand.vmem [shape: f32[3,1,128], index: 6, kind: output, shape index: {2}]
  %7 = xla_tuple %s4, %s5, %s6
  %s8 = sld [smem:[#allocation0]]
  $region109: #{conv_bottle_forward.4} parent=0
    _
  %s10 = ssub.s32 1, %s8
  %s11 = scalar_select 0, %s10, %s8
  $region1: #{conv_bottle_forward.4} parent=0
    #allocation2 [shape = 'u8[98304]{0}', space=vmem, size = 0x18000, scoped, tag = 'output window, operand 0']
    loop: start=0, step=1, limit=5
    $region2: #{conv_bottle_forward.4} parent=1 // loop_pre_header
      _
    $region3: #{conv_bottle_forward.4} parent=1 // loop_header
      %s13 = sphi 0, %s17
      %p14 = scmp.ge.s32.totalorder %s13, 5
      %s23 = sphi 0, %s25
      %s26 = sphi 0, %s23
      %s27 = sphi 0, %s26
      %s43 = sphi 0, %s27
      %s47 = sphi 0, %s47
      %s49 = sphi 0, %s47
      %s50 = sphi 0, %s49
      %s64 = sphi 0, %s50
      %s68 = sphi 0, %s68
      %s70 = sphi 0, %s68
      %s71 = sphi 0, %s70
      %s85 = sphi 0, %s71
      %s89 = sphi 0, %s89
      %s91 = sphi 0, %s89
      %s92 = sphi 0, %s91
      %s106 = sphi 0, %s92
      %s112 = sphi 0, %s114
      %s115 = sphi 0, %s112
      %s116 = sphi 0, %s115
      %s132 = sphi 0, %s116
      %s138 = sphi 0, %s140
      %s141 = sphi 0, %s138
      %s142 = sphi 0, %s141
      %s158 = sphi 0, %s142
      %s164 = sphi 0, %s166
      %s167 = sphi 0, %s164
      %s168 = sphi 0, %s167
      %s184 = sphi 0, %s168
    $region4: #{conv_bottle_forward.4} parent=1 // loop_header_branch
      %16 = sbr.rel (%p14) target = $region8
    $region5: #{conv_bottle_forward.4} parent=1 // loop_body
      %s18 = ssub.s32 %s13, 1
      %s19 = ssub.s32 %s13, 2
      %s20 = sadd.s32 %s13, 1
      %s21 = ssub.s32 %s13, %s20
      %p22 = scmp.eq.s32.totalorder %s21, 0
      %s24 = sadd.s32 %s23, 1
      %s25 = scalar_select %p22, %s23, %s24
      %p28 = pneg %p22
      %p29 = scmp.eq.s32.totalorder %s13, 2
      %p30 = por %p28, %p29
      %p31 = scmp.ne.s32.totalorder %s23, %s26
      %p32 = scmp.eq.s32.totalorder %s13, 0
      %p33 = por %p31, %p32
      %p34 = scmp.ne.s32.totalorder %s23, %s26
      %p35 = scmp.eq.s32.totalorder %s18, 2
      %p36 = por %p34, %p35
      %p37 = scmp.ne.s32.totalorder %s26, %s27
      %p38 = scmp.eq.s32.totalorder %s18, 0
      %p39 = por %p37, %p38
      %p40 = scmp.ne.s32.totalorder %s26, %s27
      %p41 = scmp.eq.s32.totalorder %s19, 2
      %p42 = por %p40, %p41
      %p44 = scmp.ne.s32.totalorder %s27, %s43
      %p45 = scmp.eq.s32.totalorder %s19, 0
      %p46 = por %p44, %p45
      %s48 = sadd.s32 %s47, 1
      %p51 = scmp.eq.s32.totalorder %s13, 2
      %p52 = scmp.ne.s32.totalorder %s47, %s49
      %p53 = scmp.eq.s32.totalorder %s13, 0
      %p54 = por %p52, %p53
      %p55 = scmp.ne.s32.totalorder %s47, %s49
      %p56 = scmp.eq.s32.totalorder %s18, 2
      %p57 = por %p55, %p56
      %p58 = scmp.ne.s32.totalorder %s49, %s50
      %p59 = scmp.eq.s32.totalorder %s18, 0
      %p60 = por %p58, %p59
      %p61 = scmp.ne.s32.totalorder %s49, %s50
      %p62 = scmp.eq.s32.totalorder %s19, 2
      %p63 = por %p61, %p62
      %p65 = scmp.ne.s32.totalorder %s50, %s64
      %p66 = scmp.eq.s32.totalorder %s19, 0
      %p67 = por %p65, %p66
      %s69 = sadd.s32 %s68, 1
      %p72 = scmp.eq.s32.totalorder %s13, 2
      %p73 = scmp.ne.s32.totalorder %s68, %s70
      %p74 = scmp.eq.s32.totalorder %s13, 0
      %p75 = por %p73, %p74
      %p76 = scmp.ne.s32.totalorder %s68, %s70
      %p77 = scmp.eq.s32.totalorder %s18, 2
      %p78 = por %p76, %p77
      %p79 = scmp.ne.s32.totalorder %s70, %s71
      %p80 = scmp.eq.s32.totalorder %s18, 0
      %p81 = por %p79, %p80
      %p82 = scmp.ne.s32.totalorder %s70, %s71
      %p83 = scmp.eq.s32.totalorder %s19, 2
      %p84 = por %p82, %p83
      %p86 = scmp.ne.s32.totalorder %s71, %s85
      %p87 = scmp.eq.s32.totalorder %s19, 0
      %p88 = por %p86, %p87
      %s90 = sadd.s32 %s89, 1
      %p93 = scmp.eq.s32.totalorder %s13, 2
      %p94 = scmp.ne.s32.totalorder %s89, %s91
      %p95 = scmp.eq.s32.totalorder %s13, 0
      %p96 = por %p94, %p95
      %p97 = scmp.ne.s32.totalorder %s89, %s91
      %p98 = scmp.eq.s32.totalorder %s18, 2
      %p99 = por %p97, %p98
      %p100 = scmp.ne.s32.totalorder %s91, %s92
      %p101 = scmp.eq.s32.totalorder %s18, 0
      %p102 = por %p100, %p101
      %p103 = scmp.ne.s32.totalorder %s91, %s92
      %p104 = scmp.eq.s32.totalorder %s19, 2
      %p105 = por %p103, %p104
      %p107 = scmp.ne.s32.totalorder %s92, %s106
      %p108 = scmp.eq.s32.totalorder %s19, 0
      %p109 = por %p107, %p108
      %s110 = ssub.s32 %s13, %s20
      %p111 = scmp.eq.s32.totalorder %s110, 0
      %s113 = sadd.s32 %s112, 1
      %s114 = scalar_select %p111, %s112, %s113
      %p117 = pneg %p111
      %p118 = scmp.eq.s32.totalorder %s13, 2
      %p119 = por %p117, %p118
      %p120 = scmp.ne.s32.totalorder %s112, %s115
      %p121 = scmp.eq.s32.totalorder %s13, 0
      %p122 = por %p120, %p121
      %p123 = scmp.ne.s32.totalorder %s112, %s115
      %p124 = scmp.eq.s32.totalorder %s18, 2
      %p125 = por %p123, %p124
      %p126 = scmp.ne.s32.totalorder %s115, %s116
      %p127 = scmp.eq.s32.totalorder %s18, 0
      %p128 = por %p126, %p127
      %p129 = scmp.ne.s32.totalorder %s115, %s116
      %p130 = scmp.eq.s32.totalorder %s19, 2
      %p131 = por %p129, %p130
      %p133 = scmp.ne.s32.totalorder %s116, %s132
      %p134 = scmp.eq.s32.totalorder %s19, 0
      %p135 = por %p133, %p134
      %s136 = ssub.s32 %s13, %s20
      %p137 = scmp.eq.s32.totalorder %s136, 0
      %s139 = sadd.s32 %s138, 1
      %s140 = scalar_select %p137, %s138, %s139
      %p143 = pneg %p137
      %p144 = scmp.eq.s32.totalorder %s13, 2
      %p145 = por %p143, %p144
      %p146 = scmp.ne.s32.totalorder %s138, %s141
      %p147 = scmp.eq.s32.totalorder %s13, 0
      %p148 = por %p146, %p147
      %p149 = scmp.ne.s32.totalorder %s138, %s141
      %p150 = scmp.eq.s32.totalorder %s18, 2
      %p151 = por %p149, %p150
      %p152 = scmp.ne.s32.totalorder %s141, %s142
      %p153 = scmp.eq.s32.totalorder %s18, 0
      %p154 = por %p152, %p153
      %p155 = scmp.ne.s32.totalorder %s141, %s142
      %p156 = scmp.eq.s32.totalorder %s19, 2
      %p157 = por %p155, %p156
      %p159 = scmp.ne.s32.totalorder %s142, %s158
      %p160 = scmp.eq.s32.totalorder %s19, 0
      %p161 = por %p159, %p160
      %s162 = ssub.s32 %s13, %s20
      %p163 = scmp.eq.s32.totalorder %s162, 0
      %s165 = sadd.s32 %s164, 1
      %s166 = scalar_select %p163, %s164, %s165
      %p169 = pneg %p163
      %p170 = scmp.eq.s32.totalorder %s13, 2
      %p171 = por %p169, %p170
      %p172 = scmp.ne.s32.totalorder %s164, %s167
      %p173 = scmp.eq.s32.totalorder %s13, 0
      %p174 = por %p172, %p173
      %p175 = scmp.ne.s32.totalorder %s164, %s167
      %p176 = scmp.eq.s32.totalorder %s18, 2
      %p177 = por %p175, %p176
      %p178 = scmp.ne.s32.totalorder %s167, %s168
      %p179 = scmp.eq.s32.totalorder %s18, 0
      %p180 = por %p178, %p179
      %p181 = scmp.ne.s32.totalorder %s167, %s168
      %p182 = scmp.eq.s32.totalorder %s19, 2
      %p183 = por %p181, %p182
      %p185 = scmp.ne.s32.totalorder %s168, %s184
      %p186 = scmp.eq.s32.totalorder %s19, 0
      %p187 = por %p185, %p186
      %p188 = scmp.le.s32.totalorder 1, %s13
      %p189 = scmp.lt.s32.totalorder %s13, 4
      %p190 = pnand %p188, %p189
      %p191 = pneg %p190
      // Predicated region
      $region9: #{conv_bottle_forward.4} parent=5 // pred_check
        _
      $region10: #{conv_bottle_forward.4} parent=5 // pred_check_branch
        %193 = sbr.rel (%p190) target = $region12
      $region11: #{conv_bottle_forward.4} parent=5 // pred_region
        %s194 = ssub.s32 %s13, 1
        // Predicated region
        $region13: #{conv_bottle_forward.4} parent=11 // pred_check
          %p195 = pneg %p60
        $region14: #{conv_bottle_forward.4} parent=11 // pred_check_branch
          %197 = sbr.rel (%p195) target = $region16
        $region15: #{conv_bottle_forward.4} parent=11 // pred_region
          _
        $region16: #{conv_bottle_forward.4} parent=11 // pred_fallthru
          _
        // Predicated region
        $region17: #{conv_bottle_forward.4} parent=11 // pred_check
          %p198 = pneg %p81
        $region18: #{conv_bottle_forward.4} parent=11 // pred_check_branch
          %200 = sbr.rel (%p198) target = $region20
        $region19: #{conv_bottle_forward.4} parent=11 // pred_region
          _
        $region20: #{conv_bottle_forward.4} parent=11 // pred_fallthru
          _
        // Predicated region
        $region21: #{conv_bottle_forward.4} parent=11 // pred_check
          %p201 = pneg %p102
        $region22: #{conv_bottle_forward.4} parent=11 // pred_check_branch
          %203 = sbr.rel (%p201) target = $region24
        $region23: #{conv_bottle_forward.4} parent=11 // pred_region
          _
        $region24: #{conv_bottle_forward.4} parent=11 // pred_fallthru
          _
      $region12: #{conv_bottle_forward.4} parent=5 // pred_fallthru
        _
      %p204 = scmp.lt.s32.totalorder %s13, 3
      // Predicated region
      $region25: #{conv_bottle_forward.4} parent=5 // pred_check
        %p205 = pneg %p204
      $region26: #{conv_bottle_forward.4} parent=5 // pred_check_branch
        %207 = sbr.rel (%p205) target = $region28
      $region27: #{conv_bottle_forward.4} parent=5 // pred_region
        // Predicated region
        $region29: #{conv_bottle_forward.4} parent=27 // pred_check
          %p208 = pneg %p33
        $region30: #{conv_bottle_forward.4} parent=27 // pred_check_branch
          %210 = sbr.rel (%p208) target = $region32
        $region31: #{conv_bottle_forward.4} parent=27 // pred_region
          %s211 = smul.u32 24, %s13
          %s212 = ssub.s32 64, %s211
          %p213 = scmp.lt.s32.totalorder %s212, 24
          %s214 = scalar_select %p213, %s212, 24
          %s215 = smul.u32 4, %s214
          %p216 = scmp.lt.s32.totalorder %s211, 63
          %s217 = scalar_select %p216, %s211, 63
          %s218 = smul.addr %s217, 4
          %s219 = scalar_lea.vmem %s0, %s218
          %s220 = smul.u32 24, %s13
          %s221 = ssub.s32 64, %s220
          %p222 = scmp.lt.s32.totalorder %s221, 24
          %s223 = scalar_select %p222, %s221, 24
          %s224 = smul.u32 4, %s223
        $region32: #{conv_bottle_forward.4} parent=27 // pred_fallthru
          _
      $region28: #{conv_bottle_forward.4} parent=5 // pred_fallthru
        _
      %p225 = scmp.le.s32.totalorder 1, %s13
      %p226 = scmp.lt.s32.totalorder %s13, 4
      %p227 = pnand %p225, %p226
      %p228 = pneg %p227
      // Predicated region
      $region33: #{conv_bottle_forward.4} parent=5 // pred_check
        _
      $region34: #{conv_bottle_forward.4} parent=5 // pred_check_branch
        %230 = sbr.rel (%p227) target = $region36
      $region35: #{conv_bottle_forward.4} parent=5 // pred_region
        %s231 = ssub.s32 %s13, 1
        %s232 = smul.u32 24, %s18
        %s233 = ssub.s32 64, %s232
        %p234 = scmp.lt.s32.totalorder %s233, 24
        %s235 = scalar_select %p234, %s233, 24
        %s236 = smul.u32 4, %s235
        %p237 = scmp.lt.s32.totalorder %s232, 63
        %s238 = scalar_select %p237, %s232, 63
        %s239 = smul.addr %s238, 4
        %s240 = scalar_lea.vmem %s0, %s239
        %p241 = pneg %p39
        %p242 = pneg %p36
        %p243 = pneg %p60
        %p244 = pneg %p57
        %p245 = pneg %p81
        %p246 = pneg %p78
        %p247 = pneg %p102
        %p248 = pneg %p99
        %p249 = pneg %p128
        %p250 = pneg %p125
        %s251 = sand.u32 %s115, 1
        %s252 = sand.u32 %s115, 1
        %s253 = smul.addr %s252, 96
        %s254 = scalar_lea.vmem [#allocation2], %s253
        %p255 = pneg %p154
        %p256 = pneg %p151
        %p257 = scmp.lt.s32.totalorder %s18, 2
        %s258 = scalar_select %p257, %s18, 2
        %s259 = scalar_lea.vmem %s5, %s258
        %p260 = pneg %p180
        %p261 = pneg %p177
        %p262 = scmp.lt.s32.totalorder %s18, 2
        %s263 = scalar_select %p262, %s18, 2
        %s264 = scalar_lea.vmem %s6, %s263
        %s265 = smul.u32 24, %s18
        %s266 = ssub.s32 64, %s265
        %p267 = scmp.lt.s32.totalorder %s266, 24
        %s268 = scalar_select %p267, %s266, 24
        %s269 = smul.u32 4, %s268
        %p270 = scmp.lt.s32.totalorder %s265, 63
        %s271 = scalar_select %p270, %s265, 63
        %s272 = smul.addr %s271, 4
        %s273 = scalar_lea.vmem %s0, %s272
        %s274 = smul.u32 24, %s18
        %s275 = ssub.s32 64, %s274
        %p276 = scmp.lt.s32.totalorder %s275, 24
        %s277 = scalar_select %p276, %s275, 24
        %s278 = smul.u32 4, %s277
        %s279 = smul.u32 24, %s18
        %s280 = ssub.s32 64, %s279
        %p281 = scmp.lt.s32.totalorder %s280, 24
        %s282 = scalar_select %p281, %s280, 24
        %s283 = smul.u32 4, %s282
        %p284 = scmp.lt.s32.totalorder %s18, 2
        %s285 = scalar_select %p284, %s18, 2
        %s286 = scalar_lea.vmem %s5, %s285
        %p287 = scmp.lt.s32.totalorder %s18, 2
        %s288 = scalar_select %p287, %s18, 2
        %s289 = scalar_lea.vmem %s6, %s288
        %v291 = vlaneseq
        %v292 = vshrl.u32 %v291, 7
        %v293 = vadd.s32 %v292, 8
        %v294 = vadd.s32 %v292, 16
        %v295 = vadd.s32 %v292, 24
        %v296 = vadd.s32 %v292, 32
        %v297 = vadd.s32 %v292, 40
        %v298 = vadd.s32 %v292, 48
        %v299 = vadd.s32 %v292, 56
        %v300 = vadd.s32 %v292, 64
        %v301 = vadd.s32 %v292, 72
        %v302 = vadd.s32 %v292, 80
        %v303 = vadd.s32 %v292, 88
        %v304 = vadd.s32 %v292, 96
        %v305 = vadd.s32 %v292, 104
        %v306 = vadd.s32 %v292, 112
        %v307 = vadd.s32 %v292, 120
        %v308 = vadd.s32 %v292, 128
        %v309 = vadd.s32 %v292, 136
        %v310 = vadd.s32 %v292, 144
        %v311 = vadd.s32 %v292, 152
        %v312 = vadd.s32 %v292, 160
        %v313 = vadd.s32 %v292, 168
        %v314 = vadd.s32 %v292, 176
        %v315 = vadd.s32 %v292, 184
        %s316 = smul.u32 %s18, 192
        %v317 = vstv %s316
        %v318 = vadd.s32 %v292, %v317
        %v319 = vadd.s32 %v293, %v317
        %v320 = vadd.s32 %v294, %v317
        %v321 = vadd.s32 %v295, %v317
        %v322 = vadd.s32 %v296, %v317
        %v323 = vadd.s32 %v297, %v317
        %v324 = vadd.s32 %v298, %v317
        %v325 = vadd.s32 %v299, %v317
        %v326 = vadd.s32 %v300, %v317
        %v327 = vadd.s32 %v301, %v317
        %v328 = vadd.s32 %v302, %v317
        %v329 = vadd.s32 %v303, %v317
        %v330 = vadd.s32 %v304, %v317
        %v331 = vadd.s32 %v305, %v317
        %v332 = vadd.s32 %v306, %v317
        %v333 = vadd.s32 %v307, %v317
        %v334 = vadd.s32 %v308, %v317
        %v335 = vadd.s32 %v309, %v317
        %v336 = vadd.s32 %v310, %v317
        %v337 = vadd.s32 %v311, %v317
        %v338 = vadd.s32 %v312, %v317
        %v339 = vadd.s32 %v313, %v317
        %v340 = vadd.s32 %v314, %v317
        %v341 = vadd.s32 %v315, %v317
        %vm342 = vcmp.lt.s32.totalorder %v318, 512
        %vm343 = vcmp.lt.s32.totalorder %v319, 512
        %vm344 = vcmp.lt.s32.totalorder %v320, 512
        %vm345 = vcmp.lt.s32.totalorder %v321, 512
        %vm346 = vcmp.lt.s32.totalorder %v322, 512
        %vm347 = vcmp.lt.s32.totalorder %v323, 512
        %vm348 = vcmp.lt.s32.totalorder %v324, 512
        %vm349 = vcmp.lt.s32.totalorder %v325, 512
        %vm350 = vcmp.lt.s32.totalorder %v326, 512
        %vm351 = vcmp.lt.s32.totalorder %v327, 512
        %vm352 = vcmp.lt.s32.totalorder %v328, 512
        %vm353 = vcmp.lt.s32.totalorder %v329, 512
        %vm354 = vcmp.lt.s32.totalorder %v330, 512
        %vm355 = vcmp.lt.s32.totalorder %v331, 512
        %vm356 = vcmp.lt.s32.totalorder %v332, 512
        %vm357 = vcmp.lt.s32.totalorder %v333, 512
        %vm358 = vcmp.lt.s32.totalorder %v334, 512
        %vm359 = vcmp.lt.s32.totalorder %v335, 512
        %vm360 = vcmp.lt.s32.totalorder %v336, 512
        %vm361 = vcmp.lt.s32.totalorder %v337, 512
        %vm362 = vcmp.lt.s32.totalorder %v338, 512
        %vm363 = vcmp.lt.s32.totalorder %v339, 512
        %vm364 = vcmp.lt.s32.totalorder %v340, 512
        %vm365 = vcmp.lt.s32.totalorder %v341, 512
        %v366 = vld [vmem:[%s273] sm:$0xf]
        %v367 = vld [vmem:[%s273 + $0x4] sm:$0xf]
        %v368 = vld [vmem:[%s273 + $0x8] sm:$0xf]
        %v369 = vld [vmem:[%s273 + $0xc] sm:$0xf]
        %v370 = vld [vmem:[%s273 + $0x10] sm:$0xf]
        %v371 = vld [vmem:[%s273 + $0x14] sm:$0xf]
        %v372 = vld [vmem:[%s273 + $0x18] sm:$0xf]
        %v373 = vld [vmem:[%s273 + $0x1c] sm:$0xf]
        %v374 = vld [vmem:[%s273 + $0x20] sm:$0xf]
        %v375 = vld [vmem:[%s273 + $0x24] sm:$0xf]
        %v376 = vld [vmem:[%s273 + $0x28] sm:$0xf]
        %v377 = vld [vmem:[%s273 + $0x2c] sm:$0xf]
        %v378 = vld [vmem:[%s273 + $0x30] sm:$0xf]
        %v379 = vld [vmem:[%s273 + $0x34] sm:$0xf]
        %v380 = vld [vmem:[%s273 + $0x38] sm:$0xf]
        %v381 = vld [vmem:[%s273 + $0x3c] sm:$0xf]
        %v382 = vld [vmem:[%s273 + $0x40] sm:$0xf]
        %v383 = vld [vmem:[%s273 + $0x44] sm:$0xf]
        %v384 = vld [vmem:[%s273 + $0x48] sm:$0xf]
        %v385 = vld [vmem:[%s273 + $0x4c] sm:$0xf]
        %v386 = vld [vmem:[%s273 + $0x50] sm:$0xf]
        %v387 = vld [vmem:[%s273 + $0x54] sm:$0xf]
        %v388 = vld [vmem:[%s273 + $0x58] sm:$0xf]
        %v389 = vld [vmem:[%s273 + $0x5c] sm:$0xf]
        %v390 = vsel %vm342, 1, 0
        %v391 = vsel %vm343, 1, 0
        %v392 = vsel %vm344, 1, 0
        %v393 = vsel %vm345, 1, 0
        %v394 = vsel %vm346, 1, 0
        %v395 = vsel %vm347, 1, 0
        %v396 = vsel %vm348, 1, 0
        %v397 = vsel %vm349, 1, 0
        %v398 = vsel %vm350, 1, 0
        %v399 = vsel %vm351, 1, 0
        %v400 = vsel %vm352, 1, 0
        %v401 = vsel %vm353, 1, 0
        %v402 = vsel %vm354, 1, 0
        %v403 = vsel %vm355, 1, 0
        %v404 = vsel %vm356, 1, 0
        %v405 = vsel %vm357, 1, 0
        %v406 = vsel %vm358, 1, 0
        %v407 = vsel %vm359, 1, 0
        %v408 = vsel %vm360, 1, 0
        %v409 = vsel %vm361, 1, 0
        %v410 = vsel %vm362, 1, 0
        %v411 = vsel %vm363, 1, 0
        %v412 = vsel %vm364, 1, 0
        %v413 = vsel %vm365, 1, 0
        %vm414 = vcmp.eq.s32.totalorder %v390, 1
        %vm415 = vcmp.eq.s32.totalorder %v391, 1
        %vm416 = vcmp.eq.s32.totalorder %v392, 1
        %vm417 = vcmp.eq.s32.totalorder %v393, 1
        %vm418 = vcmp.eq.s32.totalorder %v394, 1
        %vm419 = vcmp.eq.s32.totalorder %v395, 1
        %vm420 = vcmp.eq.s32.totalorder %v396, 1
        %vm421 = vcmp.eq.s32.totalorder %v397, 1
        %vm422 = vcmp.eq.s32.totalorder %v398, 1
        %vm423 = vcmp.eq.s32.totalorder %v399, 1
        %vm424 = vcmp.eq.s32.totalorder %v400, 1
        %vm425 = vcmp.eq.s32.totalorder %v401, 1
        %vm426 = vcmp.eq.s32.totalorder %v402, 1
        %vm427 = vcmp.eq.s32.totalorder %v403, 1
        %vm428 = vcmp.eq.s32.totalorder %v404, 1
        %vm429 = vcmp.eq.s32.totalorder %v405, 1
        %vm430 = vcmp.eq.s32.totalorder %v406, 1
        %vm431 = vcmp.eq.s32.totalorder %v407, 1
        %vm432 = vcmp.eq.s32.totalorder %v408, 1
        %vm433 = vcmp.eq.s32.totalorder %v409, 1
        %vm434 = vcmp.eq.s32.totalorder %v410, 1
        %vm435 = vcmp.eq.s32.totalorder %v411, 1
        %vm436 = vcmp.eq.s32.totalorder %v412, 1
        %vm437 = vcmp.eq.s32.totalorder %v413, 1
        %vm438 = vmpackc.low %vm414, %vm414
        %vm439 = vmpackc.low %vm415, %vm415
        %vm440 = vmpackc.low %vm416, %vm416
        %vm441 = vmpackc.low %vm417, %vm417
        %vm442 = vmpackc.low %vm418, %vm418
        %vm443 = vmpackc.low %vm419, %vm419
        %vm444 = vmpackc.low %vm420, %vm420
        %vm445 = vmpackc.low %vm421, %vm421
        %vm446 = vmpackc.low %vm422, %vm422
        %vm447 = vmpackc.low %vm423, %vm423
        %vm448 = vmpackc.low %vm424, %vm424
        %vm449 = vmpackc.low %vm425, %vm425
        %vm450 = vmpackc.low %vm426, %vm426
        %vm451 = vmpackc.low %vm427, %vm427
        %vm452 = vmpackc.low %vm428, %vm428
        %vm453 = vmpackc.low %vm429, %vm429
        %vm454 = vmpackc.low %vm430, %vm430
        %vm455 = vmpackc.low %vm431, %vm431
        %vm456 = vmpackc.low %vm432, %vm432
        %vm457 = vmpackc.low %vm433, %vm433
        %vm458 = vmpackc.low %vm434, %vm434
        %vm459 = vmpackc.low %vm435, %vm435
        %vm460 = vmpackc.low %vm436, %vm436
        %vm461 = vmpackc.low %vm437, %vm437
        %v462 = vsel %vm438, %v366, 0
        %v463 = vsel %vm439, %v367, 0
        %v464 = vsel %vm440, %v368, 0
        %v465 = vsel %vm441, %v369, 0
        %v466 = vsel %vm442, %v370, 0
        %v467 = vsel %vm443, %v371, 0
        %v468 = vsel %vm444, %v372, 0
        %v469 = vsel %vm445, %v373, 0
        %v470 = vsel %vm446, %v374, 0
        %v471 = vsel %vm447, %v375, 0
        %v472 = vsel %vm448, %v376, 0
        %v473 = vsel %vm449, %v377, 0
        %v474 = vsel %vm450, %v378, 0
        %v475 = vsel %vm451, %v379, 0
        %v476 = vsel %vm452, %v380, 0
        %v477 = vsel %vm453, %v381, 0
        %v478 = vsel %vm454, %v382, 0
        %v479 = vsel %vm455, %v383, 0
        %v480 = vsel %vm456, %v384, 0
        %v481 = vsel %vm457, %v385, 0
        %v482 = vsel %vm458, %v386, 0
        %v483 = vsel %vm459, %v387, 0
        %v484 = vsel %vm460, %v388, 0
        %v485 = vsel %vm461, %v389, 0
        %v486 = vld [vmem:[%s3] sm:$0x3]
        %v511 = vunpack.c.l.b16 %v462
        %v512 = vunpack.c.l.b16 %v463
        %v513 = vunpack.c.l.b16 %v464
        %v514 = vunpack.c.l.b16 %v465
        %v515 = vunpack.c.l.b16 %v466
        %v516 = vunpack.c.l.b16 %v467
        %v517 = vunpack.c.l.b16 %v468
        %v518 = vunpack.c.l.b16 %v469
        %v519 = vunpack.c.l.b16 %v470
        %v520 = vunpack.c.l.b16 %v471
        %v521 = vunpack.c.l.b16 %v472
        %v522 = vunpack.c.l.b16 %v473
        %v523 = vunpack.c.l.b16 %v474
        %v524 = vunpack.c.l.b16 %v475
        %v525 = vunpack.c.l.b16 %v476
        %v526 = vunpack.c.l.b16 %v477
        %v527 = vunpack.c.l.b16 %v478
        %v528 = vunpack.c.l.b16 %v479
        %v529 = vunpack.c.l.b16 %v480
        %v530 = vunpack.c.l.b16 %v481
        %v531 = vunpack.c.l.b16 %v482
        %v532 = vunpack.c.l.b16 %v483
        %v533 = vunpack.c.l.b16 %v484
        %v534 = vunpack.c.l.b16 %v485
        %v535 = vpack.c.b16 %v512, %v511
        %v536 = vpack.c.b16 %v514, %v513
        %v537 = vpack.c.b16 %v516, %v515
        %v538 = vpack.c.b16 %v518, %v517
        %v539 = vpack.c.b16 %v520, %v519
        %v540 = vpack.c.b16 %v522, %v521
        %v541 = vpack.c.b16 %v524, %v523
        %v542 = vpack.c.b16 %v526, %v525
        %v543 = vpack.c.b16 %v528, %v527
        %v544 = vpack.c.b16 %v530, %v529
        %v545 = vpack.c.b16 %v532, %v531
        %v546 = vpack.c.b16 %v534, %v533
        %vm547 = vcmask 31744
        %v549 = vsel %vm547, %v535, 0
        %v552 = vsel %vm547, %v536, 0
        %v555 = vsel %vm547, %v537, 0
        %v558 = vsel %vm547, %v538, 0
        %v561 = vsel %vm547, %v539, 0
        %v564 = vsel %vm547, %v540, 0
        %v567 = vsel %vm547, %v541, 0
        %v570 = vsel %vm547, %v542, 0
        %v573 = vsel %vm547, %v543, 0
        %v576 = vsel %vm547, %v544, 0
        %v579 = vsel %vm547, %v545, 0
        %v582 = vsel %vm547, %v546, 0
        %vm584 = vcmask 1041408
        %v586 = vsel %vm584, %v486, 0
        %588 = vmatpush.bf16.msra.mxu0 0
        %589 = vmatpush.bf16.msra.mxu0 0
        %590 = vmatpush.bf16.msra.mxu0 0
        %591 = vmatpush.bf16.msra.mxu0 0
        %592 = vmatpush.bf16.msra.mxu0 0
        %593 = vmatpush.bf16.msra.mxu0 0
        %594 = vmatpush.bf16.msra.mxu0 0
        %595 = vmatpush.bf16.msra.mxu0 %v586
        %596 = vmatmul.bf16.gmra.mxu0 %v549
        %v597 = vpop.f32.mrf.mxu0
        %v598 = vadd.f32 0.0, %v597
        %v599 = vpop.f32.mrf.mxu0
        %v600 = vadd.f32 0.0, %v599
        %601 = vmatmul.bf16.gmra.mxu0 %v552
        %v602 = vpop.f32.mrf.mxu0
        %v603 = vadd.f32 0.0, %v602
        %v604 = vpop.f32.mrf.mxu0
        %v605 = vadd.f32 0.0, %v604
        %606 = vmatmul.bf16.gmra.mxu0 %v555
        %v607 = vpop.f32.mrf.mxu0
        %v608 = vadd.f32 0.0, %v607
        %v609 = vpop.f32.mrf.mxu0
        %v610 = vadd.f32 0.0, %v609
        %611 = vmatmul.bf16.gmra.mxu0 %v558
        %v612 = vpop.f32.mrf.mxu0
        %v613 = vadd.f32 0.0, %v612
        %v614 = vpop.f32.mrf.mxu0
        %v615 = vadd.f32 0.0, %v614
        %616 = vmatmul.bf16.gmra.mxu0 %v561
        %v617 = vpop.f32.mrf.mxu0
        %v618 = vadd.f32 0.0, %v617
        %v619 = vpop.f32.mrf.mxu0
        %v620 = vadd.f32 0.0, %v619
        %621 = vmatmul.bf16.gmra.mxu0 %v564
        %v622 = vpop.f32.mrf.mxu0
        %v623 = vadd.f32 0.0, %v622
        %v624 = vpop.f32.mrf.mxu0
        %v625 = vadd.f32 0.0, %v624
        %626 = vmatmul.bf16.gmra.mxu0 %v567
        %v627 = vpop.f32.mrf.mxu0
        %v628 = vadd.f32 0.0, %v627
        %v629 = vpop.f32.mrf.mxu0
        %v630 = vadd.f32 0.0, %v629
        %631 = vmatmul.bf16.gmra.mxu0 %v570
        %v632 = vpop.f32.mrf.mxu0
        %v633 = vadd.f32 0.0, %v632
        %v634 = vpop.f32.mrf.mxu0
        %v635 = vadd.f32 0.0, %v634
        %636 = vmatmul.bf16.gmra.mxu0 %v573
        %v637 = vpop.f32.mrf.mxu0
        %v638 = vadd.f32 0.0, %v637
        %v639 = vpop.f32.mrf.mxu0
        %v640 = vadd.f32 0.0, %v639
        %641 = vmatmul.bf16.gmra.mxu0 %v576
        %v642 = vpop.f32.mrf.mxu0
        %v643 = vadd.f32 0.0, %v642
        %v644 = vpop.f32.mrf.mxu0
        %v645 = vadd.f32 0.0, %v644
        %646 = vmatmul.bf16.gmra.mxu0 %v579
        %v647 = vpop.f32.mrf.mxu0
        %v648 = vadd.f32 0.0, %v647
        %v649 = vpop.f32.mrf.mxu0
        %v650 = vadd.f32 0.0, %v649
        %651 = vmatmul.bf16.gmra.mxu0 %v582
        %v652 = vpop.f32.mrf.mxu0
        %v653 = vadd.f32 0.0, %v652
        %v654 = vpop.f32.mrf.mxu0
        %v655 = vadd.f32 0.0, %v654
        %656 = vdwg.mxu0
        %v657 = vpack.c.bf16 %v598, %v598
        %v658 = vpack.c.bf16 %v600, %v600
        %v659 = vpack.c.bf16 %v603, %v603
        %v660 = vpack.c.bf16 %v605, %v605
        %v661 = vpack.c.bf16 %v608, %v608
        %v662 = vpack.c.bf16 %v610, %v610
        %v663 = vpack.c.bf16 %v613, %v613
        %v664 = vpack.c.bf16 %v615, %v615
        %v665 = vpack.c.bf16 %v618, %v618
        %v666 = vpack.c.bf16 %v620, %v620
        %v667 = vpack.c.bf16 %v623, %v623
        %v668 = vpack.c.bf16 %v625, %v625
        %v669 = vpack.c.bf16 %v628, %v628
        %v670 = vpack.c.bf16 %v630, %v630
        %v671 = vpack.c.bf16 %v633, %v633
        %v672 = vpack.c.bf16 %v635, %v635
        %v673 = vpack.c.bf16 %v638, %v638
        %v674 = vpack.c.bf16 %v640, %v640
        %v675 = vpack.c.bf16 %v643, %v643
        %v676 = vpack.c.bf16 %v645, %v645
        %v677 = vpack.c.bf16 %v648, %v648
        %v678 = vpack.c.bf16 %v650, %v650
        %v679 = vpack.c.bf16 %v653, %v653
        %v680 = vpack.c.bf16 %v655, %v655
        %681 = vst [vmem:[%s254] sm:$0xf] %v657
        %682 = vst [vmem:[%s254 + $0x4] sm:$0xf] %v658
        %683 = vst [vmem:[%s254 + $0x8] sm:$0xf] %v659
        %684 = vst [vmem:[%s254 + $0xc] sm:$0xf] %v660
        %685 = vst [vmem:[%s254 + $0x10] sm:$0xf] %v661
        %686 = vst [vmem:[%s254 + $0x14] sm:$0xf] %v662
        %687 = vst [vmem:[%s254 + $0x18] sm:$0xf] %v663
        %688 = vst [vmem:[%s254 + $0x1c] sm:$0xf] %v664
        %689 = vst [vmem:[%s254 + $0x20] sm:$0xf] %v665
        %690 = vst [vmem:[%s254 + $0x24] sm:$0xf] %v666
        %691 = vst [vmem:[%s254 + $0x28] sm:$0xf] %v667
        %692 = vst [vmem:[%s254 + $0x2c] sm:$0xf] %v668
        %693 = vst [vmem:[%s254 + $0x30] sm:$0xf] %v669
        %694 = vst [vmem:[%s254 + $0x34] sm:$0xf] %v670
        %695 = vst [vmem:[%s254 + $0x38] sm:$0xf] %v671
        %696 = vst [vmem:[%s254 + $0x3c] sm:$0xf] %v672
        %697 = vst [vmem:[%s254 + $0x40] sm:$0xf] %v673
        %698 = vst [vmem:[%s254 + $0x44] sm:$0xf] %v674
        %699 = vst [vmem:[%s254 + $0x48] sm:$0xf] %v675
        %700 = vst [vmem:[%s254 + $0x4c] sm:$0xf] %v676
        %701 = vst [vmem:[%s254 + $0x50] sm:$0xf] %v677
        %702 = vst [vmem:[%s254 + $0x54] sm:$0xf] %v678
        %703 = vst [vmem:[%s254 + $0x58] sm:$0xf] %v679
        %704 = vst [vmem:[%s254 + $0x5c] sm:$0xf] %v680
        %v705 = vadd.f32 %v598, %v600
        %v706 = vadd.f32 %v705, %v603
        %v707 = vadd.f32 %v706, %v605
        %v708 = vadd.f32 %v707, %v608
        %v709 = vadd.f32 %v708, %v610
        %v710 = vadd.f32 %v709, %v613
        %v711 = vadd.f32 %v710, %v615
        %v712 = vadd.f32 %v711, %v618
        %v713 = vadd.f32 %v712, %v620
        %v714 = vadd.f32 %v713, %v623
        %v715 = vadd.f32 %v714, %v625
        %v716 = vadd.f32 %v715, %v628
        %v717 = vadd.f32 %v716, %v630
        %v718 = vadd.f32 %v717, %v633
        %v719 = vadd.f32 %v718, %v635
        %v720 = vadd.f32 %v719, %v638
        %v721 = vadd.f32 %v720, %v640
        %v722 = vadd.f32 %v721, %v643
        %v723 = vadd.f32 %v722, %v645
        %v724 = vadd.f32 %v723, %v648
        %v725 = vadd.f32 %v724, %v650
        %v726 = vadd.f32 %v725, %v653
        %v727 = vadd.f32 %v726, %v655
        %v728 = vrot.slane %v727, 4
        %v729 = vadd.f32 %v727, %v728
        %v730 = vrot.slane %v729, 2
        %v731 = vadd.f32 %v729, %v730
        %v732 = vrot.slane %v731, 1
        %v733 = vadd.f32 %v731, %v732
        %734 = vst [vmem:[%s286] sm:$0x1] %v733
        %v735 = vmul.f32 %v598, %v598
        %v736 = vmul.f32 %v600, %v600
        %v737 = vmul.f32 %v603, %v603
        %v738 = vmul.f32 %v605, %v605
        %v739 = vmul.f32 %v608, %v608
        %v740 = vmul.f32 %v610, %v610
        %v741 = vmul.f32 %v613, %v613
        %v742 = vmul.f32 %v615, %v615
        %v743 = vmul.f32 %v618, %v618
        %v744 = vmul.f32 %v620, %v620
        %v745 = vmul.f32 %v623, %v623
        %v746 = vmul.f32 %v625, %v625
        %v747 = vmul.f32 %v628, %v628
        %v748 = vmul.f32 %v630, %v630
        %v749 = vmul.f32 %v633, %v633
        %v750 = vmul.f32 %v635, %v635
        %v751 = vmul.f32 %v638, %v638
        %v752 = vmul.f32 %v640, %v640
        %v753 = vmul.f32 %v643, %v643
        %v754 = vmul.f32 %v645, %v645
        %v755 = vmul.f32 %v648, %v648
        %v756 = vmul.f32 %v650, %v650
        %v757 = vmul.f32 %v653, %v653
        %v758 = vmul.f32 %v655, %v655
        %v759 = vadd.f32 %v735, %v736
        %v760 = vadd.f32 %v759, %v737
        %v761 = vadd.f32 %v760, %v738
        %v762 = vadd.f32 %v761, %v739
        %v763 = vadd.f32 %v762, %v740
        %v764 = vadd.f32 %v763, %v741
        %v765 = vadd.f32 %v764, %v742
        %v766 = vadd.f32 %v765, %v743
        %v767 = vadd.f32 %v766, %v744
        %v768 = vadd.f32 %v767, %v745
        %v769 = vadd.f32 %v768, %v746
        %v770 = vadd.f32 %v769, %v747
        %v771 = vadd.f32 %v770, %v748
        %v772 = vadd.f32 %v771, %v749
        %v773 = vadd.f32 %v772, %v750
        %v774 = vadd.f32 %v773, %v751
        %v775 = vadd.f32 %v774, %v752
        %v776 = vadd.f32 %v775, %v753
        %v777 = vadd.f32 %v776, %v754
        %v778 = vadd.f32 %v777, %v755
        %v779 = vadd.f32 %v778, %v756
        %v780 = vadd.f32 %v779, %v757
        %v781 = vadd.f32 %v780, %v758
        %v782 = vrot.slane %v781, 4
        %v783 = vadd.f32 %v781, %v782
        %v784 = vrot.slane %v783, 2
        %v785 = vadd.f32 %v783, %v784
        %v786 = vrot.slane %v785, 1
        %v787 = vadd.f32 %v785, %v786
        %788 = vst [vmem:[%s289] sm:$0x1] %v787
        %s789 = sand.u32 %s115, 1
        %s790 = sand.u32 %s115, 1
        %s791 = smul.addr %s790, 96
        %s792 = scalar_lea.vmem [#allocation2], %s791
        %p793 = scmp.lt.s32.totalorder %s18, 2
        %s794 = scalar_select %p793, %s18, 2
        %s795 = scalar_lea.vmem %s5, %s794
        %p796 = scmp.lt.s32.totalorder %s18, 2
        %s797 = scalar_select %p796, %s18, 2
        %s798 = scalar_lea.vmem %s6, %s797
        // Predicated region
        $region37: #{conv_bottle_forward.4} parent=35 // pred_check
          %p799 = pneg %p125
        $region38: #{conv_bottle_forward.4} parent=35 // pred_check_branch
          %801 = sbr.rel (%p799) target = $region40
        $region39: #{conv_bottle_forward.4} parent=35 // pred_region
          %s802 = smul.u32 24, %s18
          %s803 = ssub.s32 64, %s802
          %p804 = scmp.lt.s32.totalorder %s803, 24
          %s805 = scalar_select %p804, %s803, 24
          %s806 = smul.u32 4, %s805
          %p807 = scmp.ne.s32.totalorder 0, %s806
          %s808 = smul.addr %s802, 4
          %s809 = scalar_lea.vmem %s4, %s808
          // Predicated region
          $region41: #{conv_bottle_forward.4} parent=39 // pred_check
            %p810 = pneg %p807
          $region42: #{conv_bottle_forward.4} parent=39 // pred_check_branch
            %812 = sbr.rel (%p810) target = $region44
          $region43: #{conv_bottle_forward.4} parent=39 // pred_region
            // Predicated region
            $region45: #{conv_bottle_forward.4} parent=43 // pred_check
              _
            $region46: #{conv_bottle_forward.4} parent=43 // pred_check_branch
              %814 = sbr.rel target = $region48
            $region47: #{conv_bottle_forward.4} parent=43 // pred_region
              // Predicated region
              $region67: #{conv_bottle_forward.4} parent=47 // pred_check
                _
              $region68: #{conv_bottle_forward.4} parent=47 // pred_check_branch
                %911 = sbr.rel (0) target = $region70
              $region69: #{conv_bottle_forward.4} parent=47 // pred_region
                %s913 = ssub.s32 16, 1
                %s914 = sdiv.u32.pop %s805, 24
                %s915 = srem.u32.pop %s805, 24
                // While loop
                $region71: #{conv_bottle_forward.4} parent=69 // loop_pre_header
                  _
                $region72: #{conv_bottle_forward.4} parent=69 // loop_header
                  %s917 = sphi 0, %s919
                  %p918 = scmp.ge.s32.totalorder %s917, %s914
                  %s922 = sphi 0, %s975
                  %s923 = sphi %s792, %s978
                  %s924 = sphi %s809, %s979
                $region73: #{conv_bottle_forward.4} parent=69 // loop_header_branch
                  %921 = sbr.rel (%p918) target = $region77
                $region74: #{conv_bottle_forward.4} parent=69 // loop_body
                  %v925 = vld [vmem:[%s923] sm:%s913]
                  %926 = vst [vmem:[%s924] sm:%s913] %v925
                  %v927 = vld [vmem:[%s923 + $0x4] sm:%s913]
                  %928 = vst [vmem:[%s924 + $0x4] sm:%s913] %v927
                  %v929 = vld [vmem:[%s923 + $0x8] sm:%s913]
                  %930 = vst [vmem:[%s924 + $0x8] sm:%s913] %v929
                  %v931 = vld [vmem:[%s923 + $0xc] sm:%s913]
                  %932 = vst [vmem:[%s924 + $0xc] sm:%s913] %v931
                  %v933 = vld [vmem:[%s923 + $0x10] sm:%s913]
                  %934 = vst [vmem:[%s924 + $0x10] sm:%s913] %v933
                  %v935 = vld [vmem:[%s923 + $0x14] sm:%s913]
                  %936 = vst [vmem:[%s924 + $0x14] sm:%s913] %v935
                  %v937 = vld [vmem:[%s923 + $0x18] sm:%s913]
                  %938 = vst [vmem:[%s924 + $0x18] sm:%s913] %v937
                  %v939 = vld [vmem:[%s923 + $0x1c] sm:%s913]
                  %940 = vst [vmem:[%s924 + $0x1c] sm:%s913] %v939
                  %v941 = vld [vmem:[%s923 + $0x20] sm:%s913]
                  %942 = vst [vmem:[%s924 + $0x20] sm:%s913] %v941
                  %v943 = vld [vmem:[%s923 + $0x24] sm:%s913]
                  %944 = vst [vmem:[%s924 + $0x24] sm:%s913] %v943
                  %v945 = vld [vmem:[%s923 + $0x28] sm:%s913]
                  %946 = vst [vmem:[%s924 + $0x28] sm:%s913] %v945
                  %v947 = vld [vmem:[%s923 + $0x2c] sm:%s913]
                  %948 = vst [vmem:[%s924 + $0x2c] sm:%s913] %v947
                  %v949 = vld [vmem:[%s923 + $0x30] sm:%s913]
                  %950 = vst [vmem:[%s924 + $0x30] sm:%s913] %v949
                  %v951 = vld [vmem:[%s923 + $0x34] sm:%s913]
                  %952 = vst [vmem:[%s924 + $0x34] sm:%s913] %v951
                  %v953 = vld [vmem:[%s923 + $0x38] sm:%s913]
                  %954 = vst [vmem:[%s924 + $0x38] sm:%s913] %v953
                  %v955 = vld [vmem:[%s923 + $0x3c] sm:%s913]
                  %956 = vst [vmem:[%s924 + $0x3c] sm:%s913] %v955
                  %v957 = vld [vmem:[%s923 + $0x40] sm:%s913]
                  %958 = vst [vmem:[%s924 + $0x40] sm:%s913] %v957
                  %v959 = vld [vmem:[%s923 + $0x44] sm:%s913]
                  %960 = vst [vmem:[%s924 + $0x44] sm:%s913] %v959
                  %v961 = vld [vmem:[%s923 + $0x48] sm:%s913]
                  %962 = vst [vmem:[%s924 + $0x48] sm:%s913] %v961
                  %v963 = vld [vmem:[%s923 + $0x4c] sm:%s913]
                  %964 = vst [vmem:[%s924 + $0x4c] sm:%s913] %v963
                  %v965 = vld [vmem:[%s923 + $0x50] sm:%s913]
                  %966 = vst [vmem:[%s924 + $0x50] sm:%s913] %v965
                  %v967 = vld [vmem:[%s923 + $0x54] sm:%s913]
                  %968 = vst [vmem:[%s924 + $0x54] sm:%s913] %v967
                  %v969 = vld [vmem:[%s923 + $0x58] sm:%s913]
                  %970 = vst [vmem:[%s924 + $0x58] sm:%s913] %v969
                  %v971 = vld [vmem:[%s923 + $0x5c] sm:%s913]
                  %972 = vst [vmem:[%s924 + $0x5c] sm:%s913] %v971
                  %s973 = sadd.s32 1, %s922
                  %p974 = scmp.ge.s32.totalorder %s973, %s914
                  %s975 = scalar_select %p974, 0, %s973
                  %s976 = smul.u32 %s975, 96
                  %s977 = smul.u32 %s975, 96
                  %s978 = scalar_lea.vmem %s792, %s976 [#allocation2]
                  %s979 = scalar_lea.vmem %s809, %s977
                $region75: #{conv_bottle_forward.4} parent=69 // loop_footer
                  %s919 = sadd.s32 %s917, 1
                $region76: #{conv_bottle_forward.4} parent=69 // loop_footer_branch
                  %916 = sbr.rel target = $region72
                $region77: #{conv_bottle_forward.4} parent=69 // loop_exit
                  _
                %s980 = sdiv.u32.pop %s805, 24
                %s981 = srem.u32.pop %s805, 24
                %s982 = smul.u32 %s980, 24
                %s983 = smul.u32 4, %s982
                %s984 = scalar_lea.vmem %s792, %s983 [#allocation2]
                %s985 = smul.u32 4, %s982
                %s986 = scalar_lea.vmem %s809, %s985
                // While loop
                $region78: #{conv_bottle_forward.4} parent=69 // loop_pre_header
                  _
                $region79: #{conv_bottle_forward.4} parent=69 // loop_header
                  %s988 = sphi 0, %s990
                  %p989 = scmp.ge.s32.totalorder %s988, %s981
                  %s993 = sphi 0, %s1000
                  %s994 = sphi %s984, %s1003
                  %s995 = sphi %s986, %s1004
                $region80: #{conv_bottle_forward.4} parent=69 // loop_header_branch
                  %992 = sbr.rel (%p989) target = $region84
                $region81: #{conv_bottle_forward.4} parent=69 // loop_body
                  %v996 = vld [vmem:[%s994] sm:%s913]
                  %997 = vst [vmem:[%s995] sm:%s913] %v996
                  %s998 = sadd.s32 1, %s993
                  %p999 = scmp.ge.s32.totalorder %s998, %s981
                  %s1000 = scalar_select %p999, 0, %s998
                  %s1001 = smul.u32 %s1000, 4
                  %s1002 = smul.u32 %s1000, 4
                  %s1003 = scalar_lea.vmem %s984, %s1001 [#allocation2]
                  %s1004 = scalar_lea.vmem %s986, %s1002
                $region82: #{conv_bottle_forward.4} parent=69 // loop_footer
                  %s990 = sadd.s32 %s988, 1
                $region83: #{conv_bottle_forward.4} parent=69 // loop_footer_branch
                  %987 = sbr.rel target = $region79
                $region84: #{conv_bottle_forward.4} parent=69 // loop_exit
                  _
              $region70: #{conv_bottle_forward.4} parent=47 // pred_fallthru
                _
            $region48: #{conv_bottle_forward.4} parent=43 // pred_fallthru
              _
            // Predicated region
            $region49: #{conv_bottle_forward.4} parent=43 // pred_check
              _
            $region50: #{conv_bottle_forward.4} parent=43 // pred_check_branch
              %816 = sbr.rel (0) target = $region52
            $region51: #{conv_bottle_forward.4} parent=43 // pred_region
              %s818 = ssub.s32 16, 1
              %s819 = sdiv.u32.pop %s805, 24
              %s820 = srem.u32.pop %s805, 24
              // While loop
              $region53: #{conv_bottle_forward.4} parent=51 // loop_pre_header
                _
              $region54: #{conv_bottle_forward.4} parent=51 // loop_header
                %s822 = sphi 0, %s824
                %p823 = scmp.ge.s32.totalorder %s822, %s819
                %s827 = sphi 0, %s880
                %s828 = sphi %s792, %s883
                %s829 = sphi %s809, %s884
              $region55: #{conv_bottle_forward.4} parent=51 // loop_header_branch
                %826 = sbr.rel (%p823) target = $region59
              $region56: #{conv_bottle_forward.4} parent=51 // loop_body
                %v830 = vld [vmem:[%s828] sm:%s818]
                %831 = vst [vmem:[%s829] sm:%s818] %v830
                %v832 = vld [vmem:[%s828 + $0x4] sm:%s818]
                %833 = vst [vmem:[%s829 + $0x4] sm:%s818] %v832
                %v834 = vld [vmem:[%s828 + $0x8] sm:%s818]
                %835 = vst [vmem:[%s829 + $0x8] sm:%s818] %v834
                %v836 = vld [vmem:[%s828 + $0xc] sm:%s818]
                %837 = vst [vmem:[%s829 + $0xc] sm:%s818] %v836
                %v838 = vld [vmem:[%s828 + $0x10] sm:%s818]
                %839 = vst [vmem:[%s829 + $0x10] sm:%s818] %v838
                %v840 = vld [vmem:[%s828 + $0x14] sm:%s818]
                %841 = vst [vmem:[%s829 + $0x14] sm:%s818] %v840
                %v842 = vld [vmem:[%s828 + $0x18] sm:%s818]
                %843 = vst [vmem:[%s829 + $0x18] sm:%s818] %v842
                %v844 = vld [vmem:[%s828 + $0x1c] sm:%s818]
                %845 = vst [vmem:[%s829 + $0x1c] sm:%s818] %v844
                %v846 = vld [vmem:[%s828 + $0x20] sm:%s818]
                %847 = vst [vmem:[%s829 + $0x20] sm:%s818] %v846
                %v848 = vld [vmem:[%s828 + $0x24] sm:%s818]
                %849 = vst [vmem:[%s829 + $0x24] sm:%s818] %v848
                %v850 = vld [vmem:[%s828 + $0x28] sm:%s818]
                %851 = vst [vmem:[%s829 + $0x28] sm:%s818] %v850
                %v852 = vld [vmem:[%s828 + $0x2c] sm:%s818]
                %853 = vst [vmem:[%s829 + $0x2c] sm:%s818] %v852
                %v854 = vld [vmem:[%s828 + $0x30] sm:%s818]
                %855 = vst [vmem:[%s829 + $0x30] sm:%s818] %v854
                %v856 = vld [vmem:[%s828 + $0x34] sm:%s818]
                %857 = vst [vmem:[%s829 + $0x34] sm:%s818] %v856
                %v858 = vld [vmem:[%s828 + $0x38] sm:%s818]
                %859 = vst [vmem:[%s829 + $0x38] sm:%s818] %v858
                %v860 = vld [vmem:[%s828 + $0x3c] sm:%s818]
                %861 = vst [vmem:[%s829 + $0x3c] sm:%s818] %v860
                %v862 = vld [vmem:[%s828 + $0x40] sm:%s818]
                %863 = vst [vmem:[%s829 + $0x40] sm:%s818] %v862
                %v864 = vld [vmem:[%s828 + $0x44] sm:%s818]
                %865 = vst [vmem:[%s829 + $0x44] sm:%s818] %v864
                %v866 = vld [vmem:[%s828 + $0x48] sm:%s818]
                %867 = vst [vmem:[%s829 + $0x48] sm:%s818] %v866
                %v868 = vld [vmem:[%s828 + $0x4c] sm:%s818]
                %869 = vst [vmem:[%s829 + $0x4c] sm:%s818] %v868
                %v870 = vld [vmem:[%s828 + $0x50] sm:%s818]
                %871 = vst [vmem:[%s829 + $0x50] sm:%s818] %v870
                %v872 = vld [vmem:[%s828 + $0x54] sm:%s818]
                %873 = vst [vmem:[%s829 + $0x54] sm:%s818] %v872
                %v874 = vld [vmem:[%s828 + $0x58] sm:%s818]
                %875 = vst [vmem:[%s829 + $0x58] sm:%s818] %v874
                %v876 = vld [vmem:[%s828 + $0x5c] sm:%s818]
                %877 = vst [vmem:[%s829 + $0x5c] sm:%s818] %v876
                %s878 = sadd.s32 1, %s827
                %p879 = scmp.ge.s32.totalorder %s878, %s819
                %s880 = scalar_select %p879, 0, %s878
                %s881 = smul.u32 %s880, 96
                %s882 = smul.u32 %s880, 96
                %s883 = scalar_lea.vmem %s792, %s881 [#allocation2]
                %s884 = scalar_lea.vmem %s809, %s882
              $region57: #{conv_bottle_forward.4} parent=51 // loop_footer
                %s824 = sadd.s32 %s822, 1
              $region58: #{conv_bottle_forward.4} parent=51 // loop_footer_branch
                %821 = sbr.rel target = $region54
              $region59: #{conv_bottle_forward.4} parent=51 // loop_exit
                _
              %s885 = sdiv.u32.pop %s805, 24
              %s886 = srem.u32.pop %s805, 24
              %s887 = smul.u32 %s885, 24
              %s888 = smul.u32 4, %s887
              %s889 = scalar_lea.vmem %s792, %s888 [#allocation2]
              %s890 = smul.u32 4, %s887
              %s891 = scalar_lea.vmem %s809, %s890
              // While loop
              $region60: #{conv_bottle_forward.4} parent=51 // loop_pre_header
                _
              $region61: #{conv_bottle_forward.4} parent=51 // loop_header
                %s893 = sphi 0, %s895
                %p894 = scmp.ge.s32.totalorder %s893, %s886
                %s898 = sphi 0, %s905
                %s899 = sphi %s889, %s908
                %s900 = sphi %s891, %s909
              $region62: #{conv_bottle_forward.4} parent=51 // loop_header_branch
                %897 = sbr.rel (%p894) target = $region66
              $region63: #{conv_bottle_forward.4} parent=51 // loop_body
                %v901 = vld [vmem:[%s899] sm:%s818]
                %902 = vst [vmem:[%s900] sm:%s818] %v901
                %s903 = sadd.s32 1, %s898
                %p904 = scmp.ge.s32.totalorder %s903, %s886
                %s905 = scalar_select %p904, 0, %s903
                %s906 = smul.u32 %s905, 4
                %s907 = smul.u32 %s905, 4
                %s908 = scalar_lea.vmem %s889, %s906 [#allocation2]
                %s909 = scalar_lea.vmem %s891, %s907
              $region64: #{conv_bottle_forward.4} parent=51 // loop_footer
                %s895 = sadd.s32 %s893, 1
              $region65: #{conv_bottle_forward.4} parent=51 // loop_footer_branch
                %892 = sbr.rel target = $region61
              $region66: #{conv_bottle_forward.4} parent=51 // loop_exit
                _
            $region52: #{conv_bottle_forward.4} parent=43 // pred_fallthru
              _
          $region44: #{conv_bottle_forward.4} parent=39 // pred_fallthru
            _
          %1005 = vnop
        $region40: #{conv_bottle_forward.4} parent=35 // pred_fallthru
          _
        // Predicated region
        $region85: #{conv_bottle_forward.4} parent=35 // pred_check
          %p1006 = pneg %p151
        $region86: #{conv_bottle_forward.4} parent=35 // pred_check_branch
          %1008 = sbr.rel (%p1006) target = $region88
        $region87: #{conv_bottle_forward.4} parent=35 // pred_region
          _
        $region88: #{conv_bottle_forward.4} parent=35 // pred_fallthru
          _
        // Predicated region
        $region89: #{conv_bottle_forward.4} parent=35 // pred_check
          %p1009 = pneg %p177
        $region90: #{conv_bottle_forward.4} parent=35 // pred_check_branch
          %1011 = sbr.rel (%p1009) target = $region92
        $region91: #{conv_bottle_forward.4} parent=35 // pred_region
          _
        $region92: #{conv_bottle_forward.4} parent=35 // pred_fallthru
          _
      $region36: #{conv_bottle_forward.4} parent=5 // pred_fallthru
        _
      %p1012 = scmp.le.s32.totalorder 2, %s13
      // Predicated region
      $region93: #{conv_bottle_forward.4} parent=5 // pred_check
        %p1013 = pneg %p1012
      $region94: #{conv_bottle_forward.4} parent=5 // pred_check_branch
        %1015 = sbr.rel (%p1013) target = $region96
      $region95: #{conv_bottle_forward.4} parent=5 // pred_region
        %s1016 = ssub.s32 %s13, 2
        // Predicated region
        $region97: #{conv_bottle_forward.4} parent=95 // pred_check
          %p1017 = pneg %p131
        $region98: #{conv_bottle_forward.4} parent=95 // pred_check_branch
          %1019 = sbr.rel (%p1017) target = $region100
        $region99: #{conv_bottle_forward.4} parent=95 // pred_region
          %s1020 = sand.u32 %s116, 1
          %s1021 = sand.u32 %s116, 1
          %s1022 = smul.addr %s1021, 96
          %s1023 = scalar_lea.vmem [#allocation2], %s1022
        $region100: #{conv_bottle_forward.4} parent=95 // pred_fallthru
          _
        // Predicated region
        $region101: #{conv_bottle_forward.4} parent=95 // pred_check
          %p1024 = pneg %p157
        $region102: #{conv_bottle_forward.4} parent=95 // pred_check_branch
          %1026 = sbr.rel (%p1024) target = $region104
        $region103: #{conv_bottle_forward.4} parent=95 // pred_region
          %p1027 = scmp.lt.s32.totalorder %s19, 2
          %s1028 = scalar_select %p1027, %s19, 2
          %s1029 = scalar_lea.vmem %s5, %s1028
        $region104: #{conv_bottle_forward.4} parent=95 // pred_fallthru
          _
        // Predicated region
        $region105: #{conv_bottle_forward.4} parent=95 // pred_check
          %p1030 = pneg %p183
        $region106: #{conv_bottle_forward.4} parent=95 // pred_check_branch
          %1032 = sbr.rel (%p1030) target = $region108
        $region107: #{conv_bottle_forward.4} parent=95 // pred_region
          %p1033 = scmp.lt.s32.totalorder %s19, 2
          %s1034 = scalar_select %p1033, %s19, 2
          %s1035 = scalar_lea.vmem %s6, %s1034
        $region108: #{conv_bottle_forward.4} parent=95 // pred_fallthru
          _
      $region96: #{conv_bottle_forward.4} parent=5 // pred_fallthru
        _
    $region6: #{conv_bottle_forward.4} parent=1 // loop_footer
      %s17 = sadd.s32 1, %s13
    $region7: #{conv_bottle_forward.4} parent=1 // loop_footer_branch
      %12 = sbr.rel target = $region3
    $region8: #{conv_bottle_forward.4} parent=1 // loop_exit
      _

// kernel: conv_bottle_forward.6
$region0: #{conv_bottle_forward.6}
  #allocation0 [shape = 'u32[]', space=smem, size = 0x4, offset = 0x4, fixed_abs, tag = 'smem constant byte address 0x4 - core index']
  #allocation1 [shape = 'u32[72,128]{1,0:T(1,128)}', space=vmem, size = 0x9000, scoped, tag = 'internal scratch']
  %s0 = inlined_call_operand.vmem [shape: bf16[512,128], index: 0, kind: input, shape index: {}]
  %s1 = inlined_call_operand.vmem [shape: f32[1,128], index: 1, kind: input, shape index: {}]
  %s2 = inlined_call_operand.vmem [shape: f32[1,128], index: 2, kind: input, shape index: {}]
  %s3 = inlined_call_operand.vmem [shape: bf16[128,128], index: 3, kind: input, shape index: {}]
  %s4 = inlined_call_operand.vmem [shape: bf16[512,128], index: 4, kind: output, shape index: {0}]
  %s5 = inlined_call_operand.vmem [shape: f32[3,1,128], index: 5, kind: output, shape index: {1}]
  %s6 = inlined_call_operand.vmem [shape: f32[3,1,128], index: 6, kind: output, shape index: {2}]
  %7 = xla_tuple %s4, %s5, %s6
  %s8 = sld [smem:[#allocation0]]
  $region109: #{conv_bottle_forward.6} parent=0
    _
  %s10 = ssub.s32 1, %s8
  %s11 = scalar_select 0, %s10, %s8
  $region1: #{conv_bottle_forward.6} parent=0
    #allocation2 [shape = 'u8[98304]{0}', space=vmem, size = 0x18000, scoped, tag = 'output window, operand 0']
    loop: start=0, step=1, limit=5
    $region2: #{conv_bottle_forward.6} parent=1 // loop_pre_header
      _
    $region3: #{conv_bottle_forward.6} parent=1 // loop_header
      %s13 = sphi 0, %s17
      %p14 = scmp.ge.s32.totalorder %s13, 5
      %s23 = sphi 0, %s25
      %s26 = sphi 0, %s23
      %s27 = sphi 0, %s26
      %s43 = sphi 0, %s27
      %s47 = sphi 0, %s47
      %s49 = sphi 0, %s47
      %s50 = sphi 0, %s49
      %s64 = sphi 0, %s50
      %s68 = sphi 0, %s68
      %s70 = sphi 0, %s68
      %s71 = sphi 0, %s70
      %s85 = sphi 0, %s71
      %s89 = sphi 0, %s89
      %s91 = sphi 0, %s89
      %s92 = sphi 0, %s91
      %s106 = sphi 0, %s92
      %s112 = sphi 0, %s114
      %s115 = sphi 0, %s112
      %s116 = sphi 0, %s115
      %s132 = sphi 0, %s116
      %s138 = sphi 0, %s140
      %s141 = sphi 0, %s138
      %s142 = sphi 0, %s141
      %s158 = sphi 0, %s142
      %s164 = sphi 0, %s166
      %s167 = sphi 0, %s164
      %s168 = sphi 0, %s167
      %s184 = sphi 0, %s168
    $region4: #{conv_bottle_forward.6} parent=1 // loop_header_branch
      %16 = sbr.rel (%p14) target = $region8
    $region5: #{conv_bottle_forward.6} parent=1 // loop_body
      %s18 = ssub.s32 %s13, 1
      %s19 = ssub.s32 %s13, 2
      %s20 = sadd.s32 %s13, 1
      %s21 = ssub.s32 %s13, %s20
      %p22 = scmp.eq.s32.totalorder %s21, 0
      %s24 = sadd.s32 %s23, 1
      %s25 = scalar_select %p22, %s23, %s24
      %p28 = pneg %p22
      %p29 = scmp.eq.s32.totalorder %s13, 2
      %p30 = por %p28, %p29
      %p31 = scmp.ne.s32.totalorder %s23, %s26
      %p32 = scmp.eq.s32.totalorder %s13, 0
      %p33 = por %p31, %p32
      %p34 = scmp.ne.s32.totalorder %s23, %s26
      %p35 = scmp.eq.s32.totalorder %s18, 2
      %p36 = por %p34, %p35
      %p37 = scmp.ne.s32.totalorder %s26, %s27
      %p38 = scmp.eq.s32.totalorder %s18, 0
      %p39 = por %p37, %p38
      %p40 = scmp.ne.s32.totalorder %s26, %s27
      %p41 = scmp.eq.s32.totalorder %s19, 2
      %p42 = por %p40, %p41
      %p44 = scmp.ne.s32.totalorder %s27, %s43
      %p45 = scmp.eq.s32.totalorder %s19, 0
      %p46 = por %p44, %p45
      %s48 = sadd.s32 %s47, 1
      %p51 = scmp.eq.s32.totalorder %s13, 2
      %p52 = scmp.ne.s32.totalorder %s47, %s49
      %p53 = scmp.eq.s32.totalorder %s13, 0
      %p54 = por %p52, %p53
      %p55 = scmp.ne.s32.totalorder %s47, %s49
      %p56 = scmp.eq.s32.totalorder %s18, 2
      %p57 = por %p55, %p56
      %p58 = scmp.ne.s32.totalorder %s49, %s50
      %p59 = scmp.eq.s32.totalorder %s18, 0
      %p60 = por %p58, %p59
      %p61 = scmp.ne.s32.totalorder %s49, %s50
      %p62 = scmp.eq.s32.totalorder %s19, 2
      %p63 = por %p61, %p62
      %p65 = scmp.ne.s32.totalorder %s50, %s64
      %p66 = scmp.eq.s32.totalorder %s19, 0
      %p67 = por %p65, %p66
      %s69 = sadd.s32 %s68, 1
      %p72 = scmp.eq.s32.totalorder %s13, 2
      %p73 = scmp.ne.s32.totalorder %s68, %s70
      %p74 = scmp.eq.s32.totalorder %s13, 0
      %p75 = por %p73, %p74
      %p76 = scmp.ne.s32.totalorder %s68, %s70
      %p77 = scmp.eq.s32.totalorder %s18, 2
      %p78 = por %p76, %p77
      %p79 = scmp.ne.s32.totalorder %s70, %s71
      %p80 = scmp.eq.s32.totalorder %s18, 0
      %p81 = por %p79, %p80
      %p82 = scmp.ne.s32.totalorder %s70, %s71
      %p83 = scmp.eq.s32.totalorder %s19, 2
      %p84 = por %p82, %p83
      %p86 = scmp.ne.s32.totalorder %s71, %s85
      %p87 = scmp.eq.s32.totalorder %s19, 0
      %p88 = por %p86, %p87
      %s90 = sadd.s32 %s89, 1
      %p93 = scmp.eq.s32.totalorder %s13, 2
      %p94 = scmp.ne.s32.totalorder %s89, %s91
      %p95 = scmp.eq.s32.totalorder %s13, 0
      %p96 = por %p94, %p95
      %p97 = scmp.ne.s32.totalorder %s89, %s91
      %p98 = scmp.eq.s32.totalorder %s18, 2
      %p99 = por %p97, %p98
      %p100 = scmp.ne.s32.totalorder %s91, %s92
      %p101 = scmp.eq.s32.totalorder %s18, 0
      %p102 = por %p100, %p101
      %p103 = scmp.ne.s32.totalorder %s91, %s92
      %p104 = scmp.eq.s32.totalorder %s19, 2
      %p105 = por %p103, %p104
      %p107 = scmp.ne.s32.totalorder %s92, %s106
      %p108 = scmp.eq.s32.totalorder %s19, 0
      %p109 = por %p107, %p108
      %s110 = ssub.s32 %s13, %s20
      %p111 = scmp.eq.s32.totalorder %s110, 0
      %s113 = sadd.s32 %s112, 1
      %s114 = scalar_select %p111, %s112, %s113
      %p117 = pneg %p111
      %p118 = scmp.eq.s32.totalorder %s13, 2
      %p119 = por %p117, %p118
      %p120 = scmp.ne.s32.totalorder %s112, %s115
      %p121 = scmp.eq.s32.totalorder %s13, 0
      %p122 = por %p120, %p121
      %p123 = scmp.ne.s32.totalorder %s112, %s115
      %p124 = scmp.eq.s32.totalorder %s18, 2
      %p125 = por %p123, %p124
      %p126 = scmp.ne.s32.totalorder %s115, %s116
      %p127 = scmp.eq.s32.totalorder %s18, 0
      %p128 = por %p126, %p127
      %p129 = scmp.ne.s32.totalorder %s115, %s116
      %p130 = scmp.eq.s32.totalorder %s19, 2
      %p131 = por %p129, %p130
      %p133 = scmp.ne.s32.totalorder %s116, %s132
      %p134 = scmp.eq.s32.totalorder %s19, 0
      %p135 = por %p133, %p134
      %s136 = ssub.s32 %s13, %s20
      %p137 = scmp.eq.s32.totalorder %s136, 0
      %s139 = sadd.s32 %s138, 1
      %s140 = scalar_select %p137, %s138, %s139
      %p143 = pneg %p137
      %p144 = scmp.eq.s32.totalorder %s13, 2
      %p145 = por %p143, %p144
      %p146 = scmp.ne.s32.totalorder %s138, %s141
      %p147 = scmp.eq.s32.totalorder %s13, 0
      %p148 = por %p146, %p147
      %p149 = scmp.ne.s32.totalorder %s138, %s141
      %p150 = scmp.eq.s32.totalorder %s18, 2
      %p151 = por %p149, %p150
      %p152 = scmp.ne.s32.totalorder %s141, %s142
      %p153 = scmp.eq.s32.totalorder %s18, 0
      %p154 = por %p152, %p153
      %p155 = scmp.ne.s32.totalorder %s141, %s142
      %p156 = scmp.eq.s32.totalorder %s19, 2
      %p157 = por %p155, %p156
      %p159 = scmp.ne.s32.totalorder %s142, %s158
      %p160 = scmp.eq.s32.totalorder %s19, 0
      %p161 = por %p159, %p160
      %s162 = ssub.s32 %s13, %s20
      %p163 = scmp.eq.s32.totalorder %s162, 0
      %s165 = sadd.s32 %s164, 1
      %s166 = scalar_select %p163, %s164, %s165
      %p169 = pneg %p163
      %p170 = scmp.eq.s32.totalorder %s13, 2
      %p171 = por %p169, %p170
      %p172 = scmp.ne.s32.totalorder %s164, %s167
      %p173 = scmp.eq.s32.totalorder %s13, 0
      %p174 = por %p172, %p173
      %p175 = scmp.ne.s32.totalorder %s164, %s167
      %p176 = scmp.eq.s32.totalorder %s18, 2
      %p177 = por %p175, %p176
      %p178 = scmp.ne.s32.totalorder %s167, %s168
      %p179 = scmp.eq.s32.totalorder %s18, 0
      %p180 = por %p178, %p179
      %p181 = scmp.ne.s32.totalorder %s167, %s168
      %p182 = scmp.eq.s32.totalorder %s19, 2
      %p183 = por %p181, %p182
      %p185 = scmp.ne.s32.totalorder %s168, %s184
      %p186 = scmp.eq.s32.totalorder %s19, 0
      %p187 = por %p185, %p186
      %p188 = scmp.le.s32.totalorder 1, %s13
      %p189 = scmp.lt.s32.totalorder %s13, 4
      %p190 = pnand %p188, %p189
      %p191 = pneg %p190
      // Predicated region
      $region9: #{conv_bottle_forward.6} parent=5 // pred_check
        _
      $region10: #{conv_bottle_forward.6} parent=5 // pred_check_branch
        %193 = sbr.rel (%p190) target = $region12
      $region11: #{conv_bottle_forward.6} parent=5 // pred_region
        %s194 = ssub.s32 %s13, 1
        // Predicated region
        $region13: #{conv_bottle_forward.6} parent=11 // pred_check
          %p195 = pneg %p60
        $region14: #{conv_bottle_forward.6} parent=11 // pred_check_branch
          %197 = sbr.rel (%p195) target = $region16
        $region15: #{conv_bottle_forward.6} parent=11 // pred_region
          _
        $region16: #{conv_bottle_forward.6} parent=11 // pred_fallthru
          _
        // Predicated region
        $region17: #{conv_bottle_forward.6} parent=11 // pred_check
          %p198 = pneg %p81
        $region18: #{conv_bottle_forward.6} parent=11 // pred_check_branch
          %200 = sbr.rel (%p198) target = $region20
        $region19: #{conv_bottle_forward.6} parent=11 // pred_region
          _
        $region20: #{conv_bottle_forward.6} parent=11 // pred_fallthru
          _
        // Predicated region
        $region21: #{conv_bottle_forward.6} parent=11 // pred_check
          %p201 = pneg %p102
        $region22: #{conv_bottle_forward.6} parent=11 // pred_check_branch
          %203 = sbr.rel (%p201) target = $region24
        $region23: #{conv_bottle_forward.6} parent=11 // pred_region
          _
        $region24: #{conv_bottle_forward.6} parent=11 // pred_fallthru
          _
      $region12: #{conv_bottle_forward.6} parent=5 // pred_fallthru
        _
      %p204 = scmp.lt.s32.totalorder %s13, 3
      // Predicated region
      $region25: #{conv_bottle_forward.6} parent=5 // pred_check
        %p205 = pneg %p204
      $region26: #{conv_bottle_forward.6} parent=5 // pred_check_branch
        %207 = sbr.rel (%p205) target = $region28
      $region27: #{conv_bottle_forward.6} parent=5 // pred_region
        // Predicated region
        $region29: #{conv_bottle_forward.6} parent=27 // pred_check
          %p208 = pneg %p33
        $region30: #{conv_bottle_forward.6} parent=27 // pred_check_branch
          %210 = sbr.rel (%p208) target = $region32
        $region31: #{conv_bottle_forward.6} parent=27 // pred_region
          %s211 = smul.u32 24, %s13
          %s212 = ssub.s32 64, %s211
          %p213 = scmp.lt.s32.totalorder %s212, 24
          %s214 = scalar_select %p213, %s212, 24
          %s215 = smul.u32 4, %s214
          %p216 = scmp.lt.s32.totalorder %s211, 63
          %s217 = scalar_select %p216, %s211, 63
          %s218 = smul.addr %s217, 4
          %s219 = scalar_lea.vmem %s0, %s218
          %s220 = smul.u32 24, %s13
          %s221 = ssub.s32 64, %s220
          %p222 = scmp.lt.s32.totalorder %s221, 24
          %s223 = scalar_select %p222, %s221, 24
          %s224 = smul.u32 4, %s223
        $region32: #{conv_bottle_forward.6} parent=27 // pred_fallthru
          _
      $region28: #{conv_bottle_forward.6} parent=5 // pred_fallthru
        _
      %p225 = scmp.le.s32.totalorder 1, %s13
      %p226 = scmp.lt.s32.totalorder %s13, 4
      %p227 = pnand %p225, %p226
      %p228 = pneg %p227
      // Predicated region
      $region33: #{conv_bottle_forward.6} parent=5 // pred_check
        _
      $region34: #{conv_bottle_forward.6} parent=5 // pred_check_branch
        %230 = sbr.rel (%p227) target = $region36
      $region35: #{conv_bottle_forward.6} parent=5 // pred_region
        %s231 = ssub.s32 %s13, 1
        %s232 = smul.u32 24, %s18
        %s233 = ssub.s32 64, %s232
        %p234 = scmp.lt.s32.totalorder %s233, 24
        %s235 = scalar_select %p234, %s233, 24
        %s236 = smul.u32 4, %s235
        %p237 = scmp.lt.s32.totalorder %s232, 63
        %s238 = scalar_select %p237, %s232, 63
        %s239 = smul.addr %s238, 4
        %s240 = scalar_lea.vmem %s0, %s239
        %p241 = pneg %p39
        %p242 = pneg %p36
        %p243 = pneg %p60
        %p244 = pneg %p57
        %p245 = pneg %p81
        %p246 = pneg %p78
        %p247 = pneg %p102
        %p248 = pneg %p99
        %p249 = pneg %p128
        %p250 = pneg %p125
        %s251 = sand.u32 %s115, 1
        %s252 = sand.u32 %s115, 1
        %s253 = smul.addr %s252, 96
        %s254 = scalar_lea.vmem [#allocation2], %s253
        %p255 = pneg %p154
        %p256 = pneg %p151
        %p257 = scmp.lt.s32.totalorder %s18, 2
        %s258 = scalar_select %p257, %s18, 2
        %s259 = scalar_lea.vmem %s5, %s258
        %p260 = pneg %p180
        %p261 = pneg %p177
        %p262 = scmp.lt.s32.totalorder %s18, 2
        %s263 = scalar_select %p262, %s18, 2
        %s264 = scalar_lea.vmem %s6, %s263
        %s265 = smul.u32 24, %s18
        %s266 = ssub.s32 64, %s265
        %p267 = scmp.lt.s32.totalorder %s266, 24
        %s268 = scalar_select %p267, %s266, 24
        %s269 = smul.u32 4, %s268
        %p270 = scmp.lt.s32.totalorder %s265, 63
        %s271 = scalar_select %p270, %s265, 63
        %s272 = smul.addr %s271, 4
        %s273 = scalar_lea.vmem %s0, %s272
        %s274 = smul.u32 24, %s18
        %s275 = ssub.s32 64, %s274
        %p276 = scmp.lt.s32.totalorder %s275, 24
        %s277 = scalar_select %p276, %s275, 24
        %s278 = smul.u32 4, %s277
        %s279 = smul.u32 24, %s18
        %s280 = ssub.s32 64, %s279
        %p281 = scmp.lt.s32.totalorder %s280, 24
        %s282 = scalar_select %p281, %s280, 24
        %s283 = smul.u32 4, %s282
        %p284 = scmp.lt.s32.totalorder %s18, 2
        %s285 = scalar_select %p284, %s18, 2
        %s286 = scalar_lea.vmem %s5, %s285
        %p287 = scmp.lt.s32.totalorder %s18, 2
        %s288 = scalar_select %p287, %s18, 2
        %s289 = scalar_lea.vmem %s6, %s288
        %v290 = vlaneseq
        %v291 = vshrl.u32 %v290, 7
        %v292 = vadd.s32 %v291, 8
        %v293 = vadd.s32 %v291, 16
        %v294 = vadd.s32 %v291, 24
        %v295 = vadd.s32 %v291, 32
        %v296 = vadd.s32 %v291, 40
        %v297 = vadd.s32 %v291, 48
        %v298 = vadd.s32 %v291, 56
        %v299 = vadd.s32 %v291, 64
        %v300 = vadd.s32 %v291, 72
        %v301 = vadd.s32 %v291, 80
        %v302 = vadd.s32 %v291, 88
        %v303 = vadd.s32 %v291, 96
        %v304 = vadd.s32 %v291, 104
        %v305 = vadd.s32 %v291, 112
        %v306 = vadd.s32 %v291, 120
        %v307 = vadd.s32 %v291, 128
        %v308 = vadd.s32 %v291, 136
        %v309 = vadd.s32 %v291, 144
        %v310 = vadd.s32 %v291, 152
        %v311 = vadd.s32 %v291, 160
        %v312 = vadd.s32 %v291, 168
        %v313 = vadd.s32 %v291, 176
        %v314 = vadd.s32 %v291, 184
        %s315 = smul.u32 %s18, 192
        %v316 = vstv %s315
        %v317 = vadd.s32 %v291, %v316
        %v318 = vadd.s32 %v292, %v316
        %v319 = vadd.s32 %v293, %v316
        %v320 = vadd.s32 %v294, %v316
        %v321 = vadd.s32 %v295, %v316
        %v322 = vadd.s32 %v296, %v316
        %v323 = vadd.s32 %v297, %v316
        %v324 = vadd.s32 %v298, %v316
        %v325 = vadd.s32 %v299, %v316
        %v326 = vadd.s32 %v300, %v316
        %v327 = vadd.s32 %v301, %v316
        %v328 = vadd.s32 %v302, %v316
        %v329 = vadd.s32 %v303, %v316
        %v330 = vadd.s32 %v304, %v316
        %v331 = vadd.s32 %v305, %v316
        %v332 = vadd.s32 %v306, %v316
        %v333 = vadd.s32 %v307, %v316
        %v334 = vadd.s32 %v308, %v316
        %v335 = vadd.s32 %v309, %v316
        %v336 = vadd.s32 %v310, %v316
        %v337 = vadd.s32 %v311, %v316
        %v338 = vadd.s32 %v312, %v316
        %v339 = vadd.s32 %v313, %v316
        %v340 = vadd.s32 %v314, %v316
        %vm341 = vcmp.lt.s32.totalorder %v317, 512
        %vm342 = vcmp.lt.s32.totalorder %v318, 512
        %vm343 = vcmp.lt.s32.totalorder %v319, 512
        %vm344 = vcmp.lt.s32.totalorder %v320, 512
        %vm345 = vcmp.lt.s32.totalorder %v321, 512
        %vm346 = vcmp.lt.s32.totalorder %v322, 512
        %vm347 = vcmp.lt.s32.totalorder %v323, 512
        %vm348 = vcmp.lt.s32.totalorder %v324, 512
        %vm349 = vcmp.lt.s32.totalorder %v325, 512
        %vm350 = vcmp.lt.s32.totalorder %v326, 512
        %vm351 = vcmp.lt.s32.totalorder %v327, 512
        %vm352 = vcmp.lt.s32.totalorder %v328, 512
        %vm353 = vcmp.lt.s32.totalorder %v329, 512
        %vm354 = vcmp.lt.s32.totalorder %v330, 512
        %vm355 = vcmp.lt.s32.totalorder %v331, 512
        %vm356 = vcmp.lt.s32.totalorder %v332, 512
        %vm357 = vcmp.lt.s32.totalorder %v333, 512
        %vm358 = vcmp.lt.s32.totalorder %v334, 512
        %vm359 = vcmp.lt.s32.totalorder %v335, 512
        %vm360 = vcmp.lt.s32.totalorder %v336, 512
        %vm361 = vcmp.lt.s32.totalorder %v337, 512
        %vm362 = vcmp.lt.s32.totalorder %v338, 512
        %vm363 = vcmp.lt.s32.totalorder %v339, 512
        %vm364 = vcmp.lt.s32.totalorder %v340, 512
        %v365 = vld [vmem:[%s273] sm:$0xf]
        %v366 = vld [vmem:[%s273 + $0x4] sm:$0xf]
        %v367 = vld [vmem:[%s273 + $0x8] sm:$0xf]
        %v368 = vld [vmem:[%s273 + $0xc] sm:$0xf]
        %v369 = vld [vmem:[%s273 + $0x10] sm:$0xf]
        %v370 = vld [vmem:[%s273 + $0x14] sm:$0xf]
        %v371 = vld [vmem:[%s273 + $0x18] sm:$0xf]
        %v372 = vld [vmem:[%s273 + $0x1c] sm:$0xf]
        %v373 = vld [vmem:[%s273 + $0x20] sm:$0xf]
        %v374 = vld [vmem:[%s273 + $0x24] sm:$0xf]
        %v375 = vld [vmem:[%s273 + $0x28] sm:$0xf]
        %v376 = vld [vmem:[%s273 + $0x2c] sm:$0xf]
        %v377 = vld [vmem:[%s273 + $0x30] sm:$0xf]
        %v378 = vld [vmem:[%s273 + $0x34] sm:$0xf]
        %v379 = vld [vmem:[%s273 + $0x38] sm:$0xf]
        %v380 = vld [vmem:[%s273 + $0x3c] sm:$0xf]
        %v381 = vld [vmem:[%s273 + $0x40] sm:$0xf]
        %v382 = vld [vmem:[%s273 + $0x44] sm:$0xf]
        %v383 = vld [vmem:[%s273 + $0x48] sm:$0xf]
        %v384 = vld [vmem:[%s273 + $0x4c] sm:$0xf]
        %v385 = vld [vmem:[%s273 + $0x50] sm:$0xf]
        %v386 = vld [vmem:[%s273 + $0x54] sm:$0xf]
        %v387 = vld [vmem:[%s273 + $0x58] sm:$0xf]
        %v388 = vld [vmem:[%s273 + $0x5c] sm:$0xf]
        %v389 = vunpack.c.l.bf16 %v365
        %v390 = vunpack.c.l.bf16 %v366
        %v391 = vunpack.c.l.bf16 %v367
        %v392 = vunpack.c.l.bf16 %v368
        %v393 = vunpack.c.l.bf16 %v369
        %v394 = vunpack.c.l.bf16 %v370
        %v395 = vunpack.c.l.bf16 %v371
        %v396 = vunpack.c.l.bf16 %v372
        %v397 = vunpack.c.l.bf16 %v373
        %v398 = vunpack.c.l.bf16 %v374
        %v399 = vunpack.c.l.bf16 %v375
        %v400 = vunpack.c.l.bf16 %v376
        %v401 = vunpack.c.l.bf16 %v377
        %v402 = vunpack.c.l.bf16 %v378
        %v403 = vunpack.c.l.bf16 %v379
        %v404 = vunpack.c.l.bf16 %v380
        %v405 = vunpack.c.l.bf16 %v381
        %v406 = vunpack.c.l.bf16 %v382
        %v407 = vunpack.c.l.bf16 %v383
        %v408 = vunpack.c.l.bf16 %v384
        %v409 = vunpack.c.l.bf16 %v385
        %v410 = vunpack.c.l.bf16 %v386
        %v411 = vunpack.c.l.bf16 %v387
        %v412 = vunpack.c.l.bf16 %v388
        %v413 = vld [vmem:[%s1] sm:$0x1]
        %v415 = vperm.slane %v413, 0
        %v417 = vmul.f32 %v389, %v415
        %v418 = vmul.f32 %v390, %v415
        %v419 = vmul.f32 %v391, %v415
        %v420 = vmul.f32 %v392, %v415
        %v421 = vmul.f32 %v393, %v415
        %v422 = vmul.f32 %v394, %v415
        %v423 = vmul.f32 %v395, %v415
        %v424 = vmul.f32 %v396, %v415
        %v425 = vmul.f32 %v397, %v415
        %v426 = vmul.f32 %v398, %v415
        %v427 = vmul.f32 %v399, %v415
        %v428 = vmul.f32 %v400, %v415
        %v429 = vmul.f32 %v401, %v415
        %v430 = vmul.f32 %v402, %v415
        %v431 = vmul.f32 %v403, %v415
        %v432 = vmul.f32 %v404, %v415
        %v433 = vmul.f32 %v405, %v415
        %v434 = vmul.f32 %v406, %v415
        %v435 = vmul.f32 %v407, %v415
        %v436 = vmul.f32 %v408, %v415
        %v437 = vmul.f32 %v409, %v415
        %v438 = vmul.f32 %v410, %v415
        %v439 = vmul.f32 %v411, %v415
        %v440 = vmul.f32 %v412, %v415
        %v441 = vld [vmem:[%s2] sm:$0x1]
        %v443 = vperm.slane %v441, 0
        %v445 = vadd.f32 %v417, %v443
        %v446 = vadd.f32 %v418, %v443
        %v447 = vadd.f32 %v419, %v443
        %v448 = vadd.f32 %v420, %v443
        %v449 = vadd.f32 %v421, %v443
        %v450 = vadd.f32 %v422, %v443
        %v451 = vadd.f32 %v423, %v443
        %v452 = vadd.f32 %v424, %v443
        %v453 = vadd.f32 %v425, %v443
        %v454 = vadd.f32 %v426, %v443
        %v455 = vadd.f32 %v427, %v443
        %v456 = vadd.f32 %v428, %v443
        %v457 = vadd.f32 %v429, %v443
        %v458 = vadd.f32 %v430, %v443
        %v459 = vadd.f32 %v431, %v443
        %v460 = vadd.f32 %v432, %v443
        %v461 = vadd.f32 %v433, %v443
        %v462 = vadd.f32 %v434, %v443
        %v463 = vadd.f32 %v435, %v443
        %v464 = vadd.f32 %v436, %v443
        %v465 = vadd.f32 %v437, %v443
        %v466 = vadd.f32 %v438, %v443
        %v467 = vadd.f32 %v439, %v443
        %v468 = vadd.f32 %v440, %v443
        %v469 = vmax.f32 %v445, 0.0
        %v470 = vmax.f32 %v446, 0.0
        %v471 = vmax.f32 %v447, 0.0
        %v472 = vmax.f32 %v448, 0.0
        %v473 = vmax.f32 %v449, 0.0
        %v474 = vmax.f32 %v450, 0.0
        %v475 = vmax.f32 %v451, 0.0
        %v476 = vmax.f32 %v452, 0.0
        %v477 = vmax.f32 %v453, 0.0
        %v478 = vmax.f32 %v454, 0.0
        %v479 = vmax.f32 %v455, 0.0
        %v480 = vmax.f32 %v456, 0.0
        %v481 = vmax.f32 %v457, 0.0
        %v482 = vmax.f32 %v458, 0.0
        %v483 = vmax.f32 %v459, 0.0
        %v484 = vmax.f32 %v460, 0.0
        %v485 = vmax.f32 %v461, 0.0
        %v486 = vmax.f32 %v462, 0.0
        %v487 = vmax.f32 %v463, 0.0
        %v488 = vmax.f32 %v464, 0.0
        %v489 = vmax.f32 %v465, 0.0
        %v490 = vmax.f32 %v466, 0.0
        %v491 = vmax.f32 %v467, 0.0
        %v492 = vmax.f32 %v468, 0.0
        %v493 = vsel %vm341, 1, 0
        %v494 = vsel %vm342, 1, 0
        %v495 = vsel %vm343, 1, 0
        %v496 = vsel %vm344, 1, 0
        %v497 = vsel %vm345, 1, 0
        %v498 = vsel %vm346, 1, 0
        %v499 = vsel %vm347, 1, 0
        %v500 = vsel %vm348, 1, 0
        %v501 = vsel %vm349, 1, 0
        %v502 = vsel %vm350, 1, 0
        %v503 = vsel %vm351, 1, 0
        %v504 = vsel %vm352, 1, 0
        %v505 = vsel %vm353, 1, 0
        %v506 = vsel %vm354, 1, 0
        %v507 = vsel %vm355, 1, 0
        %v508 = vsel %vm356, 1, 0
        %v509 = vsel %vm357, 1, 0
        %v510 = vsel %vm358, 1, 0
        %v511 = vsel %vm359, 1, 0
        %v512 = vsel %vm360, 1, 0
        %v513 = vsel %vm361, 1, 0
        %v514 = vsel %vm362, 1, 0
        %v515 = vsel %vm363, 1, 0
        %v516 = vsel %vm364, 1, 0
        %vm517 = vcmp.eq.s32.totalorder %v493, 1
        %vm518 = vcmp.eq.s32.totalorder %v494, 1
        %vm519 = vcmp.eq.s32.totalorder %v495, 1
        %vm520 = vcmp.eq.s32.totalorder %v496, 1
        %vm521 = vcmp.eq.s32.totalorder %v497, 1
        %vm522 = vcmp.eq.s32.totalorder %v498, 1
        %vm523 = vcmp.eq.s32.totalorder %v499, 1
        %vm524 = vcmp.eq.s32.totalorder %v500, 1
        %vm525 = vcmp.eq.s32.totalorder %v501, 1
        %vm526 = vcmp.eq.s32.totalorder %v502, 1
        %vm527 = vcmp.eq.s32.totalorder %v503, 1
        %vm528 = vcmp.eq.s32.totalorder %v504, 1
        %vm529 = vcmp.eq.s32.totalorder %v505, 1
        %vm530 = vcmp.eq.s32.totalorder %v506, 1
        %vm531 = vcmp.eq.s32.totalorder %v507, 1
        %vm532 = vcmp.eq.s32.totalorder %v508, 1
        %vm533 = vcmp.eq.s32.totalorder %v509, 1
        %vm534 = vcmp.eq.s32.totalorder %v510, 1
        %vm535 = vcmp.eq.s32.totalorder %v511, 1
        %vm536 = vcmp.eq.s32.totalorder %v512, 1
        %vm537 = vcmp.eq.s32.totalorder %v513, 1
        %vm538 = vcmp.eq.s32.totalorder %v514, 1
        %vm539 = vcmp.eq.s32.totalorder %v515, 1
        %vm540 = vcmp.eq.s32.totalorder %v516, 1
        %v541 = vsel %vm517, %v469, 0.0
        %v542 = vsel %vm518, %v470, 0.0
        %v543 = vsel %vm519, %v471, 0.0
        %v544 = vsel %vm520, %v472, 0.0
        %v545 = vsel %vm521, %v473, 0.0
        %v546 = vsel %vm522, %v474, 0.0
        %v547 = vsel %vm523, %v475, 0.0
        %v548 = vsel %vm524, %v476, 0.0
        %v549 = vsel %vm525, %v477, 0.0
        %v550 = vsel %vm526, %v478, 0.0
        %v551 = vsel %vm527, %v479, 0.0
        %v552 = vsel %vm528, %v480, 0.0
        %v553 = vsel %vm529, %v481, 0.0
        %v554 = vsel %vm530, %v482, 0.0
        %v555 = vsel %vm531, %v483, 0.0
        %v556 = vsel %vm532, %v484, 0.0
        %v557 = vsel %vm533, %v485, 0.0
        %v558 = vsel %vm534, %v486, 0.0
        %v559 = vsel %vm535, %v487, 0.0
        %v560 = vsel %vm536, %v488, 0.0
        %v561 = vsel %vm537, %v489, 0.0
        %v562 = vsel %vm538, %v490, 0.0
        %v563 = vsel %vm539, %v491, 0.0
        %v564 = vsel %vm540, %v492, 0.0
        %v565 = vpack.c.bf16 %v542, %v541
        %v566 = vpack.c.bf16 %v544, %v543
        %v567 = vpack.c.bf16 %v546, %v545
        %v568 = vpack.c.bf16 %v548, %v547
        %v569 = vpack.c.bf16 %v550, %v549
        %v570 = vpack.c.bf16 %v552, %v551
        %v571 = vpack.c.bf16 %v554, %v553
        %v572 = vpack.c.bf16 %v556, %v555
        %v573 = vpack.c.bf16 %v558, %v557
        %v574 = vpack.c.bf16 %v560, %v559
        %v575 = vpack.c.bf16 %v562, %v561
        %v576 = vpack.c.bf16 %v564, %v563
        %v577 = vld [vmem:[%s3] sm:$0xf]
        %v578 = vld [vmem:[%s3 + $0x4] sm:$0xf]
        %v579 = vld [vmem:[%s3 + $0x8] sm:$0xf]
        %v580 = vld [vmem:[%s3 + $0xc] sm:$0xf]
        %v581 = vld [vmem:[%s3 + $0x10] sm:$0xf]
        %v582 = vld [vmem:[%s3 + $0x14] sm:$0xf]
        %v583 = vld [vmem:[%s3 + $0x18] sm:$0xf]
        %v584 = vld [vmem:[%s3 + $0x1c] sm:$0xf]
        %v585 = vld [vmem:[%s3 + $0x20] sm:$0xf]
        %v586 = vld [vmem:[%s3 + $0x24] sm:$0xf]
        %v587 = vld [vmem:[%s3 + $0x28] sm:$0xf]
        %v588 = vld [vmem:[%s3 + $0x2c] sm:$0xf]
        %v589 = vld [vmem:[%s3 + $0x30] sm:$0xf]
        %v590 = vld [vmem:[%s3 + $0x34] sm:$0xf]
        %v591 = vld [vmem:[%s3 + $0x38] sm:$0xf]
        %v592 = vld [vmem:[%s3 + $0x3c] sm:$0xf]
        %v609 = vunpack.c.l.b16 %v577
        %v610 = vunpack.c.l.b16 %v578
        %v611 = vunpack.c.l.b16 %v579
        %v612 = vunpack.c.l.b16 %v580
        %v613 = vunpack.c.l.b16 %v581
        %v614 = vunpack.c.l.b16 %v582
        %v615 = vunpack.c.l.b16 %v583
        %v616 = vunpack.c.l.b16 %v584
        %v617 = vunpack.c.l.b16 %v585
        %v618 = vunpack.c.l.b16 %v586
        %v619 = vunpack.c.l.b16 %v587
        %v620 = vunpack.c.l.b16 %v588
        %v621 = vunpack.c.l.b16 %v589
        %v622 = vunpack.c.l.b16 %v590
        %v623 = vunpack.c.l.b16 %v591
        %v624 = vunpack.c.l.b16 %v592
        %v625 = vpack.c.b16 %v610, %v609
        %v626 = vpack.c.b16 %v612, %v611
        %v627 = vpack.c.b16 %v614, %v613
        %v628 = vpack.c.b16 %v616, %v615
        %v629 = vpack.c.b16 %v618, %v617
        %v630 = vpack.c.b16 %v620, %v619
        %v631 = vpack.c.b16 %v622, %v621
        %v632 = vpack.c.b16 %v624, %v623
        %641 = vmatpush.bf16.msra.mxu0 %v632
        %642 = vmatpush.bf16.msra.mxu0 %v631
        %643 = vmatpush.bf16.msra.mxu0 %v630
        %644 = vmatpush.bf16.msra.mxu0 %v629
        %645 = vmatpush.bf16.msra.mxu0 %v628
        %646 = vmatpush.bf16.msra.mxu0 %v627
        %647 = vmatpush.bf16.msra.mxu0 %v626
        %648 = vmatpush.bf16.msra.mxu0 %v625
        %649 = vmatmul.bf16.gmra.mxu0 %v565
        %v650 = vpop.f32.mrf.mxu0
        %v651 = vadd.f32 0.0, %v650
        %v652 = vpop.f32.mrf.mxu0
        %v653 = vadd.f32 0.0, %v652
        %654 = vmatmul.bf16.gmra.mxu0 %v566
        %v655 = vpop.f32.mrf.mxu0
        %v656 = vadd.f32 0.0, %v655
        %v657 = vpop.f32.mrf.mxu0
        %v658 = vadd.f32 0.0, %v657
        %659 = vmatmul.bf16.gmra.mxu0 %v567
        %v660 = vpop.f32.mrf.mxu0
        %v661 = vadd.f32 0.0, %v660
        %v662 = vpop.f32.mrf.mxu0
        %v663 = vadd.f32 0.0, %v662
        %664 = vmatmul.bf16.gmra.mxu0 %v568
        %v665 = vpop.f32.mrf.mxu0
        %v666 = vadd.f32 0.0, %v665
        %v667 = vpop.f32.mrf.mxu0
        %v668 = vadd.f32 0.0, %v667
        %669 = vmatmul.bf16.gmra.mxu0 %v569
        %v670 = vpop.f32.mrf.mxu0
        %v671 = vadd.f32 0.0, %v670
        %v672 = vpop.f32.mrf.mxu0
        %v673 = vadd.f32 0.0, %v672
        %674 = vmatmul.bf16.gmra.mxu0 %v570
        %v675 = vpop.f32.mrf.mxu0
        %v676 = vadd.f32 0.0, %v675
        %v677 = vpop.f32.mrf.mxu0
        %v678 = vadd.f32 0.0, %v677
        %679 = vmatmul.bf16.gmra.mxu0 %v571
        %v680 = vpop.f32.mrf.mxu0
        %v681 = vadd.f32 0.0, %v680
        %v682 = vpop.f32.mrf.mxu0
        %v683 = vadd.f32 0.0, %v682
        %684 = vmatmul.bf16.gmra.mxu0 %v572
        %v685 = vpop.f32.mrf.mxu0
        %v686 = vadd.f32 0.0, %v685
        %v687 = vpop.f32.mrf.mxu0
        %v688 = vadd.f32 0.0, %v687
        %689 = vmatmul.bf16.gmra.mxu0 %v573
        %v690 = vpop.f32.mrf.mxu0
        %v691 = vadd.f32 0.0, %v690
        %v692 = vpop.f32.mrf.mxu0
        %v693 = vadd.f32 0.0, %v692
        %694 = vmatmul.bf16.gmra.mxu0 %v574
        %v695 = vpop.f32.mrf.mxu0
        %v696 = vadd.f32 0.0, %v695
        %v697 = vpop.f32.mrf.mxu0
        %v698 = vadd.f32 0.0, %v697
        %699 = vmatmul.bf16.gmra.mxu0 %v575
        %v700 = vpop.f32.mrf.mxu0
        %v701 = vadd.f32 0.0, %v700
        %v702 = vpop.f32.mrf.mxu0
        %v703 = vadd.f32 0.0, %v702
        %704 = vmatmul.bf16.gmra.mxu0 %v576
        %v705 = vpop.f32.mrf.mxu0
        %v706 = vadd.f32 0.0, %v705
        %v707 = vpop.f32.mrf.mxu0
        %v708 = vadd.f32 0.0, %v707
        %709 = vdwg.mxu0
        %v710 = vpack.c.bf16 %v651, %v651
        %v711 = vpack.c.bf16 %v653, %v653
        %v712 = vpack.c.bf16 %v656, %v656
        %v713 = vpack.c.bf16 %v658, %v658
        %v714 = vpack.c.bf16 %v661, %v661
        %v715 = vpack.c.bf16 %v663, %v663
        %v716 = vpack.c.bf16 %v666, %v666
        %v717 = vpack.c.bf16 %v668, %v668
        %v718 = vpack.c.bf16 %v671, %v671
        %v719 = vpack.c.bf16 %v673, %v673
        %v720 = vpack.c.bf16 %v676, %v676
        %v721 = vpack.c.bf16 %v678, %v678
        %v722 = vpack.c.bf16 %v681, %v681
        %v723 = vpack.c.bf16 %v683, %v683
        %v724 = vpack.c.bf16 %v686, %v686
        %v725 = vpack.c.bf16 %v688, %v688
        %v726 = vpack.c.bf16 %v691, %v691
        %v727 = vpack.c.bf16 %v693, %v693
        %v728 = vpack.c.bf16 %v696, %v696
        %v729 = vpack.c.bf16 %v698, %v698
        %v730 = vpack.c.bf16 %v701, %v701
        %v731 = vpack.c.bf16 %v703, %v703
        %v732 = vpack.c.bf16 %v706, %v706
        %v733 = vpack.c.bf16 %v708, %v708
        %734 = vst [vmem:[%s254] sm:$0xf] %v710
        %735 = vst [vmem:[%s254 + $0x4] sm:$0xf] %v711
        %736 = vst [vmem:[%s254 + $0x8] sm:$0xf] %v712
        %737 = vst [vmem:[%s254 + $0xc] sm:$0xf] %v713
        %738 = vst [vmem:[%s254 + $0x10] sm:$0xf] %v714
        %739 = vst [vmem:[%s254 + $0x14] sm:$0xf] %v715
        %740 = vst [vmem:[%s254 + $0x18] sm:$0xf] %v716
        %741 = vst [vmem:[%s254 + $0x1c] sm:$0xf] %v717
        %742 = vst [vmem:[%s254 + $0x20] sm:$0xf] %v718
        %743 = vst [vmem:[%s254 + $0x24] sm:$0xf] %v719
        %744 = vst [vmem:[%s254 + $0x28] sm:$0xf] %v720
        %745 = vst [vmem:[%s254 + $0x2c] sm:$0xf] %v721
        %746 = vst [vmem:[%s254 + $0x30] sm:$0xf] %v722
        %747 = vst [vmem:[%s254 + $0x34] sm:$0xf] %v723
        %748 = vst [vmem:[%s254 + $0x38] sm:$0xf] %v724
        %749 = vst [vmem:[%s254 + $0x3c] sm:$0xf] %v725
        %750 = vst [vmem:[%s254 + $0x40] sm:$0xf] %v726
        %751 = vst [vmem:[%s254 + $0x44] sm:$0xf] %v727
        %752 = vst [vmem:[%s254 + $0x48] sm:$0xf] %v728
        %753 = vst [vmem:[%s254 + $0x4c] sm:$0xf] %v729
        %754 = vst [vmem:[%s254 + $0x50] sm:$0xf] %v730
        %755 = vst [vmem:[%s254 + $0x54] sm:$0xf] %v731
        %756 = vst [vmem:[%s254 + $0x58] sm:$0xf] %v732
        %757 = vst [vmem:[%s254 + $0x5c] sm:$0xf] %v733
        %v758 = vadd.f32 %v651, %v653
        %v759 = vadd.f32 %v758, %v656
        %v760 = vadd.f32 %v759, %v658
        %v761 = vadd.f32 %v760, %v661
        %v762 = vadd.f32 %v761, %v663
        %v763 = vadd.f32 %v762, %v666
        %v764 = vadd.f32 %v763, %v668
        %v765 = vadd.f32 %v764, %v671
        %v766 = vadd.f32 %v765, %v673
        %v767 = vadd.f32 %v766, %v676
        %v768 = vadd.f32 %v767, %v678
        %v769 = vadd.f32 %v768, %v681
        %v770 = vadd.f32 %v769, %v683
        %v771 = vadd.f32 %v770, %v686
        %v772 = vadd.f32 %v771, %v688
        %v773 = vadd.f32 %v772, %v691
        %v774 = vadd.f32 %v773, %v693
        %v775 = vadd.f32 %v774, %v696
        %v776 = vadd.f32 %v775, %v698
        %v777 = vadd.f32 %v776, %v701
        %v778 = vadd.f32 %v777, %v703
        %v779 = vadd.f32 %v778, %v706
        %v780 = vadd.f32 %v779, %v708
        %v781 = vrot.slane %v780, 4
        %v782 = vadd.f32 %v780, %v781
        %v783 = vrot.slane %v782, 2
        %v784 = vadd.f32 %v782, %v783
        %v785 = vrot.slane %v784, 1
        %v786 = vadd.f32 %v784, %v785
        %787 = vst [vmem:[%s286] sm:$0x1] %v786
        %v788 = vmul.f32 %v651, %v651
        %v789 = vmul.f32 %v653, %v653
        %v790 = vmul.f32 %v656, %v656
        %v791 = vmul.f32 %v658, %v658
        %v792 = vmul.f32 %v661, %v661
        %v793 = vmul.f32 %v663, %v663
        %v794 = vmul.f32 %v666, %v666
        %v795 = vmul.f32 %v668, %v668
        %v796 = vmul.f32 %v671, %v671
        %v797 = vmul.f32 %v673, %v673
        %v798 = vmul.f32 %v676, %v676
        %v799 = vmul.f32 %v678, %v678
        %v800 = vmul.f32 %v681, %v681
        %v801 = vmul.f32 %v683, %v683
        %v802 = vmul.f32 %v686, %v686
        %v803 = vmul.f32 %v688, %v688
        %v804 = vmul.f32 %v691, %v691
        %v805 = vmul.f32 %v693, %v693
        %v806 = vmul.f32 %v696, %v696
        %v807 = vmul.f32 %v698, %v698
        %v808 = vmul.f32 %v701, %v701
        %v809 = vmul.f32 %v703, %v703
        %v810 = vmul.f32 %v706, %v706
        %v811 = vmul.f32 %v708, %v708
        %v812 = vadd.f32 %v788, %v789
        %v813 = vadd.f32 %v812, %v790
        %v814 = vadd.f32 %v813, %v791
        %v815 = vadd.f32 %v814, %v792
        %v816 = vadd.f32 %v815, %v793
        %v817 = vadd.f32 %v816, %v794
        %v818 = vadd.f32 %v817, %v795
        %v819 = vadd.f32 %v818, %v796
        %v820 = vadd.f32 %v819, %v797
        %v821 = vadd.f32 %v820, %v798
        %v822 = vadd.f32 %v821, %v799
        %v823 = vadd.f32 %v822, %v800
        %v824 = vadd.f32 %v823, %v801
        %v825 = vadd.f32 %v824, %v802
        %v826 = vadd.f32 %v825, %v803
        %v827 = vadd.f32 %v826, %v804
        %v828 = vadd.f32 %v827, %v805
        %v829 = vadd.f32 %v828, %v806
        %v830 = vadd.f32 %v829, %v807
        %v831 = vadd.f32 %v830, %v808
        %v832 = vadd.f32 %v831, %v809
        %v833 = vadd.f32 %v832, %v810
        %v834 = vadd.f32 %v833, %v811
        %v835 = vrot.slane %v834, 4
        %v836 = vadd.f32 %v834, %v835
        %v837 = vrot.slane %v836, 2
        %v838 = vadd.f32 %v836, %v837
        %v839 = vrot.slane %v838, 1
        %v840 = vadd.f32 %v838, %v839
        %841 = vst [vmem:[%s289] sm:$0x1] %v840
        %s842 = sand.u32 %s115, 1
        %s843 = sand.u32 %s115, 1
        %s844 = smul.addr %s843, 96
        %s845 = scalar_lea.vmem [#allocation2], %s844
        %p846 = scmp.lt.s32.totalorder %s18, 2
        %s847 = scalar_select %p846, %s18, 2
        %s848 = scalar_lea.vmem %s5, %s847
        %p849 = scmp.lt.s32.totalorder %s18, 2
        %s850 = scalar_select %p849, %s18, 2
        %s851 = scalar_lea.vmem %s6, %s850
        // Predicated region
        $region37: #{conv_bottle_forward.6} parent=35 // pred_check
          %p852 = pneg %p125
        $region38: #{conv_bottle_forward.6} parent=35 // pred_check_branch
          %854 = sbr.rel (%p852) target = $region40
        $region39: #{conv_bottle_forward.6} parent=35 // pred_region
          %s855 = smul.u32 24, %s18
          %s856 = ssub.s32 64, %s855
          %p857 = scmp.lt.s32.totalorder %s856, 24
          %s858 = scalar_select %p857, %s856, 24
          %s859 = smul.u32 4, %s858
          %p860 = scmp.ne.s32.totalorder 0, %s859
          %s861 = smul.addr %s855, 4
          %s862 = scalar_lea.vmem %s4, %s861
          // Predicated region
          $region41: #{conv_bottle_forward.6} parent=39 // pred_check
            %p863 = pneg %p860
          $region42: #{conv_bottle_forward.6} parent=39 // pred_check_branch
            %865 = sbr.rel (%p863) target = $region44
          $region43: #{conv_bottle_forward.6} parent=39 // pred_region
            // Predicated region
            $region45: #{conv_bottle_forward.6} parent=43 // pred_check
              _
            $region46: #{conv_bottle_forward.6} parent=43 // pred_check_branch
              %867 = sbr.rel target = $region48
            $region47: #{conv_bottle_forward.6} parent=43 // pred_region
              // Predicated region
              $region67: #{conv_bottle_forward.6} parent=47 // pred_check
                _
              $region68: #{conv_bottle_forward.6} parent=47 // pred_check_branch
                %964 = sbr.rel (0) target = $region70
              $region69: #{conv_bottle_forward.6} parent=47 // pred_region
                %s966 = ssub.s32 16, 1
                %s967 = sdiv.u32.pop %s858, 24
                %s968 = srem.u32.pop %s858, 24
                // While loop
                $region71: #{conv_bottle_forward.6} parent=69 // loop_pre_header
                  _
                $region72: #{conv_bottle_forward.6} parent=69 // loop_header
                  %s970 = sphi 0, %s972
                  %p971 = scmp.ge.s32.totalorder %s970, %s967
                  %s975 = sphi 0, %s1028
                  %s976 = sphi %s845, %s1031
                  %s977 = sphi %s862, %s1032
                $region73: #{conv_bottle_forward.6} parent=69 // loop_header_branch
                  %974 = sbr.rel (%p971) target = $region77
                $region74: #{conv_bottle_forward.6} parent=69 // loop_body
                  %v978 = vld [vmem:[%s976] sm:%s966]
                  %979 = vst [vmem:[%s977] sm:%s966] %v978
                  %v980 = vld [vmem:[%s976 + $0x4] sm:%s966]
                  %981 = vst [vmem:[%s977 + $0x4] sm:%s966] %v980
                  %v982 = vld [vmem:[%s976 + $0x8] sm:%s966]
                  %983 = vst [vmem:[%s977 + $0x8] sm:%s966] %v982
                  %v984 = vld [vmem:[%s976 + $0xc] sm:%s966]
                  %985 = vst [vmem:[%s977 + $0xc] sm:%s966] %v984
                  %v986 = vld [vmem:[%s976 + $0x10] sm:%s966]
                  %987 = vst [vmem:[%s977 + $0x10] sm:%s966] %v986
                  %v988 = vld [vmem:[%s976 + $0x14] sm:%s966]
                  %989 = vst [vmem:[%s977 + $0x14] sm:%s966] %v988
                  %v990 = vld [vmem:[%s976 + $0x18] sm:%s966]
                  %991 = vst [vmem:[%s977 + $0x18] sm:%s966] %v990
                  %v992 = vld [vmem:[%s976 + $0x1c] sm:%s966]
                  %993 = vst [vmem:[%s977 + $0x1c] sm:%s966] %v992
                  %v994 = vld [vmem:[%s976 + $0x20] sm:%s966]
                  %995 = vst [vmem:[%s977 + $0x20] sm:%s966] %v994
                  %v996 = vld [vmem:[%s976 + $0x24] sm:%s966]
                  %997 = vst [vmem:[%s977 + $0x24] sm:%s966] %v996
                  %v998 = vld [vmem:[%s976 + $0x28] sm:%s966]
                  %999 = vst [vmem:[%s977 + $0x28] sm:%s966] %v998
                  %v1000 = vld [vmem:[%s976 + $0x2c] sm:%s966]
                  %1001 = vst [vmem:[%s977 + $0x2c] sm:%s966] %v1000
                  %v1002 = vld [vmem:[%s976 + $0x30] sm:%s966]
                  %1003 = vst [vmem:[%s977 + $0x30] sm:%s966] %v1002
                  %v1004 = vld [vmem:[%s976 + $0x34] sm:%s966]
                  %1005 = vst [vmem:[%s977 + $0x34] sm:%s966] %v1004
                  %v1006 = vld [vmem:[%s976 + $0x38] sm:%s966]
                  %1007 = vst [vmem:[%s977 + $0x38] sm:%s966] %v1006
                  %v1008 = vld [vmem:[%s976 + $0x3c] sm:%s966]
                  %1009 = vst [vmem:[%s977 + $0x3c] sm:%s966] %v1008
                  %v1010 = vld [vmem:[%s976 + $0x40] sm:%s966]
                  %1011 = vst [vmem:[%s977 + $0x40] sm:%s966] %v1010
                  %v1012 = vld [vmem:[%s976 + $0x44] sm:%s966]
                  %1013 = vst [vmem:[%s977 + $0x44] sm:%s966] %v1012
                  %v1014 = vld [vmem:[%s976 + $0x48] sm:%s966]
                  %1015 = vst [vmem:[%s977 + $0x48] sm:%s966] %v1014
                  %v1016 = vld [vmem:[%s976 + $0x4c] sm:%s966]
                  %1017 = vst [vmem:[%s977 + $0x4c] sm:%s966] %v1016
                  %v1018 = vld [vmem:[%s976 + $0x50] sm:%s966]
                  %1019 = vst [vmem:[%s977 + $0x50] sm:%s966] %v1018
                  %v1020 = vld [vmem:[%s976 + $0x54] sm:%s966]
                  %1021 = vst [vmem:[%s977 + $0x54] sm:%s966] %v1020
                  %v1022 = vld [vmem:[%s976 + $0x58] sm:%s966]
                  %1023 = vst [vmem:[%s977 + $0x58] sm:%s966] %v1022
                  %v1024 = vld [vmem:[%s976 + $0x5c] sm:%s966]
                  %1025 = vst [vmem:[%s977 + $0x5c] sm:%s966] %v1024
                  %s1026 = sadd.s32 1, %s975
                  %p1027 = scmp.ge.s32.totalorder %s1026, %s967
                  %s1028 = scalar_select %p1027, 0, %s1026
                  %s1029 = smul.u32 %s1028, 96
                  %s1030 = smul.u32 %s1028, 96
                  %s1031 = scalar_lea.vmem %s845, %s1029 [#allocation2]
                  %s1032 = scalar_lea.vmem %s862, %s1030
                $region75: #{conv_bottle_forward.6} parent=69 // loop_footer
                  %s972 = sadd.s32 %s970, 1
                $region76: #{conv_bottle_forward.6} parent=69 // loop_footer_branch
                  %969 = sbr.rel target = $region72
                $region77: #{conv_bottle_forward.6} parent=69 // loop_exit
                  _
                %s1033 = sdiv.u32.pop %s858, 24
                %s1034 = srem.u32.pop %s858, 24
                %s1035 = smul.u32 %s1033, 24
                %s1036 = smul.u32 4, %s1035
                %s1037 = scalar_lea.vmem %s845, %s1036 [#allocation2]
                %s1038 = smul.u32 4, %s1035
                %s1039 = scalar_lea.vmem %s862, %s1038
                // While loop
                $region78: #{conv_bottle_forward.6} parent=69 // loop_pre_header
                  _
                $region79: #{conv_bottle_forward.6} parent=69 // loop_header
                  %s1041 = sphi 0, %s1043
                  %p1042 = scmp.ge.s32.totalorder %s1041, %s1034
                  %s1046 = sphi 0, %s1053
                  %s1047 = sphi %s1037, %s1056
                  %s1048 = sphi %s1039, %s1057
                $region80: #{conv_bottle_forward.6} parent=69 // loop_header_branch
                  %1045 = sbr.rel (%p1042) target = $region84
                $region81: #{conv_bottle_forward.6} parent=69 // loop_body
                  %v1049 = vld [vmem:[%s1047] sm:%s966]
                  %1050 = vst [vmem:[%s1048] sm:%s966] %v1049
                  %s1051 = sadd.s32 1, %s1046
                  %p1052 = scmp.ge.s32.totalorder %s1051, %s1034
                  %s1053 = scalar_select %p1052, 0, %s1051
                  %s1054 = smul.u32 %s1053, 4
                  %s1055 = smul.u32 %s1053, 4
                  %s1056 = scalar_lea.vmem %s1037, %s1054 [#allocation2]
                  %s1057 = scalar_lea.vmem %s1039, %s1055
                $region82: #{conv_bottle_forward.6} parent=69 // loop_footer
                  %s1043 = sadd.s32 %s1041, 1
                $region83: #{conv_bottle_forward.6} parent=69 // loop_footer_branch
                  %1040 = sbr.rel target = $region79
                $region84: #{conv_bottle_forward.6} parent=69 // loop_exit
                  _
              $region70: #{conv_bottle_forward.6} parent=47 // pred_fallthru
                _
            $region48: #{conv_bottle_forward.6} parent=43 // pred_fallthru
              _
            // Predicated region
            $region49: #{conv_bottle_forward.6} parent=43 // pred_check
              _
            $region50: #{conv_bottle_forward.6} parent=43 // pred_check_branch
              %869 = sbr.rel (0) target = $region52
            $region51: #{conv_bottle_forward.6} parent=43 // pred_region
              %s871 = ssub.s32 16, 1
              %s872 = sdiv.u32.pop %s858, 24
              %s873 = srem.u32.pop %s858, 24
              // While loop
              $region53: #{conv_bottle_forward.6} parent=51 // loop_pre_header
                _
              $region54: #{conv_bottle_forward.6} parent=51 // loop_header
                %s875 = sphi 0, %s877
                %p876 = scmp.ge.s32.totalorder %s875, %s872
                %s880 = sphi 0, %s933
                %s881 = sphi %s845, %s936
                %s882 = sphi %s862, %s937
              $region55: #{conv_bottle_forward.6} parent=51 // loop_header_branch
                %879 = sbr.rel (%p876) target = $region59
              $region56: #{conv_bottle_forward.6} parent=51 // loop_body
                %v883 = vld [vmem:[%s881] sm:%s871]
                %884 = vst [vmem:[%s882] sm:%s871] %v883
                %v885 = vld [vmem:[%s881 + $0x4] sm:%s871]
                %886 = vst [vmem:[%s882 + $0x4] sm:%s871] %v885
                %v887 = vld [vmem:[%s881 + $0x8] sm:%s871]
                %888 = vst [vmem:[%s882 + $0x8] sm:%s871] %v887
                %v889 = vld [vmem:[%s881 + $0xc] sm:%s871]
                %890 = vst [vmem:[%s882 + $0xc] sm:%s871] %v889
                %v891 = vld [vmem:[%s881 + $0x10] sm:%s871]
                %892 = vst [vmem:[%s882 + $0x10] sm:%s871] %v891
                %v893 = vld [vmem:[%s881 + $0x14] sm:%s871]
                %894 = vst [vmem:[%s882 + $0x14] sm:%s871] %v893
                %v895 = vld [vmem:[%s881 + $0x18] sm:%s871]
                %896 = vst [vmem:[%s882 + $0x18] sm:%s871] %v895
                %v897 = vld [vmem:[%s881 + $0x1c] sm:%s871]
                %898 = vst [vmem:[%s882 + $0x1c] sm:%s871] %v897
                %v899 = vld [vmem:[%s881 + $0x20] sm:%s871]
                %900 = vst [vmem:[%s882 + $0x20] sm:%s871] %v899
                %v901 = vld [vmem:[%s881 + $0x24] sm:%s871]
                %902 = vst [vmem:[%s882 + $0x24] sm:%s871] %v901
                %v903 = vld [vmem:[%s881 + $0x28] sm:%s871]
                %904 = vst [vmem:[%s882 + $0x28] sm:%s871] %v903
                %v905 = vld [vmem:[%s881 + $0x2c] sm:%s871]
                %906 = vst [vmem:[%s882 + $0x2c] sm:%s871] %v905
                %v907 = vld [vmem:[%s881 + $0x30] sm:%s871]
                %908 = vst [vmem:[%s882 + $0x30] sm:%s871] %v907
                %v909 = vld [vmem:[%s881 + $0x34] sm:%s871]
                %910 = vst [vmem:[%s882 + $0x34] sm:%s871] %v909
                %v911 = vld [vmem:[%s881 + $0x38] sm:%s871]
                %912 = vst [vmem:[%s882 + $0x38] sm:%s871] %v911
                %v913 = vld [vmem:[%s881 + $0x3c] sm:%s871]
                %914 = vst [vmem:[%s882 + $0x3c] sm:%s871] %v913
                %v915 = vld [vmem:[%s881 + $0x40] sm:%s871]
                %916 = vst [vmem:[%s882 + $0x40] sm:%s871] %v915
                %v917 = vld [vmem:[%s881 + $0x44] sm:%s871]
                %918 = vst [vmem:[%s882 + $0x44] sm:%s871] %v917
                %v919 = vld [vmem:[%s881 + $0x48] sm:%s871]
                %920 = vst [vmem:[%s882 + $0x48] sm:%s871] %v919
                %v921 = vld [vmem:[%s881 + $0x4c] sm:%s871]
                %922 = vst [vmem:[%s882 + $0x4c] sm:%s871] %v921
                %v923 = vld [vmem:[%s881 + $0x50] sm:%s871]
                %924 = vst [vmem:[%s882 + $0x50] sm:%s871] %v923
                %v925 = vld [vmem:[%s881 + $0x54] sm:%s871]
                %926 = vst [vmem:[%s882 + $0x54] sm:%s871] %v925
                %v927 = vld [vmem:[%s881 + $0x58] sm:%s871]
                %928 = vst [vmem:[%s882 + $0x58] sm:%s871] %v927
                %v929 = vld [vmem:[%s881 + $0x5c] sm:%s871]
                %930 = vst [vmem:[%s882 + $0x5c] sm:%s871] %v929
                %s931 = sadd.s32 1, %s880
                %p932 = scmp.ge.s32.totalorder %s931, %s872
                %s933 = scalar_select %p932, 0, %s931
                %s934 = smul.u32 %s933, 96
                %s935 = smul.u32 %s933, 96
                %s936 = scalar_lea.vmem %s845, %s934 [#allocation2]
                %s937 = scalar_lea.vmem %s862, %s935
              $region57: #{conv_bottle_forward.6} parent=51 // loop_footer
                %s877 = sadd.s32 %s875, 1
              $region58: #{conv_bottle_forward.6} parent=51 // loop_footer_branch
                %874 = sbr.rel target = $region54
              $region59: #{conv_bottle_forward.6} parent=51 // loop_exit
                _
              %s938 = sdiv.u32.pop %s858, 24
              %s939 = srem.u32.pop %s858, 24
              %s940 = smul.u32 %s938, 24
              %s941 = smul.u32 4, %s940
              %s942 = scalar_lea.vmem %s845, %s941 [#allocation2]
              %s943 = smul.u32 4, %s940
              %s944 = scalar_lea.vmem %s862, %s943
              // While loop
              $region60: #{conv_bottle_forward.6} parent=51 // loop_pre_header
                _
              $region61: #{conv_bottle_forward.6} parent=51 // loop_header
                %s946 = sphi 0, %s948
                %p947 = scmp.ge.s32.totalorder %s946, %s939
                %s951 = sphi 0, %s958
                %s952 = sphi %s942, %s961
                %s953 = sphi %s944, %s962
              $region62: #{conv_bottle_forward.6} parent=51 // loop_header_branch
                %950 = sbr.rel (%p947) target = $region66
              $region63: #{conv_bottle_forward.6} parent=51 // loop_body
                %v954 = vld [vmem:[%s952] sm:%s871]
                %955 = vst [vmem:[%s953] sm:%s871] %v954
                %s956 = sadd.s32 1, %s951
                %p957 = scmp.ge.s32.totalorder %s956, %s939
                %s958 = scalar_select %p957, 0, %s956
                %s959 = smul.u32 %s958, 4
                %s960 = smul.u32 %s958, 4
                %s961 = scalar_lea.vmem %s942, %s959 [#allocation2]
                %s962 = scalar_lea.vmem %s944, %s960
              $region64: #{conv_bottle_forward.6} parent=51 // loop_footer
                %s948 = sadd.s32 %s946, 1
              $region65: #{conv_bottle_forward.6} parent=51 // loop_footer_branch
                %945 = sbr.rel target = $region61
              $region66: #{conv_bottle_forward.6} parent=51 // loop_exit
                _
            $region52: #{conv_bottle_forward.6} parent=43 // pred_fallthru
              _
          $region44: #{conv_bottle_forward.6} parent=39 // pred_fallthru
            _
          %1058 = vnop
        $region40: #{conv_bottle_forward.6} parent=35 // pred_fallthru
          _
        // Predicated region
        $region85: #{conv_bottle_forward.6} parent=35 // pred_check
          %p1059 = pneg %p151
        $region86: #{conv_bottle_forward.6} parent=35 // pred_check_branch
          %1061 = sbr.rel (%p1059) target = $region88
        $region87: #{conv_bottle_forward.6} parent=35 // pred_region
          _
        $region88: #{conv_bottle_forward.6} parent=35 // pred_fallthru
          _
        // Predicated region
        $region89: #{conv_bottle_forward.6} parent=35 // pred_check
          %p1062 = pneg %p177
        $region90: #{conv_bottle_forward.6} parent=35 // pred_check_branch
          %1064 = sbr.rel (%p1062) target = $region92
        $region91: #{conv_bottle_forward.6} parent=35 // pred_region
          _
        $region92: #{conv_bottle_forward.6} parent=35 // pred_fallthru
          _
      $region36: #{conv_bottle_forward.6} parent=5 // pred_fallthru
        _
      %p1065 = scmp.le.s32.totalorder 2, %s13
      // Predicated region
      $region93: #{conv_bottle_forward.6} parent=5 // pred_check
        %p1066 = pneg %p1065
      $region94: #{conv_bottle_forward.6} parent=5 // pred_check_branch
        %1068 = sbr.rel (%p1066) target = $region96
      $region95: #{conv_bottle_forward.6} parent=5 // pred_region
        %s1069 = ssub.s32 %s13, 2
        // Predicated region
        $region97: #{conv_bottle_forward.6} parent=95 // pred_check
          %p1070 = pneg %p131
        $region98: #{conv_bottle_forward.6} parent=95 // pred_check_branch
          %1072 = sbr.rel (%p1070) target = $region100
        $region99: #{conv_bottle_forward.6} parent=95 // pred_region
          %s1073 = sand.u32 %s116, 1
          %s1074 = sand.u32 %s116, 1
          %s1075 = smul.addr %s1074, 96
          %s1076 = scalar_lea.vmem [#allocation2], %s1075
        $region100: #{conv_bottle_forward.6} parent=95 // pred_fallthru
          _
        // Predicated region
        $region101: #{conv_bottle_forward.6} parent=95 // pred_check
          %p1077 = pneg %p157
        $region102: #{conv_bottle_forward.6} parent=95 // pred_check_branch
          %1079 = sbr.rel (%p1077) target = $region104
        $region103: #{conv_bottle_forward.6} parent=95 // pred_region
          %p1080 = scmp.lt.s32.totalorder %s19, 2
          %s1081 = scalar_select %p1080, %s19, 2
          %s1082 = scalar_lea.vmem %s5, %s1081
        $region104: #{conv_bottle_forward.6} parent=95 // pred_fallthru
          _
        // Predicated region
        $region105: #{conv_bottle_forward.6} parent=95 // pred_check
          %p1083 = pneg %p183
        $region106: #{conv_bottle_forward.6} parent=95 // pred_check_branch
          %1085 = sbr.rel (%p1083) target = $region108
        $region107: #{conv_bottle_forward.6} parent=95 // pred_region
          %p1086 = scmp.lt.s32.totalorder %s19, 2
          %s1087 = scalar_select %p1086, %s19, 2
          %s1088 = scalar_lea.vmem %s6, %s1087
        $region108: #{conv_bottle_forward.6} parent=95 // pred_fallthru
          _
      $region96: #{conv_bottle_forward.6} parent=5 // pred_fallthru
        _
    $region6: #{conv_bottle_forward.6} parent=1 // loop_footer
      %s17 = sadd.s32 1, %s13
    $region7: #{conv_bottle_forward.6} parent=1 // loop_footer_branch
      %12 = sbr.rel target = $region3
    $region8: #{conv_bottle_forward.6} parent=1 // loop_exit
      _

// kernel: conv_bottle_forward.7
$region0: #{conv_bottle_forward.7}
  #allocation0 [shape = 'u32[]', space=smem, size = 0x4, offset = 0x4, fixed_abs, tag = 'smem constant byte address 0x4 - core index']
  #allocation1 [shape = 'u32[72,128]{1,0:T(1,128)}', space=vmem, size = 0x9000, scoped, tag = 'internal scratch']
  %s0 = inlined_call_operand.vmem [shape: bf16[2,16,16,128], index: 0, kind: input, shape index: {}]
  %s1 = inlined_call_operand.vmem [shape: f32[1,128], index: 1, kind: input, shape index: {}]
  %s2 = inlined_call_operand.vmem [shape: f32[1,128], index: 2, kind: input, shape index: {}]
  %s3 = inlined_call_operand.vmem [shape: bf16[2,10,10,128], index: 3, kind: output, shape index: {}]
  %s4 = sld [smem:[#allocation0]]
  $region45: #{conv_bottle_forward.7} parent=0
    _
  %s6 = ssub.s32 1, %s4
  %s7 = scalar_select 0, %s6, %s4
  loop: start=0, step=1, limit=4
  $region2: #{conv_bottle_forward.7} parent=0 // loop_pre_header
    _
  $region3: #{conv_bottle_forward.7} parent=0 // loop_header
    %s9 = sphi 0, %s13
    %p10 = scmp.ge.s32.totalorder %s9, 4
    %s19 = sphi 0, %s21
    %s22 = sphi 0, %s19
    %s23 = sphi 0, %s22
    %s39 = sphi 0, %s23
    %s43 = sphi 0, %s43
    %s45 = sphi 0, %s43
    %s46 = sphi 0, %s45
    %s60 = sphi 0, %s46
    %s64 = sphi 0, %s64
    %s66 = sphi 0, %s64
    %s67 = sphi 0, %s66
    %s81 = sphi 0, %s67
    %s87 = sphi 0, %s89
    %s90 = sphi 0, %s87
    %s91 = sphi 0, %s90
    %s107 = sphi 0, %s91
  $region4: #{conv_bottle_forward.7} parent=0 // loop_header_branch
    %12 = sbr.rel (%p10) target = $region8
  $region5: #{conv_bottle_forward.7} parent=0 // loop_body
    %s14 = ssub.s32 %s9, 1
    %s15 = ssub.s32 %s9, 2
    %s16 = sadd.s32 %s9, 1
    %s17 = ssub.s32 %s9, %s16
    %p18 = scmp.eq.s32.totalorder %s17, 0
    %s20 = sadd.s32 %s19, 1
    %s21 = scalar_select %p18, %s19, %s20
    %p24 = pneg %p18
    %p25 = scmp.eq.s32.totalorder %s9, 1
    %p26 = por %p24, %p25
    %p27 = scmp.ne.s32.totalorder %s19, %s22
    %p28 = scmp.eq.s32.totalorder %s9, 0
    %p29 = por %p27, %p28
    %p30 = scmp.ne.s32.totalorder %s19, %s22
    %p31 = scmp.eq.s32.totalorder %s14, 1
    %p32 = por %p30, %p31
    %p33 = scmp.ne.s32.totalorder %s22, %s23
    %p34 = scmp.eq.s32.totalorder %s14, 0
    %p35 = por %p33, %p34
    %p36 = scmp.ne.s32.totalorder %s22, %s23
    %p37 = scmp.eq.s32.totalorder %s15, 1
    %p38 = por %p36, %p37
    %p40 = scmp.ne.s32.totalorder %s23, %s39
    %p41 = scmp.eq.s32.totalorder %s15, 0
    %p42 = por %p40, %p41
    %s44 = sadd.s32 %s43, 1
    %p47 = scmp.eq.s32.totalorder %s9, 1
    %p48 = scmp.ne.s32.totalorder %s43, %s45
    %p49 = scmp.eq.s32.totalorder %s9, 0
    %p50 = por %p48, %p49
    %p51 = scmp.ne.s32.totalorder %s43, %s45
    %p52 = scmp.eq.s32.totalorder %s14, 1
    %p53 = por %p51, %p52
    %p54 = scmp.ne.s32.totalorder %s45, %s46
    %p55 = scmp.eq.s32.totalorder %s14, 0
    %p56 = por %p54, %p55
    %p57 = scmp.ne.s32.totalorder %s45, %s46
    %p58 = scmp.eq.s32.totalorder %s15, 1
    %p59 = por %p57, %p58
    %p61 = scmp.ne.s32.totalorder %s46, %s60
    %p62 = scmp.eq.s32.totalorder %s15, 0
    %p63 = por %p61, %p62
    %s65 = sadd.s32 %s64, 1
    %p68 = scmp.eq.s32.totalorder %s9, 1
    %p69 = scmp.ne.s32.totalorder %s64, %s66
    %p70 = scmp.eq.s32.totalorder %s9, 0
    %p71 = por %p69, %p70
    %p72 = scmp.ne.s32.totalorder %s64, %s66
    %p73 = scmp.eq.s32.totalorder %s14, 1
    %p74 = por %p72, %p73
    %p75 = scmp.ne.s32.totalorder %s66, %s67
    %p76 = scmp.eq.s32.totalorder %s14, 0
    %p77 = por %p75, %p76
    %p78 = scmp.ne.s32.totalorder %s66, %s67
    %p79 = scmp.eq.s32.totalorder %s15, 1
    %p80 = por %p78, %p79
    %p82 = scmp.ne.s32.totalorder %s67, %s81
    %p83 = scmp.eq.s32.totalorder %s15, 0
    %p84 = por %p82, %p83
    %s85 = ssub.s32 %s9, %s16
    %p86 = scmp.eq.s32.totalorder %s85, 0
    %s88 = sadd.s32 %s87, 1
    %s89 = scalar_select %p86, %s87, %s88
    %p92 = pneg %p86
    %p93 = scmp.eq.s32.totalorder %s9, 1
    %p94 = por %p92, %p93
    %p95 = scmp.ne.s32.totalorder %s87, %s90
    %p96 = scmp.eq.s32.totalorder %s9, 0
    %p97 = por %p95, %p96
    %p98 = scmp.ne.s32.totalorder %s87, %s90
    %p99 = scmp.eq.s32.totalorder %s14, 1
    %p100 = por %p98, %p99
    %p101 = scmp.ne.s32.totalorder %s90, %s91
    %p102 = scmp.eq.s32.totalorder %s14, 0
    %p103 = por %p101, %p102
    %p104 = scmp.ne.s32.totalorder %s90, %s91
    %p105 = scmp.eq.s32.totalorder %s15, 1
    %p106 = por %p104, %p105
    %p108 = scmp.ne.s32.totalorder %s91, %s107
    %p109 = scmp.eq.s32.totalorder %s15, 0
    %p110 = por %p108, %p109
    %p111 = scmp.le.s32.totalorder 1, %s9
    %p112 = scmp.lt.s32.totalorder %s9, 3
    %p113 = pnand %p111, %p112
    %p114 = pneg %p113
    // Predicated region
    $region9: #{conv_bottle_forward.7} parent=5 // pred_check
      _
    $region10: #{conv_bottle_forward.7} parent=5 // pred_check_branch
      %116 = sbr.rel (%p113) target = $region12
    $region11: #{conv_bottle_forward.7} parent=5 // pred_region
      %s117 = ssub.s32 %s9, 1
      // Predicated region
      $region13: #{conv_bottle_forward.7} parent=11 // pred_check
        %p118 = pneg %p56
      $region14: #{conv_bottle_forward.7} parent=11 // pred_check_branch
        %120 = sbr.rel (%p118) target = $region16
      $region15: #{conv_bottle_forward.7} parent=11 // pred_region
        _
      $region16: #{conv_bottle_forward.7} parent=11 // pred_fallthru
        _
      // Predicated region
      $region17: #{conv_bottle_forward.7} parent=11 // pred_check
        %p121 = pneg %p77
      $region18: #{conv_bottle_forward.7} parent=11 // pred_check_branch
        %123 = sbr.rel (%p121) target = $region20
      $region19: #{conv_bottle_forward.7} parent=11 // pred_region
        _
      $region20: #{conv_bottle_forward.7} parent=11 // pred_fallthru
        _
    $region12: #{conv_bottle_forward.7} parent=5 // pred_fallthru
      _
    %p124 = scmp.lt.s32.totalorder %s9, 2
    // Predicated region
    $region21: #{conv_bottle_forward.7} parent=5 // pred_check
      %p125 = pneg %p124
    $region22: #{conv_bottle_forward.7} parent=5 // pred_check_branch
      %127 = sbr.rel (%p125) target = $region24
    $region23: #{conv_bottle_forward.7} parent=5 // pred_region
      // Predicated region
      $region25: #{conv_bottle_forward.7} parent=23 // pred_check
        %p128 = pneg %p29
      $region26: #{conv_bottle_forward.7} parent=23 // pred_check_branch
        %130 = sbr.rel (%p128) target = $region28
      $region27: #{conv_bottle_forward.7} parent=23 // pred_region
        %p131 = scmp.lt.s32.totalorder %s9, 1
        %s132 = scalar_select %p131, %s9, 1
        %s133 = smul.addr %s132, 32
        %s134 = smul.addr %s133, 4
        %s135 = scalar_lea.vmem %s0, %s134
      $region28: #{conv_bottle_forward.7} parent=23 // pred_fallthru
        _
    $region24: #{conv_bottle_forward.7} parent=5 // pred_fallthru
      _
    %p136 = scmp.le.s32.totalorder 1, %s9
    %p137 = scmp.lt.s32.totalorder %s9, 3
    %p138 = pnand %p136, %p137
    %p139 = pneg %p138
    // Predicated region
    $region29: #{conv_bottle_forward.7} parent=5 // pred_check
      _
    $region30: #{conv_bottle_forward.7} parent=5 // pred_check_branch
      %141 = sbr.rel (%p138) target = $region32
    $region31: #{conv_bottle_forward.7} parent=5 // pred_region
      %s142 = ssub.s32 %s9, 1
      %p143 = scmp.lt.s32.totalorder %s14, 1
      %s144 = scalar_select %p143, %s14, 1
      %s145 = smul.addr %s144, 32
      %s146 = smul.addr %s145, 4
      %s147 = scalar_lea.vmem %s0, %s146
      %p148 = pneg %p35
      %p149 = pneg %p32
      %p150 = pneg %p56
      %p151 = pneg %p53
      %p152 = pneg %p77
      %p153 = pneg %p74
      %p154 = pneg %p103
      %p155 = pneg %p100
      %p156 = scmp.lt.s32.totalorder %s14, 1
      %s157 = scalar_select %p156, %s14, 1
      %s158 = smul.addr %s157, 20
      %s159 = smul.addr %s158, 4
      %s160 = scalar_lea.vmem %s3, %s159
      %p161 = scmp.lt.s32.totalorder %s14, 1
      %s162 = scalar_select %p161, %s14, 1
      %s163 = smul.addr %s162, 32
      %s164 = smul.addr %s163, 4
      %s165 = scalar_lea.vmem %s0, %s164
      %p166 = scmp.lt.s32.totalorder %s14, 1
      %s167 = scalar_select %p166, %s14, 1
      %s168 = smul.addr %s167, 20
      %s169 = smul.addr %s168, 4
      %s170 = scalar_lea.vmem %s3, %s169
      %v171 = vld [vmem:[%s165] sm:$0xf]
      %v172 = vld [vmem:[%s165 + $0x4] sm:$0xf]
      %v173 = vld [vmem:[%s165 + $0x8] sm:$0xf]
      %v174 = vld [vmem:[%s165 + $0xc] sm:$0xf]
      %v175 = vld [vmem:[%s165 + $0x10] sm:$0xf]
      %v176 = vld [vmem:[%s165 + $0x14] sm:$0xf]
      %v177 = vld [vmem:[%s165 + $0x18] sm:$0xf]
      %v178 = vld [vmem:[%s165 + $0x1c] sm:$0xf]
      %v179 = vld [vmem:[%s165 + $0x20] sm:$0xf]
      %v180 = vld [vmem:[%s165 + $0x24] sm:$0xf]
      %v181 = vld [vmem:[%s165 + $0x28] sm:$0xf]
      %v182 = vld [vmem:[%s165 + $0x2c] sm:$0xf]
      %v183 = vld [vmem:[%s165 + $0x30] sm:$0xf]
      %v184 = vld [vmem:[%s165 + $0x34] sm:$0xf]
      %v185 = vld [vmem:[%s165 + $0x38] sm:$0xf]
      %v186 = vld [vmem:[%s165 + $0x3c] sm:$0xf]
      %v187 = vld [vmem:[%s165 + $0x40] sm:$0xf]
      %v188 = vld [vmem:[%s165 + $0x44] sm:$0xf]
      %v189 = vld [vmem:[%s165 + $0x48] sm:$0xf]
      %v190 = vld [vmem:[%s165 + $0x4c] sm:$0xf]
      %v191 = vld [vmem:[%s165 + $0x50] sm:$0xf]
      %v192 = vld [vmem:[%s165 + $0x54] sm:$0xf]
      %v193 = vld [vmem:[%s165 + $0x58] sm:$0xf]
      %v194 = vld [vmem:[%s165 + $0x5c] sm:$0xf]
      %v195 = vld [vmem:[%s165 + $0x60] sm:$0xf]
      %v196 = vld [vmem:[%s165 + $0x64] sm:$0xf]
      %v197 = vld [vmem:[%s165 + $0x68] sm:$0xf]
      %v198 = vld [vmem:[%s165 + $0x6c] sm:$0xf]
      %v199 = vld [vmem:[%s165 + $0x70] sm:$0xf]
      %v200 = vld [vmem:[%s165 + $0x74] sm:$0xf]
      %v201 = vld [vmem:[%s165 + $0x78] sm:$0xf]
      %v202 = vld [vmem:[%s165 + $0x7c] sm:$0xf]
      %v203 = vunpack.c.l.bf16 %v171
      %v204 = vunpack.c.l.bf16 %v172
      %v205 = vunpack.c.l.bf16 %v173
      %v206 = vunpack.c.l.bf16 %v174
      %v207 = vunpack.c.l.bf16 %v175
      %v208 = vunpack.c.l.bf16 %v176
      %v209 = vunpack.c.l.bf16 %v177
      %v210 = vunpack.c.l.bf16 %v178
      %v211 = vunpack.c.l.bf16 %v179
      %v212 = vunpack.c.l.bf16 %v180
      %v213 = vunpack.c.l.bf16 %v181
      %v214 = vunpack.c.l.bf16 %v182
      %v215 = vunpack.c.l.bf16 %v183
      %v216 = vunpack.c.l.bf16 %v184
      %v217 = vunpack.c.l.bf16 %v185
      %v218 = vunpack.c.l.bf16 %v186
      %v219 = vunpack.c.l.bf16 %v187
      %v220 = vunpack.c.l.bf16 %v188
      %v221 = vunpack.c.l.bf16 %v189
      %v222 = vunpack.c.l.bf16 %v190
      %v223 = vunpack.c.l.bf16 %v191
      %v224 = vunpack.c.l.bf16 %v192
      %v225 = vunpack.c.l.bf16 %v193
      %v226 = vunpack.c.l.bf16 %v194
      %v227 = vunpack.c.l.bf16 %v195
      %v228 = vunpack.c.l.bf16 %v196
      %v229 = vunpack.c.l.bf16 %v197
      %v230 = vunpack.c.l.bf16 %v198
      %v231 = vunpack.c.l.bf16 %v199
      %v232 = vunpack.c.l.bf16 %v200
      %v233 = vunpack.c.l.bf16 %v201
      %v234 = vunpack.c.l.bf16 %v202
      %v235 = vld [vmem:[%s1] sm:$0x1]
      %v236 = vld [vmem:[%s2] sm:$0x1]
      %v238 = vperm.slane %v235, 0
      %v240 = vmul.f32 %v203, %v238
      %v241 = vmul.f32 %v204, %v238
      %v242 = vmul.f32 %v205, %v238
      %v243 = vmul.f32 %v206, %v238
      %v244 = vmul.f32 %v207, %v238
      %v245 = vmul.f32 %v208, %v238
      %v246 = vmul.f32 %v209, %v238
      %v247 = vmul.f32 %v210, %v238
      %v248 = vmul.f32 %v211, %v238
      %v249 = vmul.f32 %v212, %v238
      %v250 = vmul.f32 %v213, %v238
      %v251 = vmul.f32 %v214, %v238
      %v252 = vmul.f32 %v215, %v238
      %v253 = vmul.f32 %v216, %v238
      %v254 = vmul.f32 %v217, %v238
      %v255 = vmul.f32 %v218, %v238
      %v256 = vmul.f32 %v219, %v238
      %v257 = vmul.f32 %v220, %v238
      %v258 = vmul.f32 %v221, %v238
      %v259 = vmul.f32 %v222, %v238
      %v260 = vmul.f32 %v223, %v238
      %v261 = vmul.f32 %v224, %v238
      %v262 = vmul.f32 %v225, %v238
      %v263 = vmul.f32 %v226, %v238
      %v264 = vmul.f32 %v227, %v238
      %v265 = vmul.f32 %v228, %v238
      %v266 = vmul.f32 %v229, %v238
      %v267 = vmul.f32 %v230, %v238
      %v268 = vmul.f32 %v231, %v238
      %v269 = vmul.f32 %v232, %v238
      %v270 = vmul.f32 %v233, %v238
      %v271 = vmul.f32 %v234, %v238
      %v273 = vperm.slane %v236, 0
      %v275 = vadd.f32 %v240, %v273
      %v276 = vadd.f32 %v241, %v273
      %v277 = vadd.f32 %v242, %v273
      %v278 = vadd.f32 %v243, %v273
      %v279 = vadd.f32 %v244, %v273
      %v280 = vadd.f32 %v245, %v273
      %v281 = vadd.f32 %v246, %v273
      %v282 = vadd.f32 %v247, %v273
      %v283 = vadd.f32 %v248, %v273
      %v284 = vadd.f32 %v249, %v273
      %v285 = vadd.f32 %v250, %v273
      %v286 = vadd.f32 %v251, %v273
      %v287 = vadd.f32 %v252, %v273
      %v288 = vadd.f32 %v253, %v273
      %v289 = vadd.f32 %v254, %v273
      %v290 = vadd.f32 %v255, %v273
      %v291 = vadd.f32 %v256, %v273
      %v292 = vadd.f32 %v257, %v273
      %v293 = vadd.f32 %v258, %v273
      %v294 = vadd.f32 %v259, %v273
      %v295 = vadd.f32 %v260, %v273
      %v296 = vadd.f32 %v261, %v273
      %v297 = vadd.f32 %v262, %v273
      %v298 = vadd.f32 %v263, %v273
      %v299 = vadd.f32 %v264, %v273
      %v300 = vadd.f32 %v265, %v273
      %v301 = vadd.f32 %v266, %v273
      %v302 = vadd.f32 %v267, %v273
      %v303 = vadd.f32 %v268, %v273
      %v304 = vadd.f32 %v269, %v273
      %v305 = vadd.f32 %v270, %v273
      %v306 = vadd.f32 %v271, %v273
      %v307 = vmax.f32 %v275, 0.0
      %v308 = vmax.f32 %v276, 0.0
      %v309 = vmax.f32 %v277, 0.0
      %v310 = vmax.f32 %v278, 0.0
      %v311 = vmax.f32 %v279, 0.0
      %v312 = vmax.f32 %v280, 0.0
      %v313 = vmax.f32 %v281, 0.0
      %v314 = vmax.f32 %v282, 0.0
      %v315 = vmax.f32 %v283, 0.0
      %v316 = vmax.f32 %v284, 0.0
      %v317 = vmax.f32 %v285, 0.0
      %v318 = vmax.f32 %v286, 0.0
      %v319 = vmax.f32 %v287, 0.0
      %v320 = vmax.f32 %v288, 0.0
      %v321 = vmax.f32 %v289, 0.0
      %v322 = vmax.f32 %v290, 0.0
      %v323 = vmax.f32 %v291, 0.0
      %v324 = vmax.f32 %v292, 0.0
      %v325 = vmax.f32 %v293, 0.0
      %v326 = vmax.f32 %v294, 0.0
      %v327 = vmax.f32 %v295, 0.0
      %v328 = vmax.f32 %v296, 0.0
      %v329 = vmax.f32 %v297, 0.0
      %v330 = vmax.f32 %v298, 0.0
      %v331 = vmax.f32 %v299, 0.0
      %v332 = vmax.f32 %v300, 0.0
      %v333 = vmax.f32 %v301, 0.0
      %v334 = vmax.f32 %v302, 0.0
      %v335 = vmax.f32 %v303, 0.0
      %v336 = vmax.f32 %v304, 0.0
      %v337 = vmax.f32 %v305, 0.0
      %v338 = vmax.f32 %v306, 0.0
      %vm371 = vcmask 1046528
      %v372 = vrot.slane %v307, 1
      %v373 = vrot.slane %v308, 1
      %v374 = vsel %vm371, %v372, %v373
      %v375 = vrot.slane %v309, 1
      %v376 = vrot.slane %v310, 1
      %v377 = vsel %vm371, %v375, %v376
      %v378 = vrot.slane %v311, 1
      %v379 = vrot.slane %v312, 1
      %v380 = vsel %vm371, %v378, %v379
      %v381 = vrot.slane %v313, 1
      %v382 = vrot.slane %v314, 1
      %v383 = vsel %vm371, %v381, %v382
      %v384 = vrot.slane %v315, 1
      %v385 = vrot.slane %v316, 1
      %v386 = vsel %vm371, %v384, %v385
      %v387 = vrot.slane %v317, 1
      %v388 = vrot.slane %v318, 1
      %v389 = vsel %vm371, %v387, %v388
      %v390 = vrot.slane %v319, 1
      %v391 = vrot.slane %v320, 1
      %v392 = vsel %vm371, %v390, %v391
      %v393 = vrot.slane %v321, 1
      %v394 = vrot.slane %v322, 1
      %v395 = vsel %vm371, %v393, %v394
      %v396 = vrot.slane %v323, 1
      %v397 = vrot.slane %v324, 1
      %v398 = vsel %vm371, %v396, %v397
      %v399 = vrot.slane %v325, 1
      %v400 = vrot.slane %v326, 1
      %v401 = vsel %vm371, %v399, %v400
      %v402 = vrot.slane %v327, 1
      %v403 = vrot.slane %v328, 1
      %v404 = vsel %vm371, %v402, %v403
      %v405 = vrot.slane %v329, 1
      %v406 = vrot.slane %v330, 1
      %v407 = vsel %vm371, %v405, %v406
      %v408 = vrot.slane %v331, 1
      %v409 = vrot.slane %v332, 1
      %v410 = vsel %vm371, %v408, %v409
      %v411 = vrot.slane %v333, 1
      %v412 = vrot.slane %v334, 1
      %v413 = vsel %vm371, %v411, %v412
      %v414 = vrot.slane %v335, 1
      %v415 = vrot.slane %v336, 1
      %v416 = vsel %vm371, %v414, %v415
      %v417 = vrot.slane %v337, 1
      %v418 = vrot.slane %v338, 1
      %v419 = vsel %vm371, %v417, %v418
      %v452 = vadd.f32 %v307, %v374
      %v453 = vadd.f32 %v308, %v373
      %v454 = vadd.f32 %v309, %v377
      %v455 = vadd.f32 %v310, %v376
      %v456 = vadd.f32 %v311, %v380
      %v457 = vadd.f32 %v312, %v379
      %v458 = vadd.f32 %v313, %v383
      %v459 = vadd.f32 %v314, %v382
      %v460 = vadd.f32 %v315, %v386
      %v461 = vadd.f32 %v316, %v385
      %v462 = vadd.f32 %v317, %v389
      %v463 = vadd.f32 %v318, %v388
      %v464 = vadd.f32 %v319, %v392
      %v465 = vadd.f32 %v320, %v391
      %v466 = vadd.f32 %v321, %v395
      %v467 = vadd.f32 %v322, %v394
      %v468 = vadd.f32 %v323, %v398
      %v469 = vadd.f32 %v324, %v397
      %v470 = vadd.f32 %v325, %v401
      %v471 = vadd.f32 %v326, %v400
      %v472 = vadd.f32 %v327, %v404
      %v473 = vadd.f32 %v328, %v403
      %v474 = vadd.f32 %v329, %v407
      %v475 = vadd.f32 %v330, %v406
      %v476 = vadd.f32 %v331, %v410
      %v477 = vadd.f32 %v332, %v409
      %v478 = vadd.f32 %v333, %v413
      %v479 = vadd.f32 %v334, %v412
      %v480 = vadd.f32 %v335, %v416
      %v481 = vadd.f32 %v336, %v415
      %v482 = vadd.f32 %v337, %v419
      %v483 = vadd.f32 %v338, %v418
      %vm484 = vcmask 1045504
      %v485 = vrot.slane %v307, 2
      %v486 = vrot.slane %v308, 2
      %v487 = vsel %vm484, %v485, %v486
      %v488 = vrot.slane %v309, 2
      %v489 = vrot.slane %v310, 2
      %v490 = vsel %vm484, %v488, %v489
      %v491 = vrot.slane %v311, 2
      %v492 = vrot.slane %v312, 2
      %v493 = vsel %vm484, %v491, %v492
      %v494 = vrot.slane %v313, 2
      %v495 = vrot.slane %v314, 2
      %v496 = vsel %vm484, %v494, %v495
      %v497 = vrot.slane %v315, 2
      %v498 = vrot.slane %v316, 2
      %v499 = vsel %vm484, %v497, %v498
      %v500 = vrot.slane %v317, 2
      %v501 = vrot.slane %v318, 2
      %v502 = vsel %vm484, %v500, %v501
      %v503 = vrot.slane %v319, 2
      %v504 = vrot.slane %v320, 2
      %v505 = vsel %vm484, %v503, %v504
      %v506 = vrot.slane %v321, 2
      %v507 = vrot.slane %v322, 2
      %v508 = vsel %vm484, %v506, %v507
      %v509 = vrot.slane %v323, 2
      %v510 = vrot.slane %v324, 2
      %v511 = vsel %vm484, %v509, %v510
      %v512 = vrot.slane %v325, 2
      %v513 = vrot.slane %v326, 2
      %v514 = vsel %vm484, %v512, %v513
      %v515 = vrot.slane %v327, 2
      %v516 = vrot.slane %v328, 2
      %v517 = vsel %vm484, %v515, %v516
      %v518 = vrot.slane %v329, 2
      %v519 = vrot.slane %v330, 2
      %v520 = vsel %vm484, %v518, %v519
      %v521 = vrot.slane %v331, 2
      %v522 = vrot.slane %v332, 2
      %v523 = vsel %vm484, %v521, %v522
      %v524 = vrot.slane %v333, 2
      %v525 = vrot.slane %v334, 2
      %v526 = vsel %vm484, %v524, %v525
      %v527 = vrot.slane %v335, 2
      %v528 = vrot.slane %v336, 2
      %v529 = vsel %vm484, %v527, %v528
      %v530 = vrot.slane %v337, 2
      %v531 = vrot.slane %v338, 2
      %v532 = vsel %vm484, %v530, %v531
      %v565 = vadd.f32 %v452, %v487
      %v566 = vadd.f32 %v453, %v486
      %v567 = vadd.f32 %v454, %v490
      %v568 = vadd.f32 %v455, %v489
      %v569 = vadd.f32 %v456, %v493
      %v570 = vadd.f32 %v457, %v492
      %v571 = vadd.f32 %v458, %v496
      %v572 = vadd.f32 %v459, %v495
      %v573 = vadd.f32 %v460, %v499
      %v574 = vadd.f32 %v461, %v498
      %v575 = vadd.f32 %v462, %v502
      %v576 = vadd.f32 %v463, %v501
      %v577 = vadd.f32 %v464, %v505
      %v578 = vadd.f32 %v465, %v504
      %v579 = vadd.f32 %v466, %v508
      %v580 = vadd.f32 %v467, %v507
      %v581 = vadd.f32 %v468, %v511
      %v582 = vadd.f32 %v469, %v510
      %v583 = vadd.f32 %v470, %v514
      %v584 = vadd.f32 %v471, %v513
      %v585 = vadd.f32 %v472, %v517
      %v586 = vadd.f32 %v473, %v516
      %v587 = vadd.f32 %v474, %v520
      %v588 = vadd.f32 %v475, %v519
      %v589 = vadd.f32 %v476, %v523
      %v590 = vadd.f32 %v477, %v522
      %v591 = vadd.f32 %v478, %v526
      %v592 = vadd.f32 %v479, %v525
      %v593 = vadd.f32 %v480, %v529
      %v594 = vadd.f32 %v481, %v528
      %v595 = vadd.f32 %v482, %v532
      %v596 = vadd.f32 %v483, %v531
      %vm597 = vcmask 1044480
      %v598 = vrot.slane %v307, 3
      %v599 = vrot.slane %v308, 3
      %v600 = vsel %vm597, %v598, %v599
      %v601 = vrot.slane %v309, 3
      %v602 = vrot.slane %v310, 3
      %v603 = vsel %vm597, %v601, %v602
      %v604 = vrot.slane %v311, 3
      %v605 = vrot.slane %v312, 3
      %v606 = vsel %vm597, %v604, %v605
      %v607 = vrot.slane %v313, 3
      %v608 = vrot.slane %v314, 3
      %v609 = vsel %vm597, %v607, %v608
      %v610 = vrot.slane %v315, 3
      %v611 = vrot.slane %v316, 3
      %v612 = vsel %vm597, %v610, %v611
      %v613 = vrot.slane %v317, 3
      %v614 = vrot.slane %v318, 3
      %v615 = vsel %vm597, %v613, %v614
      %v616 = vrot.slane %v319, 3
      %v617 = vrot.slane %v320, 3
      %v618 = vsel %vm597, %v616, %v617
      %v619 = vrot.slane %v321, 3
      %v620 = vrot.slane %v322, 3
      %v621 = vsel %vm597, %v619, %v620
      %v622 = vrot.slane %v323, 3
      %v623 = vrot.slane %v324, 3
      %v624 = vsel %vm597, %v622, %v623
      %v625 = vrot.slane %v325, 3
      %v626 = vrot.slane %v326, 3
      %v627 = vsel %vm597, %v625, %v626
      %v628 = vrot.slane %v327, 3
      %v629 = vrot.slane %v328, 3
      %v630 = vsel %vm597, %v628, %v629
      %v631 = vrot.slane %v329, 3
      %v632 = vrot.slane %v330, 3
      %v633 = vsel %vm597, %v631, %v632
      %v634 = vrot.slane %v331, 3
      %v635 = vrot.slane %v332, 3
      %v636 = vsel %vm597, %v634, %v635
      %v637 = vrot.slane %v333, 3
      %v638 = vrot.slane %v334, 3
      %v639 = vsel %vm597, %v637, %v638
      %v640 = vrot.slane %v335, 3
      %v641 = vrot.slane %v336, 3
      %v642 = vsel %vm597, %v640, %v641
      %v643 = vrot.slane %v337, 3
      %v644 = vrot.slane %v338, 3
      %v645 = vsel %vm597, %v643, %v644
      %v678 = vadd.f32 %v565, %v600
      %v679 = vadd.f32 %v566, %v599
      %v680 = vadd.f32 %v567, %v603
      %v681 = vadd.f32 %v568, %v602
      %v682 = vadd.f32 %v569, %v606
      %v683 = vadd.f32 %v570, %v605
      %v684 = vadd.f32 %v571, %v609
      %v685 = vadd.f32 %v572, %v608
      %v686 = vadd.f32 %v573, %v612
      %v687 = vadd.f32 %v574, %v611
      %v688 = vadd.f32 %v575, %v615
      %v689 = vadd.f32 %v576, %v614
      %v690 = vadd.f32 %v577, %v618
      %v691 = vadd.f32 %v578, %v617
      %v692 = vadd.f32 %v579, %v621
      %v693 = vadd.f32 %v580, %v620
      %v694 = vadd.f32 %v581, %v624
      %v695 = vadd.f32 %v582, %v623
      %v696 = vadd.f32 %v583, %v627
      %v697 = vadd.f32 %v584, %v626
      %v698 = vadd.f32 %v585, %v630
      %v699 = vadd.f32 %v586, %v629
      %v700 = vadd.f32 %v587, %v633
      %v701 = vadd.f32 %v588, %v632
      %v702 = vadd.f32 %v589, %v636
      %v703 = vadd.f32 %v590, %v635
      %v704 = vadd.f32 %v591, %v639
      %v705 = vadd.f32 %v592, %v638
      %v706 = vadd.f32 %v593, %v642
      %v707 = vadd.f32 %v594, %v641
      %v708 = vadd.f32 %v595, %v645
      %v709 = vadd.f32 %v596, %v644
      %vm710 = vcmask 1043456
      %v711 = vrot.slane %v307, 4
      %v712 = vrot.slane %v308, 4
      %v713 = vsel %vm710, %v711, %v712
      %v714 = vrot.slane %v309, 4
      %v715 = vrot.slane %v310, 4
      %v716 = vsel %vm710, %v714, %v715
      %v717 = vrot.slane %v311, 4
      %v718 = vrot.slane %v312, 4
      %v719 = vsel %vm710, %v717, %v718
      %v720 = vrot.slane %v313, 4
      %v721 = vrot.slane %v314, 4
      %v722 = vsel %vm710, %v720, %v721
      %v723 = vrot.slane %v315, 4
      %v724 = vrot.slane %v316, 4
      %v725 = vsel %vm710, %v723, %v724
      %v726 = vrot.slane %v317, 4
      %v727 = vrot.slane %v318, 4
      %v728 = vsel %vm710, %v726, %v727
      %v729 = vrot.slane %v319, 4
      %v730 = vrot.slane %v320, 4
      %v731 = vsel %vm710, %v729, %v730
      %v732 = vrot.slane %v321, 4
      %v733 = vrot.slane %v322, 4
      %v734 = vsel %vm710, %v732, %v733
      %v735 = vrot.slane %v323, 4
      %v736 = vrot.slane %v324, 4
      %v737 = vsel %vm710, %v735, %v736
      %v738 = vrot.slane %v325, 4
      %v739 = vrot.slane %v326, 4
      %v740 = vsel %vm710, %v738, %v739
      %v741 = vrot.slane %v327, 4
      %v742 = vrot.slane %v328, 4
      %v743 = vsel %vm710, %v741, %v742
      %v744 = vrot.slane %v329, 4
      %v745 = vrot.slane %v330, 4
      %v746 = vsel %vm710, %v744, %v745
      %v747 = vrot.slane %v331, 4
      %v748 = vrot.slane %v332, 4
      %v749 = vsel %vm710, %v747, %v748
      %v750 = vrot.slane %v333, 4
      %v751 = vrot.slane %v334, 4
      %v752 = vsel %vm710, %v750, %v751
      %v753 = vrot.slane %v335, 4
      %v754 = vrot.slane %v336, 4
      %v755 = vsel %vm710, %v753, %v754
      %v756 = vrot.slane %v337, 4
      %v757 = vrot.slane %v338, 4
      %v758 = vsel %vm710, %v756, %v757
      %v791 = vadd.f32 %v678, %v713
      %v792 = vadd.f32 %v679, %v712
      %v793 = vadd.f32 %v680, %v716
      %v794 = vadd.f32 %v681, %v715
      %v795 = vadd.f32 %v682, %v719
      %v796 = vadd.f32 %v683, %v718
      %v797 = vadd.f32 %v684, %v722
      %v798 = vadd.f32 %v685, %v721
      %v799 = vadd.f32 %v686, %v725
      %v800 = vadd.f32 %v687, %v724
      %v801 = vadd.f32 %v688, %v728
      %v802 = vadd.f32 %v689, %v727
      %v803 = vadd.f32 %v690, %v731
      %v804 = vadd.f32 %v691, %v730
      %v805 = vadd.f32 %v692, %v734
      %v806 = vadd.f32 %v693, %v733
      %v807 = vadd.f32 %v694, %v737
      %v808 = vadd.f32 %v695, %v736
      %v809 = vadd.f32 %v696, %v740
      %v810 = vadd.f32 %v697, %v739
      %v811 = vadd.f32 %v698, %v743
      %v812 = vadd.f32 %v699, %v742
      %v813 = vadd.f32 %v700, %v746
      %v814 = vadd.f32 %v701, %v745
      %v815 = vadd.f32 %v702, %v749
      %v816 = vadd.f32 %v703, %v748
      %v817 = vadd.f32 %v704, %v752
      %v818 = vadd.f32 %v705, %v751
      %v819 = vadd.f32 %v706, %v755
      %v820 = vadd.f32 %v707, %v754
      %v821 = vadd.f32 %v708, %v758
      %v822 = vadd.f32 %v709, %v757
      %vm823 = vcmask 1042432
      %v824 = vrot.slane %v307, 5
      %v825 = vrot.slane %v308, 5
      %v826 = vsel %vm823, %v824, %v825
      %v827 = vrot.slane %v309, 5
      %v828 = vrot.slane %v310, 5
      %v829 = vsel %vm823, %v827, %v828
      %v830 = vrot.slane %v311, 5
      %v831 = vrot.slane %v312, 5
      %v832 = vsel %vm823, %v830, %v831
      %v833 = vrot.slane %v313, 5
      %v834 = vrot.slane %v314, 5
      %v835 = vsel %vm823, %v833, %v834
      %v836 = vrot.slane %v315, 5
      %v837 = vrot.slane %v316, 5
      %v838 = vsel %vm823, %v836, %v837
      %v839 = vrot.slane %v317, 5
      %v840 = vrot.slane %v318, 5
      %v841 = vsel %vm823, %v839, %v840
      %v842 = vrot.slane %v319, 5
      %v843 = vrot.slane %v320, 5
      %v844 = vsel %vm823, %v842, %v843
      %v845 = vrot.slane %v321, 5
      %v846 = vrot.slane %v322, 5
      %v847 = vsel %vm823, %v845, %v846
      %v848 = vrot.slane %v323, 5
      %v849 = vrot.slane %v324, 5
      %v850 = vsel %vm823, %v848, %v849
      %v851 = vrot.slane %v325, 5
      %v852 = vrot.slane %v326, 5
      %v853 = vsel %vm823, %v851, %v852
      %v854 = vrot.slane %v327, 5
      %v855 = vrot.slane %v328, 5
      %v856 = vsel %vm823, %v854, %v855
      %v857 = vrot.slane %v329, 5
      %v858 = vrot.slane %v330, 5
      %v859 = vsel %vm823, %v857, %v858
      %v860 = vrot.slane %v331, 5
      %v861 = vrot.slane %v332, 5
      %v862 = vsel %vm823, %v860, %v861
      %v863 = vrot.slane %v333, 5
      %v864 = vrot.slane %v334, 5
      %v865 = vsel %vm823, %v863, %v864
      %v866 = vrot.slane %v335, 5
      %v867 = vrot.slane %v336, 5
      %v868 = vsel %vm823, %v866, %v867
      %v869 = vrot.slane %v337, 5
      %v870 = vrot.slane %v338, 5
      %v871 = vsel %vm823, %v869, %v870
      %v904 = vadd.f32 %v791, %v826
      %v905 = vadd.f32 %v792, %v825
      %v906 = vadd.f32 %v793, %v829
      %v907 = vadd.f32 %v794, %v828
      %v908 = vadd.f32 %v795, %v832
      %v909 = vadd.f32 %v796, %v831
      %v910 = vadd.f32 %v797, %v835
      %v911 = vadd.f32 %v798, %v834
      %v912 = vadd.f32 %v799, %v838
      %v913 = vadd.f32 %v800, %v837
      %v914 = vadd.f32 %v801, %v841
      %v915 = vadd.f32 %v802, %v840
      %v916 = vadd.f32 %v803, %v844
      %v917 = vadd.f32 %v804, %v843
      %v918 = vadd.f32 %v805, %v847
      %v919 = vadd.f32 %v806, %v846
      %v920 = vadd.f32 %v807, %v850
      %v921 = vadd.f32 %v808, %v849
      %v922 = vadd.f32 %v809, %v853
      %v923 = vadd.f32 %v810, %v852
      %v924 = vadd.f32 %v811, %v856
      %v925 = vadd.f32 %v812, %v855
      %v926 = vadd.f32 %v813, %v859
      %v927 = vadd.f32 %v814, %v858
      %v928 = vadd.f32 %v815, %v862
      %v929 = vadd.f32 %v816, %v861
      %v930 = vadd.f32 %v817, %v865
      %v931 = vadd.f32 %v818, %v864
      %v932 = vadd.f32 %v819, %v868
      %v933 = vadd.f32 %v820, %v867
      %v934 = vadd.f32 %v821, %v871
      %v935 = vadd.f32 %v822, %v870
      %vm936 = vcmask 1041408
      %v937 = vrot.slane %v307, 6
      %v938 = vrot.slane %v308, 6
      %v939 = vsel %vm936, %v937, %v938
      %v940 = vrot.slane %v309, 6
      %v941 = vrot.slane %v310, 6
      %v942 = vsel %vm936, %v940, %v941
      %v943 = vrot.slane %v311, 6
      %v944 = vrot.slane %v312, 6
      %v945 = vsel %vm936, %v943, %v944
      %v946 = vrot.slane %v313, 6
      %v947 = vrot.slane %v314, 6
      %v948 = vsel %vm936, %v946, %v947
      %v949 = vrot.slane %v315, 6
      %v950 = vrot.slane %v316, 6
      %v951 = vsel %vm936, %v949, %v950
      %v952 = vrot.slane %v317, 6
      %v953 = vrot.slane %v318, 6
      %v954 = vsel %vm936, %v952, %v953
      %v955 = vrot.slane %v319, 6
      %v956 = vrot.slane %v320, 6
      %v957 = vsel %vm936, %v955, %v956
      %v958 = vrot.slane %v321, 6
      %v959 = vrot.slane %v322, 6
      %v960 = vsel %vm936, %v958, %v959
      %v961 = vrot.slane %v323, 6
      %v962 = vrot.slane %v324, 6
      %v963 = vsel %vm936, %v961, %v962
      %v964 = vrot.slane %v325, 6
      %v965 = vrot.slane %v326, 6
      %v966 = vsel %vm936, %v964, %v965
      %v967 = vrot.slane %v327, 6
      %v968 = vrot.slane %v328, 6
      %v969 = vsel %vm936, %v967, %v968
      %v970 = vrot.slane %v329, 6
      %v971 = vrot.slane %v330, 6
      %v972 = vsel %vm936, %v970, %v971
      %v973 = vrot.slane %v331, 6
      %v974 = vrot.slane %v332, 6
      %v975 = vsel %vm936, %v973, %v974
      %v976 = vrot.slane %v333, 6
      %v977 = vrot.slane %v334, 6
      %v978 = vsel %vm936, %v976, %v977
      %v979 = vrot.slane %v335, 6
      %v980 = vrot.slane %v336, 6
      %v981 = vsel %vm936, %v979, %v980
      %v982 = vrot.slane %v337, 6
      %v983 = vrot.slane %v338, 6
      %v984 = vsel %vm936, %v982, %v983
      %v1017 = vadd.f32 %v904, %v939
      %v1018 = vadd.f32 %v905, %v938
      %v1019 = vadd.f32 %v906, %v942
      %v1020 = vadd.f32 %v907, %v941
      %v1021 = vadd.f32 %v908, %v945
      %v1022 = vadd.f32 %v909, %v944
      %v1023 = vadd.f32 %v910, %v948
      %v1024 = vadd.f32 %v911, %v947
      %v1025 = vadd.f32 %v912, %v951
      %v1026 = vadd.f32 %v913, %v950
      %v1027 = vadd.f32 %v914, %v954
      %v1028 = vadd.f32 %v915, %v953
      %v1029 = vadd.f32 %v916, %v957
      %v1030 = vadd.f32 %v917, %v956
      %v1031 = vadd.f32 %v918, %v960
      %v1032 = vadd.f32 %v919, %v959
      %v1033 = vadd.f32 %v920, %v963
      %v1034 = vadd.f32 %v921, %v962
      %v1035 = vadd.f32 %v922, %v966
      %v1036 = vadd.f32 %v923, %v965
      %v1037 = vadd.f32 %v924, %v969
      %v1038 = vadd.f32 %v925, %v968
      %v1039 = vadd.f32 %v926, %v972
      %v1040 = vadd.f32 %v927, %v971
      %v1041 = vadd.f32 %v928, %v975
      %v1042 = vadd.f32 %v929, %v974
      %v1043 = vadd.f32 %v930, %v978
      %v1044 = vadd.f32 %v931, %v977
      %v1045 = vadd.f32 %v932, %v981
      %v1046 = vadd.f32 %v933, %v980
      %v1047 = vadd.f32 %v934, %v984
      %v1048 = vadd.f32 %v935, %v983
      %v1049 = vadd.f32 %v1017, %v1019
      %v1050 = vadd.f32 %v1018, %v1020
      %v1051 = vadd.f32 %v1019, %v1021
      %v1052 = vadd.f32 %v1020, %v1022
      %v1053 = vadd.f32 %v1021, %v1023
      %v1054 = vadd.f32 %v1022, %v1024
      %v1055 = vadd.f32 %v1023, %v1025
      %v1056 = vadd.f32 %v1024, %v1026
      %v1057 = vadd.f32 %v1025, %v1027
      %v1058 = vadd.f32 %v1026, %v1028
      %v1059 = vadd.f32 %v1027, %v1029
      %v1060 = vadd.f32 %v1028, %v1030
      %v1061 = vadd.f32 %v1029, %v1031
      %v1062 = vadd.f32 %v1030, %v1032
      %v1063 = vadd.f32 %v1031, %v1033
      %v1064 = vadd.f32 %v1032, %v1034
      %v1065 = vadd.f32 %v1033, %v1035
      %v1066 = vadd.f32 %v1034, %v1036
      %v1067 = vadd.f32 %v1035, %v1037
      %v1068 = vadd.f32 %v1036, %v1038
      %v1069 = vadd.f32 %v1049, %v1021
      %v1070 = vadd.f32 %v1050, %v1022
      %v1071 = vadd.f32 %v1051, %v1023
      %v1072 = vadd.f32 %v1052, %v1024
      %v1073 = vadd.f32 %v1053, %v1025
      %v1074 = vadd.f32 %v1054, %v1026
      %v1075 = vadd.f32 %v1055, %v1027
      %v1076 = vadd.f32 %v1056, %v1028
      %v1077 = vadd.f32 %v1057, %v1029
      %v1078 = vadd.f32 %v1058, %v1030
      %v1079 = vadd.f32 %v1059, %v1031
      %v1080 = vadd.f32 %v1060, %v1032
      %v1081 = vadd.f32 %v1061, %v1033
      %v1082 = vadd.f32 %v1062, %v1034
      %v1083 = vadd.f32 %v1063, %v1035
      %v1084 = vadd.f32 %v1064, %v1036
      %v1085 = vadd.f32 %v1065, %v1037
      %v1086 = vadd.f32 %v1066, %v1038
      %v1087 = vadd.f32 %v1067, %v1039
      %v1088 = vadd.f32 %v1068, %v1040
      %v1089 = vadd.f32 %v1069, %v1023
      %v1090 = vadd.f32 %v1070, %v1024
      %v1091 = vadd.f32 %v1071, %v1025
      %v1092 = vadd.f32 %v1072, %v1026
      %v1093 = vadd.f32 %v1073, %v1027
      %v1094 = vadd.f32 %v1074, %v1028
      %v1095 = vadd.f32 %v1075, %v1029
      %v1096 = vadd.f32 %v1076, %v1030
      %v1097 = vadd.f32 %v1077, %v1031
      %v1098 = vadd.f32 %v1078, %v1032
      %v1099 = vadd.f32 %v1079, %v1033
      %v1100 = vadd.f32 %v1080, %v1034
      %v1101 = vadd.f32 %v1081, %v1035
      %v1102 = vadd.f32 %v1082, %v1036
      %v1103 = vadd.f32 %v1083, %v1037
      %v1104 = vadd.f32 %v1084, %v1038
      %v1105 = vadd.f32 %v1085, %v1039
      %v1106 = vadd.f32 %v1086, %v1040
      %v1107 = vadd.f32 %v1087, %v1041
      %v1108 = vadd.f32 %v1088, %v1042
      %v1109 = vadd.f32 %v1089, %v1025
      %v1110 = vadd.f32 %v1090, %v1026
      %v1111 = vadd.f32 %v1091, %v1027
      %v1112 = vadd.f32 %v1092, %v1028
      %v1113 = vadd.f32 %v1093, %v1029
      %v1114 = vadd.f32 %v1094, %v1030
      %v1115 = vadd.f32 %v1095, %v1031
      %v1116 = vadd.f32 %v1096, %v1032
      %v1117 = vadd.f32 %v1097, %v1033
      %v1118 = vadd.f32 %v1098, %v1034
      %v1119 = vadd.f32 %v1099, %v1035
      %v1120 = vadd.f32 %v1100, %v1036
      %v1121 = vadd.f32 %v1101, %v1037
      %v1122 = vadd.f32 %v1102, %v1038
      %v1123 = vadd.f32 %v1103, %v1039
      %v1124 = vadd.f32 %v1104, %v1040
      %v1125 = vadd.f32 %v1105, %v1041
      %v1126 = vadd.f32 %v1106, %v1042
      %v1127 = vadd.f32 %v1107, %v1043
      %v1128 = vadd.f32 %v1108, %v1044
      %v1129 = vadd.f32 %v1109, %v1027
      %v1130 = vadd.f32 %v1110, %v1028
      %v1131 = vadd.f32 %v1111, %v1029
      %v1132 = vadd.f32 %v1112, %v1030
      %v1133 = vadd.f32 %v1113, %v1031
      %v1134 = vadd.f32 %v1114, %v1032
      %v1135 = vadd.f32 %v1115, %v1033
      %v1136 = vadd.f32 %v1116, %v1034
      %v1137 = vadd.f32 %v1117, %v1035
      %v1138 = vadd.f32 %v1118, %v1036
      %v1139 = vadd.f32 %v1119, %v1037
      %v1140 = vadd.f32 %v1120, %v1038
      %v1141 = vadd.f32 %v1121, %v1039
      %v1142 = vadd.f32 %v1122, %v1040
      %v1143 = vadd.f32 %v1123, %v1041
      %v1144 = vadd.f32 %v1124, %v1042
      %v1145 = vadd.f32 %v1125, %v1043
      %v1146 = vadd.f32 %v1126, %v1044
      %v1147 = vadd.f32 %v1127, %v1045
      %v1148 = vadd.f32 %v1128, %v1046
      %v1149 = vadd.f32 %v1129, %v1029
      %v1150 = vadd.f32 %v1130, %v1030
      %v1151 = vadd.f32 %v1131, %v1031
      %v1152 = vadd.f32 %v1132, %v1032
      %v1153 = vadd.f32 %v1133, %v1033
      %v1154 = vadd.f32 %v1134, %v1034
      %v1155 = vadd.f32 %v1135, %v1035
      %v1156 = vadd.f32 %v1136, %v1036
      %v1157 = vadd.f32 %v1137, %v1037
      %v1158 = vadd.f32 %v1138, %v1038
      %v1159 = vadd.f32 %v1139, %v1039
      %v1160 = vadd.f32 %v1140, %v1040
      %v1161 = vadd.f32 %v1141, %v1041
      %v1162 = vadd.f32 %v1142, %v1042
      %v1163 = vadd.f32 %v1143, %v1043
      %v1164 = vadd.f32 %v1144, %v1044
      %v1165 = vadd.f32 %v1145, %v1045
      %v1166 = vadd.f32 %v1146, %v1046
      %v1167 = vadd.f32 %v1147, %v1047
      %v1168 = vadd.f32 %v1148, %v1048
      %v1169 = vpack.c.bf16 %v1149, %v1149
      %v1170 = vpack.c.bf16 %v1150, %v1150
      %v1171 = vpack.c.bf16 %v1151, %v1151
      %v1172 = vpack.c.bf16 %v1152, %v1152
      %v1173 = vpack.c.bf16 %v1153, %v1153
      %v1174 = vpack.c.bf16 %v1154, %v1154
      %v1175 = vpack.c.bf16 %v1155, %v1155
      %v1176 = vpack.c.bf16 %v1156, %v1156
      %v1177 = vpack.c.bf16 %v1157, %v1157
      %v1178 = vpack.c.bf16 %v1158, %v1158
      %v1179 = vpack.c.bf16 %v1159, %v1159
      %v1180 = vpack.c.bf16 %v1160, %v1160
      %v1181 = vpack.c.bf16 %v1161, %v1161
      %v1182 = vpack.c.bf16 %v1162, %v1162
      %v1183 = vpack.c.bf16 %v1163, %v1163
      %v1184 = vpack.c.bf16 %v1164, %v1164
      %v1185 = vpack.c.bf16 %v1165, %v1165
      %v1186 = vpack.c.bf16 %v1166, %v1166
      %v1187 = vpack.c.bf16 %v1167, %v1167
      %v1188 = vpack.c.bf16 %v1168, %v1168
      %1189 = vst [vmem:[%s170] sm:$0xf] %v1169
      %1190 = vst [vmem:[%s170 + $0x4] sm:$0x1] %v1170
      %1191 = vst [vmem:[%s170 + $0x8] sm:$0xf] %v1171
      %1192 = vst [vmem:[%s170 + $0xc] sm:$0x1] %v1172
      %1193 = vst [vmem:[%s170 + $0x10] sm:$0xf] %v1173
      %1194 = vst [vmem:[%s170 + $0x14] sm:$0x1] %v1174
      %1195 = vst [vmem:[%s170 + $0x18] sm:$0xf] %v1175
      %1196 = vst [vmem:[%s170 + $0x1c] sm:$0x1] %v1176
      %1197 = vst [vmem:[%s170 + $0x20] sm:$0xf] %v1177
      %1198 = vst [vmem:[%s170 + $0x24] sm:$0x1] %v1178
      %1199 = vst [vmem:[%s170 + $0x28] sm:$0xf] %v1179
      %1200 = vst [vmem:[%s170 + $0x2c] sm:$0x1] %v1180
      %1201 = vst [vmem:[%s170 + $0x30] sm:$0xf] %v1181
      %1202 = vst [vmem:[%s170 + $0x34] sm:$0x1] %v1182
      %1203 = vst [vmem:[%s170 + $0x38] sm:$0xf] %v1183
      %1204 = vst [vmem:[%s170 + $0x3c] sm:$0x1] %v1184
      %1205 = vst [vmem:[%s170 + $0x40] sm:$0xf] %v1185
      %1206 = vst [vmem:[%s170 + $0x44] sm:$0x1] %v1186
      %1207 = vst [vmem:[%s170 + $0x48] sm:$0xf] %v1187
      %1208 = vst [vmem:[%s170 + $0x4c] sm:$0x1] %v1188
      %p1209 = scmp.lt.s32.totalorder %s14, 1
      %s1210 = scalar_select %p1209, %s14, 1
      %s1211 = smul.addr %s1210, 20
      %s1212 = smul.addr %s1211, 4
      %s1213 = scalar_lea.vmem %s3, %s1212
      // Predicated region
      $region33: #{conv_bottle_forward.7} parent=31 // pred_check
        %p1214 = pneg %p100
      $region34: #{conv_bottle_forward.7} parent=31 // pred_check_branch
        %1216 = sbr.rel (%p1214) target = $region36
      $region35: #{conv_bottle_forward.7} parent=31 // pred_region
        _
      $region36: #{conv_bottle_forward.7} parent=31 // pred_fallthru
        _
    $region32: #{conv_bottle_forward.7} parent=5 // pred_fallthru
      _
    %p1217 = scmp.le.s32.totalorder 2, %s9
    // Predicated region
    $region37: #{conv_bottle_forward.7} parent=5 // pred_check
      %p1218 = pneg %p1217
    $region38: #{conv_bottle_forward.7} parent=5 // pred_check_branch
      %1220 = sbr.rel (%p1218) target = $region40
    $region39: #{conv_bottle_forward.7} parent=5 // pred_region
      %s1221 = ssub.s32 %s9, 2
      // Predicated region
      $region41: #{conv_bottle_forward.7} parent=39 // pred_check
        %p1222 = pneg %p106
      $region42: #{conv_bottle_forward.7} parent=39 // pred_check_branch
        %1224 = sbr.rel (%p1222) target = $region44
      $region43: #{conv_bottle_forward.7} parent=39 // pred_region
        %p1225 = scmp.lt.s32.totalorder %s15, 1
        %s1226 = scalar_select %p1225, %s15, 1
        %s1227 = smul.addr %s1226, 20
        %s1228 = smul.addr %s1227, 4
        %s1229 = scalar_lea.vmem %s3, %s1228
      $region44: #{conv_bottle_forward.7} parent=39 // pred_fallthru
        _
    $region40: #{conv_bottle_forward.7} parent=5 // pred_fallthru
      _
  $region6: #{conv_bottle_forward.7} parent=0 // loop_footer
    %s13 = sadd.s32 1, %s9
  $region7: #{conv_bottle_forward.7} parent=0 // loop_footer_branch
    %8 = sbr.rel target = $region3
  $region8: #{conv_bottle_forward.7} parent=0 // loop_exit
    _

// kernel: conv_bottle_forward.5
$region0: #{conv_bottle_forward.5}
  #allocation0 [shape = 'u32[]', space=smem, size = 0x4, offset = 0x4, fixed_abs, tag = 'smem constant byte address 0x4 - core index']
  #allocation1 [shape = 'u32[72,128]{1,0:T(1,128)}', space=vmem, size = 0x9000, scoped, tag = 'internal scratch']
  %s0 = inlined_call_operand.vmem [shape: bf16[2,16,16,128], index: 0, kind: input, shape index: {}]
  %s1 = inlined_call_operand.vmem [shape: f32[1,128], index: 1, kind: input, shape index: {}]
  %s2 = inlined_call_operand.vmem [shape: f32[1,128], index: 2, kind: input, shape index: {}]
  %s3 = inlined_call_operand.vmem [shape: bf16[1152,128], index: 3, kind: input, shape index: {}]
  %s4 = inlined_call_operand.vmem [shape: bf16[2,16,16,128], index: 4, kind: output, shape index: {0}]
  %s5 = inlined_call_operand.vmem [shape: f32[2,1,128], index: 5, kind: output, shape index: {1}]
  %s6 = inlined_call_operand.vmem [shape: f32[2,1,128], index: 6, kind: output, shape index: {2}]
  %7 = xla_tuple %s4, %s5, %s6
  %s8 = sld [smem:[#allocation0]]
  $region65: #{conv_bottle_forward.5} parent=0
    _
  %s10 = ssub.s32 1, %s8
  %s11 = scalar_select 0, %s10, %s8
  loop: start=0, step=1, limit=4
  $region2: #{conv_bottle_forward.5} parent=0 // loop_pre_header
    _
  $region3: #{conv_bottle_forward.5} parent=0 // loop_header
    %s13 = sphi 0, %s17
    %p14 = scmp.ge.s32.totalorder %s13, 4
    %s23 = sphi 0, %s25
    %s26 = sphi 0, %s23
    %s27 = sphi 0, %s26
    %s43 = sphi 0, %s27
    %s47 = sphi 0, %s47
    %s49 = sphi 0, %s47
    %s50 = sphi 0, %s49
    %s64 = sphi 0, %s50
    %s68 = sphi 0, %s68
    %s70 = sphi 0, %s68
    %s71 = sphi 0, %s70
    %s85 = sphi 0, %s71
    %s89 = sphi 0, %s89
    %s91 = sphi 0, %s89
    %s92 = sphi 0, %s91
    %s106 = sphi 0, %s92
    %s112 = sphi 0, %s114
    %s115 = sphi 0, %s112
    %s116 = sphi 0, %s115
    %s132 = sphi 0, %s116
    %s138 = sphi 0, %s140
    %s141 = sphi 0, %s138
    %s142 = sphi 0, %s141
    %s158 = sphi 0, %s142
    %s164 = sphi 0, %s166
    %s167 = sphi 0, %s164
    %s168 = sphi 0, %s167
    %s184 = sphi 0, %s168
  $region4: #{conv_bottle_forward.5} parent=0 // loop_header_branch
    %16 = sbr.rel (%p14) target = $region8
  $region5: #{conv_bottle_forward.5} parent=0 // loop_body
    %s18 = ssub.s32 %s13, 1
    %s19 = ssub.s32 %s13, 2
    %s20 = sadd.s32 %s13, 1
    %s21 = ssub.s32 %s13, %s20
    %p22 = scmp.eq.s32.totalorder %s21, 0
    %s24 = sadd.s32 %s23, 1
    %s25 = scalar_select %p22, %s23, %s24
    %p28 = pneg %p22
    %p29 = scmp.eq.s32.totalorder %s13, 1
    %p30 = por %p28, %p29
    %p31 = scmp.ne.s32.totalorder %s23, %s26
    %p32 = scmp.eq.s32.totalorder %s13, 0
    %p33 = por %p31, %p32
    %p34 = scmp.ne.s32.totalorder %s23, %s26
    %p35 = scmp.eq.s32.totalorder %s18, 1
    %p36 = por %p34, %p35
    %p37 = scmp.ne.s32.totalorder %s26, %s27
    %p38 = scmp.eq.s32.totalorder %s18, 0
    %p39 = por %p37, %p38
    %p40 = scmp.ne.s32.totalorder %s26, %s27
    %p41 = scmp.eq.s32.totalorder %s19, 1
    %p42 = por %p40, %p41
    %p44 = scmp.ne.s32.totalorder %s27, %s43
    %p45 = scmp.eq.s32.totalorder %s19, 0
    %p46 = por %p44, %p45
    %s48 = sadd.s32 %s47, 1
    %p51 = scmp.eq.s32.totalorder %s13, 1
    %p52 = scmp.ne.s32.totalorder %s47, %s49
    %p53 = scmp.eq.s32.totalorder %s13, 0
    %p54 = por %p52, %p53
    %p55 = scmp.ne.s32.totalorder %s47, %s49
    %p56 = scmp.eq.s32.totalorder %s18, 1
    %p57 = por %p55, %p56
    %p58 = scmp.ne.s32.totalorder %s49, %s50
    %p59 = scmp.eq.s32.totalorder %s18, 0
    %p60 = por %p58, %p59
    %p61 = scmp.ne.s32.totalorder %s49, %s50
    %p62 = scmp.eq.s32.totalorder %s19, 1
    %p63 = por %p61, %p62
    %p65 = scmp.ne.s32.totalorder %s50, %s64
    %p66 = scmp.eq.s32.totalorder %s19, 0
    %p67 = por %p65, %p66
    %s69 = sadd.s32 %s68, 1
    %p72 = scmp.eq.s32.totalorder %s13, 1
    %p73 = scmp.ne.s32.totalorder %s68, %s70
    %p74 = scmp.eq.s32.totalorder %s13, 0
    %p75 = por %p73, %p74
    %p76 = scmp.ne.s32.totalorder %s68, %s70
    %p77 = scmp.eq.s32.totalorder %s18, 1
    %p78 = por %p76, %p77
    %p79 = scmp.ne.s32.totalorder %s70, %s71
    %p80 = scmp.eq.s32.totalorder %s18, 0
    %p81 = por %p79, %p80
    %p82 = scmp.ne.s32.totalorder %s70, %s71
    %p83 = scmp.eq.s32.totalorder %s19, 1
    %p84 = por %p82, %p83
    %p86 = scmp.ne.s32.totalorder %s71, %s85
    %p87 = scmp.eq.s32.totalorder %s19, 0
    %p88 = por %p86, %p87
    %s90 = sadd.s32 %s89, 1
    %p93 = scmp.eq.s32.totalorder %s13, 1
    %p94 = scmp.ne.s32.totalorder %s89, %s91
    %p95 = scmp.eq.s32.totalorder %s13, 0
    %p96 = por %p94, %p95
    %p97 = scmp.ne.s32.totalorder %s89, %s91
    %p98 = scmp.eq.s32.totalorder %s18, 1
    %p99 = por %p97, %p98
    %p100 = scmp.ne.s32.totalorder %s91, %s92
    %p101 = scmp.eq.s32.totalorder %s18, 0
    %p102 = por %p100, %p101
    %p103 = scmp.ne.s32.totalorder %s91, %s92
    %p104 = scmp.eq.s32.totalorder %s19, 1
    %p105 = por %p103, %p104
    %p107 = scmp.ne.s32.totalorder %s92, %s106
    %p108 = scmp.eq.s32.totalorder %s19, 0
    %p109 = por %p107, %p108
    %s110 = ssub.s32 %s13, %s20
    %p111 = scmp.eq.s32.totalorder %s110, 0
    %s113 = sadd.s32 %s112, 1
    %s114 = scalar_select %p111, %s112, %s113
    %p117 = pneg %p111
    %p118 = scmp.eq.s32.totalorder %s13, 1
    %p119 = por %p117, %p118
    %p120 = scmp.ne.s32.totalorder %s112, %s115
    %p121 = scmp.eq.s32.totalorder %s13, 0
    %p122 = por %p120, %p121
    %p123 = scmp.ne.s32.totalorder %s112, %s115
    %p124 = scmp.eq.s32.totalorder %s18, 1
    %p125 = por %p123, %p124
    %p126 = scmp.ne.s32.totalorder %s115, %s116
    %p127 = scmp.eq.s32.totalorder %s18, 0
    %p128 = por %p126, %p127
    %p129 = scmp.ne.s32.totalorder %s115, %s116
    %p130 = scmp.eq.s32.totalorder %s19, 1
    %p131 = por %p129, %p130
    %p133 = scmp.ne.s32.totalorder %s116, %s132
    %p134 = scmp.eq.s32.totalorder %s19, 0
    %p135 = por %p133, %p134
    %s136 = ssub.s32 %s13, %s20
    %p137 = scmp.eq.s32.totalorder %s136, 0
    %s139 = sadd.s32 %s138, 1
    %s140 = scalar_select %p137, %s138, %s139
    %p143 = pneg %p137
    %p144 = scmp.eq.s32.totalorder %s13, 1
    %p145 = por %p143, %p144
    %p146 = scmp.ne.s32.totalorder %s138, %s141
    %p147 = scmp.eq.s32.totalorder %s13, 0
    %p148 = por %p146, %p147
    %p149 = scmp.ne.s32.totalorder %s138, %s141
    %p150 = scmp.eq.s32.totalorder %s18, 1
    %p151 = por %p149, %p150
    %p152 = scmp.ne.s32.totalorder %s141, %s142
    %p153 = scmp.eq.s32.totalorder %s18, 0
    %p154 = por %p152, %p153
    %p155 = scmp.ne.s32.totalorder %s141, %s142
    %p156 = scmp.eq.s32.totalorder %s19, 1
    %p157 = por %p155, %p156
    %p159 = scmp.ne.s32.totalorder %s142, %s158
    %p160 = scmp.eq.s32.totalorder %s19, 0
    %p161 = por %p159, %p160
    %s162 = ssub.s32 %s13, %s20
    %p163 = scmp.eq.s32.totalorder %s162, 0
    %s165 = sadd.s32 %s164, 1
    %s166 = scalar_select %p163, %s164, %s165
    %p169 = pneg %p163
    %p170 = scmp.eq.s32.totalorder %s13, 1
    %p171 = por %p169, %p170
    %p172 = scmp.ne.s32.totalorder %s164, %s167
    %p173 = scmp.eq.s32.totalorder %s13, 0
    %p174 = por %p172, %p173
    %p175 = scmp.ne.s32.totalorder %s164, %s167
    %p176 = scmp.eq.s32.totalorder %s18, 1
    %p177 = por %p175, %p176
    %p178 = scmp.ne.s32.totalorder %s167, %s168
    %p179 = scmp.eq.s32.totalorder %s18, 0
    %p180 = por %p178, %p179
    %p181 = scmp.ne.s32.totalorder %s167, %s168
    %p182 = scmp.eq.s32.totalorder %s19, 1
    %p183 = por %p181, %p182
    %p185 = scmp.ne.s32.totalorder %s168, %s184
    %p186 = scmp.eq.s32.totalorder %s19, 0
    %p187 = por %p185, %p186
    %p188 = scmp.le.s32.totalorder 1, %s13
    %p189 = scmp.lt.s32.totalorder %s13, 3
    %p190 = pnand %p188, %p189
    %p191 = pneg %p190
    // Predicated region
    $region9: #{conv_bottle_forward.5} parent=5 // pred_check
      _
    $region10: #{conv_bottle_forward.5} parent=5 // pred_check_branch
      %193 = sbr.rel (%p190) target = $region12
    $region11: #{conv_bottle_forward.5} parent=5 // pred_region
      %s194 = ssub.s32 %s13, 1
      // Predicated region
      $region13: #{conv_bottle_forward.5} parent=11 // pred_check
        %p195 = pneg %p60
      $region14: #{conv_bottle_forward.5} parent=11 // pred_check_branch
        %197 = sbr.rel (%p195) target = $region16
      $region15: #{conv_bottle_forward.5} parent=11 // pred_region
        _
      $region16: #{conv_bottle_forward.5} parent=11 // pred_fallthru
        _
      // Predicated region
      $region17: #{conv_bottle_forward.5} parent=11 // pred_check
        %p198 = pneg %p81
      $region18: #{conv_bottle_forward.5} parent=11 // pred_check_branch
        %200 = sbr.rel (%p198) target = $region20
      $region19: #{conv_bottle_forward.5} parent=11 // pred_region
        _
      $region20: #{conv_bottle_forward.5} parent=11 // pred_fallthru
        _
      // Predicated region
      $region21: #{conv_bottle_forward.5} parent=11 // pred_check
        %p201 = pneg %p102
      $region22: #{conv_bottle_forward.5} parent=11 // pred_check_branch
        %203 = sbr.rel (%p201) target = $region24
      $region23: #{conv_bottle_forward.5} parent=11 // pred_region
        _
      $region24: #{conv_bottle_forward.5} parent=11 // pred_fallthru
        _
    $region12: #{conv_bottle_forward.5} parent=5 // pred_fallthru
      _
    %p204 = scmp.lt.s32.totalorder %s13, 2
    // Predicated region
    $region25: #{conv_bottle_forward.5} parent=5 // pred_check
      %p205 = pneg %p204
    $region26: #{conv_bottle_forward.5} parent=5 // pred_check_branch
      %207 = sbr.rel (%p205) target = $region28
    $region27: #{conv_bottle_forward.5} parent=5 // pred_region
      // Predicated region
      $region29: #{conv_bottle_forward.5} parent=27 // pred_check
        %p208 = pneg %p33
      $region30: #{conv_bottle_forward.5} parent=27 // pred_check_branch
        %210 = sbr.rel (%p208) target = $region32
      $region31: #{conv_bottle_forward.5} parent=27 // pred_region
        %p211 = scmp.lt.s32.totalorder %s13, 1
        %s212 = scalar_select %p211, %s13, 1
        %s213 = smul.addr %s212, 32
        %s214 = smul.addr %s213, 4
        %s215 = scalar_lea.vmem %s0, %s214
      $region32: #{conv_bottle_forward.5} parent=27 // pred_fallthru
        _
    $region28: #{conv_bottle_forward.5} parent=5 // pred_fallthru
      _
    %p216 = scmp.le.s32.totalorder 1, %s13
    %p217 = scmp.lt.s32.totalorder %s13, 3
    %p218 = pnand %p216, %p217
    %p219 = pneg %p218
    // Predicated region
    $region33: #{conv_bottle_forward.5} parent=5 // pred_check
      _
    $region34: #{conv_bottle_forward.5} parent=5 // pred_check_branch
      %221 = sbr.rel (%p218) target = $region36
    $region35: #{conv_bottle_forward.5} parent=5 // pred_region
      %s222 = ssub.s32 %s13, 1
      %p223 = scmp.lt.s32.totalorder %s18, 1
      %s224 = scalar_select %p223, %s18, 1
      %s225 = smul.addr %s224, 32
      %s226 = smul.addr %s225, 4
      %s227 = scalar_lea.vmem %s0, %s226
      %p228 = pneg %p39
      %p229 = pneg %p36
      %p230 = pneg %p60
      %p231 = pneg %p57
      %p232 = pneg %p81
      %p233 = pneg %p78
      %p234 = pneg %p102
      %p235 = pneg %p99
      %p236 = pneg %p128
      %p237 = pneg %p125
      %p238 = scmp.lt.s32.totalorder %s18, 1
      %s239 = scalar_select %p238, %s18, 1
      %s240 = smul.addr %s239, 32
      %s241 = smul.addr %s240, 4
      %s242 = scalar_lea.vmem %s4, %s241
      %p243 = pneg %p154
      %p244 = pneg %p151
      %p245 = scmp.lt.s32.totalorder %s18, 1
      %s246 = scalar_select %p245, %s18, 1
      %s247 = scalar_lea.vmem %s5, %s246
      %p248 = pneg %p180
      %p249 = pneg %p177
      %p250 = scmp.lt.s32.totalorder %s18, 1
      %s251 = scalar_select %p250, %s18, 1
      %s252 = scalar_lea.vmem %s6, %s251
      %p253 = scmp.lt.s32.totalorder %s18, 1
      %s254 = scalar_select %p253, %s18, 1
      %s255 = smul.addr %s254, 32
      %s256 = smul.addr %s255, 4
      %s257 = scalar_lea.vmem %s0, %s256
      %p258 = scmp.lt.s32.totalorder %s18, 1
      %s259 = scalar_select %p258, %s18, 1
      %s260 = smul.addr %s259, 32
      %s261 = smul.addr %s260, 4
      %s262 = scalar_lea.vmem %s4, %s261
      %p263 = scmp.lt.s32.totalorder %s18, 1
      %s264 = scalar_select %p263, %s18, 1
      %s265 = scalar_lea.vmem %s5, %s264
      %p266 = scmp.lt.s32.totalorder %s18, 1
      %s267 = scalar_select %p266, %s18, 1
      %s268 = scalar_lea.vmem %s6, %s267
      %v270 = vld [vmem:[%s257] sm:$0xf]
      %v271 = vld [vmem:[%s257 + $0x4] sm:$0xf]
      %v272 = vld [vmem:[%s257 + $0x8] sm:$0xf]
      %v273 = vld [vmem:[%s257 + $0xc] sm:$0xf]
      %v274 = vld [vmem:[%s257 + $0x10] sm:$0xf]
      %v275 = vld [vmem:[%s257 + $0x14] sm:$0xf]
      %v276 = vld [vmem:[%s257 + $0x18] sm:$0xf]
      %v277 = vld [vmem:[%s257 + $0x1c] sm:$0xf]
      %v278 = vld [vmem:[%s257 + $0x20] sm:$0xf]
      %v279 = vld [vmem:[%s257 + $0x24] sm:$0xf]
      %v280 = vld [vmem:[%s257 + $0x28] sm:$0xf]
      %v281 = vld [vmem:[%s257 + $0x2c] sm:$0xf]
      %v282 = vld [vmem:[%s257 + $0x30] sm:$0xf]
      %v283 = vld [vmem:[%s257 + $0x34] sm:$0xf]
      %v284 = vld [vmem:[%s257 + $0x38] sm:$0xf]
      %v285 = vld [vmem:[%s257 + $0x3c] sm:$0xf]
      %v286 = vld [vmem:[%s257 + $0x40] sm:$0xf]
      %v287 = vld [vmem:[%s257 + $0x44] sm:$0xf]
      %v288 = vld [vmem:[%s257 + $0x48] sm:$0xf]
      %v289 = vld [vmem:[%s257 + $0x4c] sm:$0xf]
      %v290 = vld [vmem:[%s257 + $0x50] sm:$0xf]
      %v291 = vld [vmem:[%s257 + $0x54] sm:$0xf]
      %v292 = vld [vmem:[%s257 + $0x58] sm:$0xf]
      %v293 = vld [vmem:[%s257 + $0x5c] sm:$0xf]
      %v294 = vld [vmem:[%s257 + $0x60] sm:$0xf]
      %v295 = vld [vmem:[%s257 + $0x64] sm:$0xf]
      %v296 = vld [vmem:[%s257 + $0x68] sm:$0xf]
      %v297 = vld [vmem:[%s257 + $0x6c] sm:$0xf]
      %v298 = vld [vmem:[%s257 + $0x70] sm:$0xf]
      %v299 = vld [vmem:[%s257 + $0x74] sm:$0xf]
      %v300 = vld [vmem:[%s257 + $0x78] sm:$0xf]
      %v301 = vld [vmem:[%s257 + $0x7c] sm:$0xf]
      %v302 = vunpack.c.l.bf16 %v270
      %v303 = vunpack.c.l.bf16 %v271
      %v304 = vunpack.c.l.bf16 %v272
      %v305 = vunpack.c.l.bf16 %v273
      %v306 = vunpack.c.l.bf16 %v274
      %v307 = vunpack.c.l.bf16 %v275
      %v308 = vunpack.c.l.bf16 %v276
      %v309 = vunpack.c.l.bf16 %v277
      %v310 = vunpack.c.l.bf16 %v278
      %v311 = vunpack.c.l.bf16 %v279
      %v312 = vunpack.c.l.bf16 %v280
      %v313 = vunpack.c.l.bf16 %v281
      %v314 = vunpack.c.l.bf16 %v282
      %v315 = vunpack.c.l.bf16 %v283
      %v316 = vunpack.c.l.bf16 %v284
      %v317 = vunpack.c.l.bf16 %v285
      %v318 = vunpack.c.l.bf16 %v286
      %v319 = vunpack.c.l.bf16 %v287
      %v320 = vunpack.c.l.bf16 %v288
      %v321 = vunpack.c.l.bf16 %v289
      %v322 = vunpack.c.l.bf16 %v290
      %v323 = vunpack.c.l.bf16 %v291
      %v324 = vunpack.c.l.bf16 %v292
      %v325 = vunpack.c.l.bf16 %v293
      %v326 = vunpack.c.l.bf16 %v294
      %v327 = vunpack.c.l.bf16 %v295
      %v328 = vunpack.c.l.bf16 %v296
      %v329 = vunpack.c.l.bf16 %v297
      %v330 = vunpack.c.l.bf16 %v298
      %v331 = vunpack.c.l.bf16 %v299
      %v332 = vunpack.c.l.bf16 %v300
      %v333 = vunpack.c.l.bf16 %v301
      %v334 = vld [vmem:[%s1] sm:$0x1]
      %v336 = vperm.slane %v334, 0
      %v338 = vmul.f32 %v302, %v336
      %v339 = vmul.f32 %v303, %v336
      %v340 = vmul.f32 %v304, %v336
      %v341 = vmul.f32 %v305, %v336
      %v342 = vmul.f32 %v306, %v336
      %v343 = vmul.f32 %v307, %v336
      %v344 = vmul.f32 %v308, %v336
      %v345 = vmul.f32 %v309, %v336
      %v346 = vmul.f32 %v310, %v336
      %v347 = vmul.f32 %v311, %v336
      %v348 = vmul.f32 %v312, %v336
      %v349 = vmul.f32 %v313, %v336
      %v350 = vmul.f32 %v314, %v336
      %v351 = vmul.f32 %v315, %v336
      %v352 = vmul.f32 %v316, %v336
      %v353 = vmul.f32 %v317, %v336
      %v354 = vmul.f32 %v318, %v336
      %v355 = vmul.f32 %v319, %v336
      %v356 = vmul.f32 %v320, %v336
      %v357 = vmul.f32 %v321, %v336
      %v358 = vmul.f32 %v322, %v336
      %v359 = vmul.f32 %v323, %v336
      %v360 = vmul.f32 %v324, %v336
      %v361 = vmul.f32 %v325, %v336
      %v362 = vmul.f32 %v326, %v336
      %v363 = vmul.f32 %v327, %v336
      %v364 = vmul.f32 %v328, %v336
      %v365 = vmul.f32 %v329, %v336
      %v366 = vmul.f32 %v330, %v336
      %v367 = vmul.f32 %v331, %v336
      %v368 = vmul.f32 %v332, %v336
      %v369 = vmul.f32 %v333, %v336
      %v370 = vld [vmem:[%s2] sm:$0x1]
      %v372 = vperm.slane %v370, 0
      %v374 = vadd.f32 %v338, %v372
      %v375 = vadd.f32 %v339, %v372
      %v376 = vadd.f32 %v340, %v372
      %v377 = vadd.f32 %v341, %v372
      %v378 = vadd.f32 %v342, %v372
      %v379 = vadd.f32 %v343, %v372
      %v380 = vadd.f32 %v344, %v372
      %v381 = vadd.f32 %v345, %v372
      %v382 = vadd.f32 %v346, %v372
      %v383 = vadd.f32 %v347, %v372
      %v384 = vadd.f32 %v348, %v372
      %v385 = vadd.f32 %v349, %v372
      %v386 = vadd.f32 %v350, %v372
      %v387 = vadd.f32 %v351, %v372
      %v388 = vadd.f32 %v352, %v372
      %v389 = vadd.f32 %v353, %v372
      %v390 = vadd.f32 %v354, %v372
      %v391 = vadd.f32 %v355, %v372
      %v392 = vadd.f32 %v356, %v372
      %v393 = vadd.f32 %v357, %v372
      %v394 = vadd.f32 %v358, %v372
      %v395 = vadd.f32 %v359, %v372
      %v396 = vadd.f32 %v360, %v372
      %v397 = vadd.f32 %v361, %v372
      %v398 = vadd.f32 %v362, %v372
      %v399 = vadd.f32 %v363, %v372
      %v400 = vadd.f32 %v364, %v372
      %v401 = vadd.f32 %v365, %v372
      %v402 = vadd.f32 %v366, %v372
      %v403 = vadd.f32 %v367, %v372
      %v404 = vadd.f32 %v368, %v372
      %v405 = vadd.f32 %v369, %v372
      %v406 = vmax.f32 %v374, 0.0
      %v407 = vmax.f32 %v375, 0.0
      %v408 = vmax.f32 %v376, 0.0
      %v409 = vmax.f32 %v377, 0.0
      %v410 = vmax.f32 %v378, 0.0
      %v411 = vmax.f32 %v379, 0.0
      %v412 = vmax.f32 %v380, 0.0
      %v413 = vmax.f32 %v381, 0.0
      %v414 = vmax.f32 %v382, 0.0
      %v415 = vmax.f32 %v383, 0.0
      %v416 = vmax.f32 %v384, 0.0
      %v417 = vmax.f32 %v385, 0.0
      %v418 = vmax.f32 %v386, 0.0
      %v419 = vmax.f32 %v387, 0.0
      %v420 = vmax.f32 %v388, 0.0
      %v421 = vmax.f32 %v389, 0.0
      %v422 = vmax.f32 %v390, 0.0
      %v423 = vmax.f32 %v391, 0.0
      %v424 = vmax.f32 %v392, 0.0
      %v425 = vmax.f32 %v393, 0.0
      %v426 = vmax.f32 %v394, 0.0
      %v427 = vmax.f32 %v395, 0.0
      %v428 = vmax.f32 %v396, 0.0
      %v429 = vmax.f32 %v397, 0.0
      %v430 = vmax.f32 %v398, 0.0
      %v431 = vmax.f32 %v399, 0.0
      %v432 = vmax.f32 %v400, 0.0
      %v433 = vmax.f32 %v401, 0.0
      %v434 = vmax.f32 %v402, 0.0
      %v435 = vmax.f32 %v403, 0.0
      %v436 = vmax.f32 %v404, 0.0
      %v437 = vmax.f32 %v405, 0.0
      %v438 = vpack.c.bf16 %v406, %v406
      %v439 = vpack.c.bf16 %v407, %v407
      %v440 = vpack.c.bf16 %v408, %v408
      %v441 = vpack.c.bf16 %v409, %v409
      %v442 = vpack.c.bf16 %v410, %v410
      %v443 = vpack.c.bf16 %v411, %v411
      %v444 = vpack.c.bf16 %v412, %v412
      %v445 = vpack.c.bf16 %v413, %v413
      %v446 = vpack.c.bf16 %v414, %v414
      %v447 = vpack.c.bf16 %v415, %v415
      %v448 = vpack.c.bf16 %v416, %v416
      %v449 = vpack.c.bf16 %v417, %v417
      %v450 = vpack.c.bf16 %v418, %v418
      %v451 = vpack.c.bf16 %v419, %v419
      %v452 = vpack.c.bf16 %v420, %v420
      %v453 = vpack.c.bf16 %v421, %v421
      %v454 = vpack.c.bf16 %v422, %v422
      %v455 = vpack.c.bf16 %v423, %v423
      %v456 = vpack.c.bf16 %v424, %v424
      %v457 = vpack.c.bf16 %v425, %v425
      %v458 = vpack.c.bf16 %v426, %v426
      %v459 = vpack.c.bf16 %v427, %v427
      %v460 = vpack.c.bf16 %v428, %v428
      %v461 = vpack.c.bf16 %v429, %v429
      %v462 = vpack.c.bf16 %v430, %v430
      %v463 = vpack.c.bf16 %v431, %v431
      %v464 = vpack.c.bf16 %v432, %v432
      %v465 = vpack.c.bf16 %v433, %v433
      %v466 = vpack.c.bf16 %v434, %v434
      %v467 = vpack.c.bf16 %v435, %v435
      %v468 = vpack.c.bf16 %v436, %v436
      %v469 = vpack.c.bf16 %v437, %v437
      %v502 = vunpack.c.l.b16 %v438
      %v503 = vunpack.c.l.b16 %v439
      %v504 = vunpack.c.l.b16 %v440
      %v505 = vunpack.c.l.b16 %v441
      %v506 = vunpack.c.l.b16 %v442
      %v507 = vunpack.c.l.b16 %v443
      %v508 = vunpack.c.l.b16 %v444
      %v509 = vunpack.c.l.b16 %v445
      %v510 = vunpack.c.l.b16 %v446
      %v511 = vunpack.c.l.b16 %v447
      %v512 = vunpack.c.l.b16 %v448
      %v513 = vunpack.c.l.b16 %v449
      %v514 = vunpack.c.l.b16 %v450
      %v515 = vunpack.c.l.b16 %v451
      %v516 = vunpack.c.l.b16 %v452
      %v517 = vunpack.c.l.b16 %v453
      %v518 = vunpack.c.l.b16 %v454
      %v519 = vunpack.c.l.b16 %v455
      %v520 = vunpack.c.l.b16 %v456
      %v521 = vunpack.c.l.b16 %v457
      %v522 = vunpack.c.l.b16 %v458
      %v523 = vunpack.c.l.b16 %v459
      %v524 = vunpack.c.l.b16 %v460
      %v525 = vunpack.c.l.b16 %v461
      %v526 = vunpack.c.l.b16 %v462
      %v527 = vunpack.c.l.b16 %v463
      %v528 = vunpack.c.l.b16 %v464
      %v529 = vunpack.c.l.b16 %v465
      %v530 = vunpack.c.l.b16 %v466
      %v531 = vunpack.c.l.b16 %v467
      %v532 = vunpack.c.l.b16 %v468
      %v533 = vunpack.c.l.b16 %v469
      %v534 = vpack.c.b16 %v503, %v502
      %v535 = vpack.c.b16 %v505, %v504
      %v536 = vpack.c.b16 %v507, %v506
      %v537 = vpack.c.b16 %v509, %v508
      %v538 = vpack.c.b16 %v511, %v510
      %v539 = vpack.c.b16 %v513, %v512
      %v540 = vpack.c.b16 %v515, %v514
      %v541 = vpack.c.b16 %v517, %v516
      %v542 = vpack.c.b16 %v519, %v518
      %v543 = vpack.c.b16 %v521, %v520
      %v544 = vpack.c.b16 %v523, %v522
      %v545 = vpack.c.b16 %v525, %v524
      %v546 = vpack.c.b16 %v527, %v526
      %v547 = vpack.c.b16 %v529, %v528
      %v548 = vpack.c.b16 %v531, %v530
      %v549 = vpack.c.b16 %v533, %v532
      %v567 = vshrl.u32 0, 16
      %v569 = vrot.slane %v567, 7
      %v570 = vshll.u32 0, 16
      %v572 = vor.u32 %v569, %v570
      %v574 = vshrl.u32 %v534, 16
      %v576 = vrot.slane %v574, 7
      %v577 = vshll.u32 %v534, 16
      %v579 = vor.u32 %v576, %v577
      %v581 = vshrl.u32 %v535, 16
      %v583 = vrot.slane %v581, 7
      %v584 = vshll.u32 %v535, 16
      %v586 = vor.u32 %v583, %v584
      %v588 = vshrl.u32 %v536, 16
      %v590 = vrot.slane %v588, 7
      %v591 = vshll.u32 %v536, 16
      %v593 = vor.u32 %v590, %v591
      %v595 = vshrl.u32 %v537, 16
      %v597 = vrot.slane %v595, 7
      %v598 = vshll.u32 %v537, 16
      %v600 = vor.u32 %v597, %v598
      %v602 = vshrl.u32 %v538, 16
      %v604 = vrot.slane %v602, 7
      %v605 = vshll.u32 %v538, 16
      %v607 = vor.u32 %v604, %v605
      %v609 = vshrl.u32 %v539, 16
      %v611 = vrot.slane %v609, 7
      %v612 = vshll.u32 %v539, 16
      %v614 = vor.u32 %v611, %v612
      %v616 = vshrl.u32 %v540, 16
      %v618 = vrot.slane %v616, 7
      %v619 = vshll.u32 %v540, 16
      %v621 = vor.u32 %v618, %v619
      %v623 = vshrl.u32 %v541, 16
      %v625 = vrot.slane %v623, 7
      %v626 = vshll.u32 %v541, 16
      %v628 = vor.u32 %v625, %v626
      %v630 = vshrl.u32 %v542, 16
      %v632 = vrot.slane %v630, 7
      %v633 = vshll.u32 %v542, 16
      %v635 = vor.u32 %v632, %v633
      %v637 = vshrl.u32 %v543, 16
      %v639 = vrot.slane %v637, 7
      %v640 = vshll.u32 %v543, 16
      %v642 = vor.u32 %v639, %v640
      %v644 = vshrl.u32 %v544, 16
      %v646 = vrot.slane %v644, 7
      %v647 = vshll.u32 %v544, 16
      %v649 = vor.u32 %v646, %v647
      %v651 = vshrl.u32 %v545, 16
      %v653 = vrot.slane %v651, 7
      %v654 = vshll.u32 %v545, 16
      %v656 = vor.u32 %v653, %v654
      %v658 = vshrl.u32 %v546, 16
      %v660 = vrot.slane %v658, 7
      %v661 = vshll.u32 %v546, 16
      %v663 = vor.u32 %v660, %v661
      %v665 = vshrl.u32 %v547, 16
      %v667 = vrot.slane %v665, 7
      %v668 = vshll.u32 %v547, 16
      %v670 = vor.u32 %v667, %v668
      %v672 = vshrl.u32 %v548, 16
      %v674 = vrot.slane %v672, 7
      %v675 = vshll.u32 %v548, 16
      %v677 = vor.u32 %v674, %v675
      %v679 = vshrl.u32 %v549, 16
      %v681 = vrot.slane %v679, 7
      %v682 = vshll.u32 %v549, 16
      %v684 = vor.u32 %v681, %v682
      %vm702 = vcmask 1040384
      %vm703 = vsmask.f32 256
      %vm704 = vmand %vm702, %vm703
      %v705 = vsel %vm704, 0, %v572
      %v706 = vsel %vm704, 0, %v579
      %v707 = vsel %vm704, 0, %v586
      %v708 = vsel %vm704, 0, %v593
      %v709 = vsel %vm704, 0, %v600
      %v710 = vsel %vm704, 0, %v607
      %v711 = vsel %vm704, 0, %v614
      %v712 = vsel %vm704, 0, %v621
      %v713 = vsel %vm704, 0, %v628
      %v714 = vsel %vm704, 0, %v635
      %v715 = vsel %vm704, 0, %v642
      %v716 = vsel %vm704, 0, %v649
      %v717 = vsel %vm704, 0, %v656
      %v718 = vsel %vm704, 0, %v663
      %v719 = vsel %vm704, 0, %v670
      %v720 = vsel %vm704, 0, %v677
      %v721 = vsel %vm704, 0, %v684
      %v722 = vrot.slane %v570, 1
      %v723 = vor.u32 %v567, %v722
      %v724 = vrot.slane %v577, 1
      %v725 = vor.u32 %v574, %v724
      %v726 = vrot.slane %v584, 1
      %v727 = vor.u32 %v581, %v726
      %v728 = vrot.slane %v591, 1
      %v729 = vor.u32 %v588, %v728
      %v730 = vrot.slane %v598, 1
      %v731 = vor.u32 %v595, %v730
      %v732 = vrot.slane %v605, 1
      %v733 = vor.u32 %v602, %v732
      %v734 = vrot.slane %v612, 1
      %v735 = vor.u32 %v609, %v734
      %v736 = vrot.slane %v619, 1
      %v737 = vor.u32 %v616, %v736
      %v738 = vrot.slane %v626, 1
      %v739 = vor.u32 %v623, %v738
      %v740 = vrot.slane %v633, 1
      %v741 = vor.u32 %v630, %v740
      %v742 = vrot.slane %v640, 1
      %v743 = vor.u32 %v637, %v742
      %v744 = vrot.slane %v647, 1
      %v745 = vor.u32 %v644, %v744
      %v746 = vrot.slane %v654, 1
      %v747 = vor.u32 %v651, %v746
      %v748 = vrot.slane %v661, 1
      %v749 = vor.u32 %v658, %v748
      %v750 = vrot.slane %v668, 1
      %v751 = vor.u32 %v665, %v750
      %v752 = vrot.slane %v675, 1
      %v753 = vor.u32 %v672, %v752
      %v754 = vrot.slane %v682, 1
      %v755 = vor.u32 %v679, %v754
      %vm773 = vcmask 1047552
      %vm774 = vsmask.f32 7424
      %vm775 = vmand %vm773, %vm774
      %v776 = vsel %vm775, %v723, 0
      %v777 = vsel %vm775, %v725, 0
      %v778 = vsel %vm775, %v727, 0
      %v779 = vsel %vm775, %v729, 0
      %v780 = vsel %vm775, %v731, 0
      %v781 = vsel %vm775, %v733, 0
      %v782 = vsel %vm775, %v735, 0
      %v783 = vsel %vm775, %v737, 0
      %v784 = vsel %vm775, %v739, 0
      %v785 = vsel %vm775, %v741, 0
      %v786 = vsel %vm775, %v743, 0
      %v787 = vsel %vm775, %v745, 0
      %v788 = vsel %vm775, %v747, 0
      %v789 = vsel %vm775, %v749, 0
      %v790 = vsel %vm775, %v751, 0
      %v791 = vsel %vm775, %v753, 0
      %v792 = vsel %vm775, %v755, 0
      %v793 = vld [vmem:[%s3] sm:$0xf]
      %v794 = vld [vmem:[%s3 + $0x4] sm:$0xf]
      %v795 = vld [vmem:[%s3 + $0x8] sm:$0xf]
      %v796 = vld [vmem:[%s3 + $0xc] sm:$0xf]
      %v797 = vld [vmem:[%s3 + $0x10] sm:$0xf]
      %v798 = vld [vmem:[%s3 + $0x14] sm:$0xf]
      %v799 = vld [vmem:[%s3 + $0x18] sm:$0xf]
      %v800 = vld [vmem:[%s3 + $0x1c] sm:$0xf]
      %v801 = vld [vmem:[%s3 + $0x20] sm:$0xf]
      %v802 = vld [vmem:[%s3 + $0x24] sm:$0xf]
      %v803 = vld [vmem:[%s3 + $0x28] sm:$0xf]
      %v804 = vld [vmem:[%s3 + $0x2c] sm:$0xf]
      %v805 = vld [vmem:[%s3 + $0x30] sm:$0xf]
      %v806 = vld [vmem:[%s3 + $0x34] sm:$0xf]
      %v807 = vld [vmem:[%s3 + $0x38] sm:$0xf]
      %v808 = vld [vmem:[%s3 + $0x3c] sm:$0xf]
      %v809 = vld [vmem:[%s3 + $0x40] sm:$0xf]
      %v810 = vld [vmem:[%s3 + $0x44] sm:$0xf]
      %v811 = vld [vmem:[%s3 + $0x48] sm:$0xf]
      %v812 = vld [vmem:[%s3 + $0x4c] sm:$0xf]
      %v813 = vld [vmem:[%s3 + $0x50] sm:$0xf]
      %v814 = vld [vmem:[%s3 + $0x54] sm:$0xf]
      %v815 = vld [vmem:[%s3 + $0x58] sm:$0xf]
      %v816 = vld [vmem:[%s3 + $0x5c] sm:$0xf]
      %v817 = vld [vmem:[%s3 + $0x60] sm:$0xf]
      %v818 = vld [vmem:[%s3 + $0x64] sm:$0xf]
      %v819 = vld [vmem:[%s3 + $0x68] sm:$0xf]
      %v820 = vld [vmem:[%s3 + $0x6c] sm:$0xf]
      %v821 = vld [vmem:[%s3 + $0x70] sm:$0xf]
      %v822 = vld [vmem:[%s3 + $0x74] sm:$0xf]
      %v823 = vld [vmem:[%s3 + $0x78] sm:$0xf]
      %v824 = vld [vmem:[%s3 + $0x7c] sm:$0xf]
      %v825 = vld [vmem:[%s3 + $0x80] sm:$0xf]
      %v826 = vld [vmem:[%s3 + $0x84] sm:$0xf]
      %v827 = vld [vmem:[%s3 + $0x88] sm:$0xf]
      %v828 = vld [vmem:[%s3 + $0x8c] sm:$0xf]
      %v829 = vld [vmem:[%s3 + $0x90] sm:$0xf]
      %v830 = vld [vmem:[%s3 + $0x94] sm:$0xf]
      %v831 = vld [vmem:[%s3 + $0x98] sm:$0xf]
      %v832 = vld [vmem:[%s3 + $0x9c] sm:$0xf]
      %v833 = vld [vmem:[%s3 + $0xa0] sm:$0xf]
      %v834 = vld [vmem:[%s3 + $0xa4] sm:$0xf]
      %v835 = vld [vmem:[%s3 + $0xa8] sm:$0xf]
      %v836 = vld [vmem:[%s3 + $0xac] sm:$0xf]
      %v837 = vld [vmem:[%s3 + $0xb0] sm:$0xf]
      %v838 = vld [vmem:[%s3 + $0xb4] sm:$0xf]
      %v839 = vld [vmem:[%s3 + $0xb8] sm:$0xf]
      %v840 = vld [vmem:[%s3 + $0xbc] sm:$0xf]
      %v841 = vld [vmem:[%s3 + $0xc0] sm:$0xf]
      %v842 = vld [vmem:[%s3 + $0xc4] sm:$0xf]
      %v843 = vld [vmem:[%s3 + $0xc8] sm:$0xf]
      %v844 = vld [vmem:[%s3 + $0xcc] sm:$0xf]
      %v845 = vld [vmem:[%s3 + $0xd0] sm:$0xf]
      %v846 = vld [vmem:[%s3 + $0xd4] sm:$0xf]
      %v847 = vld [vmem:[%s3 + $0xd8] sm:$0xf]
      %v848 = vld [vmem:[%s3 + $0xdc] sm:$0xf]
      %v849 = vld [vmem:[%s3 + $0xe0] sm:$0xf]
      %v850 = vld [vmem:[%s3 + $0xe4] sm:$0xf]
      %v851 = vld [vmem:[%s3 + $0xe8] sm:$0xf]
      %v852 = vld [vmem:[%s3 + $0xec] sm:$0xf]
      %v853 = vld [vmem:[%s3 + $0xf0] sm:$0xf]
      %v854 = vld [vmem:[%s3 + $0xf4] sm:$0xf]
      %v855 = vld [vmem:[%s3 + $0xf8] sm:$0xf]
      %v856 = vld [vmem:[%s3 + $0xfc] sm:$0xf]
      %v857 = vld [vmem:[%s3 + $0x100] sm:$0xf]
      %v858 = vld [vmem:[%s3 + $0x104] sm:$0xf]
      %v859 = vld [vmem:[%s3 + $0x108] sm:$0xf]
      %v860 = vld [vmem:[%s3 + $0x10c] sm:$0xf]
      %v861 = vld [vmem:[%s3 + $0x110] sm:$0xf]
      %v862 = vld [vmem:[%s3 + $0x114] sm:$0xf]
      %v863 = vld [vmem:[%s3 + $0x118] sm:$0xf]
      %v864 = vld [vmem:[%s3 + $0x11c] sm:$0xf]
      %v865 = vld [vmem:[%s3 + $0x120] sm:$0xf]
      %v866 = vld [vmem:[%s3 + $0x124] sm:$0xf]
      %v867 = vld [vmem:[%s3 + $0x128] sm:$0xf]
      %v868 = vld [vmem:[%s3 + $0x12c] sm:$0xf]
      %v869 = vld [vmem:[%s3 + $0x130] sm:$0xf]
      %v870 = vld [vmem:[%s3 + $0x134] sm:$0xf]
      %v871 = vld [vmem:[%s3 + $0x138] sm:$0xf]
      %v872 = vld [vmem:[%s3 + $0x13c] sm:$0xf]
      %v873 = vld [vmem:[%s3 + $0x140] sm:$0xf]
      %v874 = vld [vmem:[%s3 + $0x144] sm:$0xf]
      %v875 = vld [vmem:[%s3 + $0x148] sm:$0xf]
      %v876 = vld [vmem:[%s3 + $0x14c] sm:$0xf]
      %v877 = vld [vmem:[%s3 + $0x150] sm:$0xf]
      %v878 = vld [vmem:[%s3 + $0x154] sm:$0xf]
      %v879 = vld [vmem:[%s3 + $0x158] sm:$0xf]
      %v880 = vld [vmem:[%s3 + $0x15c] sm:$0xf]
      %v881 = vld [vmem:[%s3 + $0x160] sm:$0xf]
      %v882 = vld [vmem:[%s3 + $0x164] sm:$0xf]
      %v883 = vld [vmem:[%s3 + $0x168] sm:$0xf]
      %v884 = vld [vmem:[%s3 + $0x16c] sm:$0xf]
      %v885 = vld [vmem:[%s3 + $0x170] sm:$0xf]
      %v886 = vld [vmem:[%s3 + $0x174] sm:$0xf]
      %v887 = vld [vmem:[%s3 + $0x178] sm:$0xf]
      %v888 = vld [vmem:[%s3 + $0x17c] sm:$0xf]
      %v937 = vunpack.c.l.b16 %v841
      %v938 = vunpack.c.l.b16 %v842
      %v939 = vunpack.c.l.b16 %v843
      %v940 = vunpack.c.l.b16 %v844
      %v941 = vunpack.c.l.b16 %v845
      %v942 = vunpack.c.l.b16 %v846
      %v943 = vunpack.c.l.b16 %v847
      %v944 = vunpack.c.l.b16 %v848
      %v945 = vunpack.c.l.b16 %v849
      %v946 = vunpack.c.l.b16 %v850
      %v947 = vunpack.c.l.b16 %v851
      %v948 = vunpack.c.l.b16 %v852
      %v949 = vunpack.c.l.b16 %v853
      %v950 = vunpack.c.l.b16 %v854
      %v951 = vunpack.c.l.b16 %v855
      %v952 = vunpack.c.l.b16 %v856
      %v953 = vunpack.c.l.b16 %v857
      %v954 = vunpack.c.l.b16 %v858
      %v955 = vunpack.c.l.b16 %v859
      %v956 = vunpack.c.l.b16 %v860
      %v957 = vunpack.c.l.b16 %v861
      %v958 = vunpack.c.l.b16 %v862
      %v959 = vunpack.c.l.b16 %v863
      %v960 = vunpack.c.l.b16 %v864
      %v961 = vunpack.c.l.b16 %v865
      %v962 = vunpack.c.l.b16 %v866
      %v963 = vunpack.c.l.b16 %v867
      %v964 = vunpack.c.l.b16 %v868
      %v965 = vunpack.c.l.b16 %v869
      %v966 = vunpack.c.l.b16 %v870
      %v967 = vunpack.c.l.b16 %v871
      %v968 = vunpack.c.l.b16 %v872
      %v969 = vunpack.c.l.b16 %v873
      %v970 = vunpack.c.l.b16 %v874
      %v971 = vunpack.c.l.b16 %v875
      %v972 = vunpack.c.l.b16 %v876
      %v973 = vunpack.c.l.b16 %v877
      %v974 = vunpack.c.l.b16 %v878
      %v975 = vunpack.c.l.b16 %v879
      %v976 = vunpack.c.l.b16 %v880
      %v977 = vunpack.c.l.b16 %v881
      %v978 = vunpack.c.l.b16 %v882
      %v979 = vunpack.c.l.b16 %v883
      %v980 = vunpack.c.l.b16 %v884
      %v981 = vunpack.c.l.b16 %v885
      %v982 = vunpack.c.l.b16 %v886
      %v983 = vunpack.c.l.b16 %v887
      %v984 = vunpack.c.l.b16 %v888
      %v985 = vpack.c.b16 %v938, %v937
      %v986 = vpack.c.b16 %v940, %v939
      %v987 = vpack.c.b16 %v942, %v941
      %v988 = vpack.c.b16 %v944, %v943
      %v989 = vpack.c.b16 %v946, %v945
      %v990 = vpack.c.b16 %v948, %v947
      %v991 = vpack.c.b16 %v950, %v949
      %v992 = vpack.c.b16 %v952, %v951
      %v993 = vpack.c.b16 %v954, %v953
      %v994 = vpack.c.b16 %v956, %v955
      %v995 = vpack.c.b16 %v958, %v957
      %v996 = vpack.c.b16 %v960, %v959
      %v997 = vpack.c.b16 %v962, %v961
      %v998 = vpack.c.b16 %v964, %v963
      %v999 = vpack.c.b16 %v966, %v965
      %v1000 = vpack.c.b16 %v968, %v967
      %v1001 = vpack.c.b16 %v970, %v969
      %v1002 = vpack.c.b16 %v972, %v971
      %v1003 = vpack.c.b16 %v974, %v973
      %v1004 = vpack.c.b16 %v976, %v975
      %v1005 = vpack.c.b16 %v978, %v977
      %v1006 = vpack.c.b16 %v980, %v979
      %v1007 = vpack.c.b16 %v982, %v981
      %v1008 = vpack.c.b16 %v984, %v983
      %1033 = vmatpush.bf16.msra.mxu0 %v992
      %1034 = vmatpush.bf16.msra.mxu0 %v991
      %1035 = vmatpush.bf16.msra.mxu0 %v990
      %1036 = vmatpush.bf16.msra.mxu0 %v989
      %1037 = vmatpush.bf16.msra.mxu0 %v988
      %1038 = vmatpush.bf16.msra.mxu0 %v987
      %1039 = vmatpush.bf16.msra.mxu0 %v986
      %1040 = vmatpush.bf16.msra.mxu0 %v985
      %1041 = vmatmul.bf16.gmra.mxu0 %v706
      %v1042 = vpop.f32.mrf.mxu0
      %v1043 = vadd.f32 0.0, %v1042
      %v1044 = vpop.f32.mrf.mxu0
      %v1045 = vadd.f32 0.0, %v1044
      %1046 = vmatmul.bf16.gmra.mxu0 %v707
      %v1047 = vpop.f32.mrf.mxu0
      %v1048 = vadd.f32 0.0, %v1047
      %v1049 = vpop.f32.mrf.mxu0
      %v1050 = vadd.f32 0.0, %v1049
      %1051 = vmatmul.bf16.gmra.mxu0 %v708
      %v1052 = vpop.f32.mrf.mxu0
      %v1053 = vadd.f32 0.0, %v1052
      %v1054 = vpop.f32.mrf.mxu0
      %v1055 = vadd.f32 0.0, %v1054
      %1056 = vmatmul.bf16.gmra.mxu0 %v709
      %v1057 = vpop.f32.mrf.mxu0
      %v1058 = vadd.f32 0.0, %v1057
      %v1059 = vpop.f32.mrf.mxu0
      %v1060 = vadd.f32 0.0, %v1059
      %1061 = vmatmul.bf16.gmra.mxu0 %v710
      %v1062 = vpop.f32.mrf.mxu0
      %v1063 = vadd.f32 0.0, %v1062
      %v1064 = vpop.f32.mrf.mxu0
      %v1065 = vadd.f32 0.0, %v1064
      %1066 = vmatmul.bf16.gmra.mxu0 %v711
      %v1067 = vpop.f32.mrf.mxu0
      %v1068 = vadd.f32 0.0, %v1067
      %v1069 = vpop.f32.mrf.mxu0
      %v1070 = vadd.f32 0.0, %v1069
      %1071 = vmatmul.bf16.gmra.mxu0 %v712
      %v1072 = vpop.f32.mrf.mxu0
      %v1073 = vadd.f32 0.0, %v1072
      %v1074 = vpop.f32.mrf.mxu0
      %v1075 = vadd.f32 0.0, %v1074
      %1076 = vmatmul.bf16.gmra.mxu0 %v713
      %v1077 = vpop.f32.mrf.mxu0
      %v1078 = vadd.f32 0.0, %v1077
      %v1079 = vpop.f32.mrf.mxu0
      %v1080 = vadd.f32 0.0, %v1079
      %1081 = vmatmul.bf16.gmra.mxu0 %v714
      %v1082 = vpop.f32.mrf.mxu0
      %v1083 = vadd.f32 0.0, %v1082
      %v1084 = vpop.f32.mrf.mxu0
      %v1085 = vadd.f32 0.0, %v1084
      %1086 = vmatmul.bf16.gmra.mxu0 %v715
      %v1087 = vpop.f32.mrf.mxu0
      %v1088 = vadd.f32 0.0, %v1087
      %v1089 = vpop.f32.mrf.mxu0
      %v1090 = vadd.f32 0.0, %v1089
      %1091 = vmatmul.bf16.gmra.mxu0 %v716
      %v1092 = vpop.f32.mrf.mxu0
      %v1093 = vadd.f32 0.0, %v1092
      %v1094 = vpop.f32.mrf.mxu0
      %v1095 = vadd.f32 0.0, %v1094
      %1096 = vmatmul.bf16.gmra.mxu0 %v717
      %v1097 = vpop.f32.mrf.mxu0
      %v1098 = vadd.f32 0.0, %v1097
      %v1099 = vpop.f32.mrf.mxu0
      %v1100 = vadd.f32 0.0, %v1099
      %1101 = vmatmul.bf16.gmra.mxu0 %v718
      %v1102 = vpop.f32.mrf.mxu0
      %v1103 = vadd.f32 0.0, %v1102
      %v1104 = vpop.f32.mrf.mxu0
      %v1105 = vadd.f32 0.0, %v1104
      %1106 = vmatmul.bf16.gmra.mxu0 %v719
      %v1107 = vpop.f32.mrf.mxu0
      %v1108 = vadd.f32 0.0, %v1107
      %v1109 = vpop.f32.mrf.mxu0
      %v1110 = vadd.f32 0.0, %v1109
      %1111 = vmatmul.bf16.gmra.mxu0 %v720
      %v1112 = vpop.f32.mrf.mxu0
      %v1113 = vadd.f32 0.0, %v1112
      %v1114 = vpop.f32.mrf.mxu0
      %v1115 = vadd.f32 0.0, %v1114
      %1116 = vmatmul.bf16.gmra.mxu0 %v721
      %v1117 = vpop.f32.mrf.mxu0
      %v1118 = vadd.f32 0.0, %v1117
      %v1119 = vpop.f32.mrf.mxu0
      %v1120 = vadd.f32 0.0, %v1119
      %1121 = vdwg.mxu0
      %1122 = vmatpush.bf16.msra.mxu0 %v1000
      %1123 = vmatpush.bf16.msra.mxu0 %v999
      %1124 = vmatpush.bf16.msra.mxu0 %v998
      %1125 = vmatpush.bf16.msra.mxu0 %v997
      %1126 = vmatpush.bf16.msra.mxu0 %v996
      %1127 = vmatpush.bf16.msra.mxu0 %v995
      %1128 = vmatpush.bf16.msra.mxu0 %v994
      %1129 = vmatpush.bf16.msra.mxu0 %v993
      %1130 = vmatmul.bf16.gmra.mxu0 %v534
      %v1131 = vpop.f32.mrf.mxu0
      %v1132 = vadd.f32 %v1043, %v1131
      %v1133 = vpop.f32.mrf.mxu0
      %v1134 = vadd.f32 %v1045, %v1133
      %1135 = vmatmul.bf16.gmra.mxu0 %v535
      %v1136 = vpop.f32.mrf.mxu0
      %v1137 = vadd.f32 %v1048, %v1136
      %v1138 = vpop.f32.mrf.mxu0
      %v1139 = vadd.f32 %v1050, %v1138
      %1140 = vmatmul.bf16.gmra.mxu0 %v536
      %v1141 = vpop.f32.mrf.mxu0
      %v1142 = vadd.f32 %v1053, %v1141
      %v1143 = vpop.f32.mrf.mxu0
      %v1144 = vadd.f32 %v1055, %v1143
      %1145 = vmatmul.bf16.gmra.mxu0 %v537
      %v1146 = vpop.f32.mrf.mxu0
      %v1147 = vadd.f32 %v1058, %v1146
      %v1148 = vpop.f32.mrf.mxu0
      %v1149 = vadd.f32 %v1060, %v1148
      %1150 = vmatmul.bf16.gmra.mxu0 %v538
      %v1151 = vpop.f32.mrf.mxu0
      %v1152 = vadd.f32 %v1063, %v1151
      %v1153 = vpop.f32.mrf.mxu0
      %v1154 = vadd.f32 %v1065, %v1153
      %1155 = vmatmul.bf16.gmra.mxu0 %v539
      %v1156 = vpop.f32.mrf.mxu0
      %v1157 = vadd.f32 %v1068, %v1156
      %v1158 = vpop.f32.mrf.mxu0
      %v1159 = vadd.f32 %v1070, %v1158
      %1160 = vmatmul.bf16.gmra.mxu0 %v540
      %v1161 = vpop.f32.mrf.mxu0
      %v1162 = vadd.f32 %v1073, %v1161
      %v1163 = vpop.f32.mrf.mxu0
      %v1164 = vadd.f32 %v1075, %v1163
      %1165 = vmatmul.bf16.gmra.mxu0 %v541
      %v1166 = vpop.f32.mrf.mxu0
      %v1167 = vadd.f32 %v1078, %v1166
      %v1168 = vpop.f32.mrf.mxu0
      %v1169 = vadd.f32 %v1080, %v1168
      %1170 = vmatmul.bf16.gmra.mxu0 %v542
      %v1171 = vpop.f32.mrf.mxu0
      %v1172 = vadd.f32 %v1083, %v1171
      %v1173 = vpop.f32.mrf.mxu0
      %v1174 = vadd.f32 %v1085, %v1173
      %1175 = vmatmul.bf16.gmra.mxu0 %v543
      %v1176 = vpop.f32.mrf.mxu0
      %v1177 = vadd.f32 %v1088, %v1176
      %v1178 = vpop.f32.mrf.mxu0
      %v1179 = vadd.f32 %v1090, %v1178
      %1180 = vmatmul.bf16.gmra.mxu0 %v544
      %v1181 = vpop.f32.mrf.mxu0
      %v1182 = vadd.f32 %v1093, %v1181
      %v1183 = vpop.f32.mrf.mxu0
      %v1184 = vadd.f32 %v1095, %v1183
      %1185 = vmatmul.bf16.gmra.mxu0 %v545
      %v1186 = vpop.f32.mrf.mxu0
      %v1187 = vadd.f32 %v1098, %v1186
      %v1188 = vpop.f32.mrf.mxu0
      %v1189 = vadd.f32 %v1100, %v1188
      %1190 = vmatmul.bf16.gmra.mxu0 %v546
      %v1191 = vpop.f32.mrf.mxu0
      %v1192 = vadd.f32 %v1103, %v1191
      %v1193 = vpop.f32.mrf.mxu0
      %v1194 = vadd.f32 %v1105, %v1193
      %1195 = vmatmul.bf16.gmra.mxu0 %v547
      %v1196 = vpop.f32.mrf.mxu0
      %v1197 = vadd.f32 %v1108, %v1196
      %v1198 = vpop.f32.mrf.mxu0
      %v1199 = vadd.f32 %v1110, %v1198
      %1200 = vmatmul.bf16.gmra.mxu0 %v548
      %v1201 = vpop.f32.mrf.mxu0
      %v1202 = vadd.f32 %v1113, %v1201
      %v1203 = vpop.f32.mrf.mxu0
      %v1204 = vadd.f32 %v1115, %v1203
      %1205 = vmatmul.bf16.gmra.mxu0 %v549
      %v1206 = vpop.f32.mrf.mxu0
      %v1207 = vadd.f32 %v1118, %v1206
      %v1208 = vpop.f32.mrf.mxu0
      %v1209 = vadd.f32 %v1120, %v1208
      %1210 = vdwg.mxu0
      %1211 = vmatpush.bf16.msra.mxu0 %v1008
      %1212 = vmatpush.bf16.msra.mxu0 %v1007
      %1213 = vmatpush.bf16.msra.mxu0 %v1006
      %1214 = vmatpush.bf16.msra.mxu0 %v1005
      %1215 = vmatpush.bf16.msra.mxu0 %v1004
      %1216 = vmatpush.bf16.msra.mxu0 %v1003
      %1217 = vmatpush.bf16.msra.mxu0 %v1002
      %1218 = vmatpush.bf16.msra.mxu0 %v1001
      %1219 = vmatmul.bf16.gmra.mxu0 %v777
      %v1220 = vpop.f32.mrf.mxu0
      %v1221 = vadd.f32 %v1132, %v1220
      %v1222 = vpop.f32.mrf.mxu0
      %v1223 = vadd.f32 %v1134, %v1222
      %1224 = vmatmul.bf16.gmra.mxu0 %v778
      %v1225 = vpop.f32.mrf.mxu0
      %v1226 = vadd.f32 %v1137, %v1225
      %v1227 = vpop.f32.mrf.mxu0
      %v1228 = vadd.f32 %v1139, %v1227
      %1229 = vmatmul.bf16.gmra.mxu0 %v779
      %v1230 = vpop.f32.mrf.mxu0
      %v1231 = vadd.f32 %v1142, %v1230
      %v1232 = vpop.f32.mrf.mxu0
      %v1233 = vadd.f32 %v1144, %v1232
      %1234 = vmatmul.bf16.gmra.mxu0 %v780
      %v1235 = vpop.f32.mrf.mxu0
      %v1236 = vadd.f32 %v1147, %v1235
      %v1237 = vpop.f32.mrf.mxu0
      %v1238 = vadd.f32 %v1149, %v1237
      %1239 = vmatmul.bf16.gmra.mxu0 %v781
      %v1240 = vpop.f32.mrf.mxu0
      %v1241 = vadd.f32 %v1152, %v1240
      %v1242 = vpop.f32.mrf.mxu0
      %v1243 = vadd.f32 %v1154, %v1242
      %1244 = vmatmul.bf16.gmra.mxu0 %v782
      %v1245 = vpop.f32.mrf.mxu0
      %v1246 = vadd.f32 %v1157, %v1245
      %v1247 = vpop.f32.mrf.mxu0
      %v1248 = vadd.f32 %v1159, %v1247
      %1249 = vmatmul.bf16.gmra.mxu0 %v783
      %v1250 = vpop.f32.mrf.mxu0
      %v1251 = vadd.f32 %v1162, %v1250
      %v1252 = vpop.f32.mrf.mxu0
      %v1253 = vadd.f32 %v1164, %v1252
      %1254 = vmatmul.bf16.gmra.mxu0 %v784
      %v1255 = vpop.f32.mrf.mxu0
      %v1256 = vadd.f32 %v1167, %v1255
      %v1257 = vpop.f32.mrf.mxu0
      %v1258 = vadd.f32 %v1169, %v1257
      %1259 = vmatmul.bf16.gmra.mxu0 %v785
      %v1260 = vpop.f32.mrf.mxu0
      %v1261 = vadd.f32 %v1172, %v1260
      %v1262 = vpop.f32.mrf.mxu0
      %v1263 = vadd.f32 %v1174, %v1262
      %1264 = vmatmul.bf16.gmra.mxu0 %v786
      %v1265 = vpop.f32.mrf.mxu0
      %v1266 = vadd.f32 %v1177, %v1265
      %v1267 = vpop.f32.mrf.mxu0
      %v1268 = vadd.f32 %v1179, %v1267
      %1269 = vmatmul.bf16.gmra.mxu0 %v787
      %v1270 = vpop.f32.mrf.mxu0
      %v1271 = vadd.f32 %v1182, %v1270
      %v1272 = vpop.f32.mrf.mxu0
      %v1273 = vadd.f32 %v1184, %v1272
      %1274 = vmatmul.bf16.gmra.mxu0 %v788
      %v1275 = vpop.f32.mrf.mxu0
      %v1276 = vadd.f32 %v1187, %v1275
      %v1277 = vpop.f32.mrf.mxu0
      %v1278 = vadd.f32 %v1189, %v1277
      %1279 = vmatmul.bf16.gmra.mxu0 %v789
      %v1280 = vpop.f32.mrf.mxu0
      %v1281 = vadd.f32 %v1192, %v1280
      %v1282 = vpop.f32.mrf.mxu0
      %v1283 = vadd.f32 %v1194, %v1282
      %1284 = vmatmul.bf16.gmra.mxu0 %v790
      %v1285 = vpop.f32.mrf.mxu0
      %v1286 = vadd.f32 %v1197, %v1285
      %v1287 = vpop.f32.mrf.mxu0
      %v1288 = vadd.f32 %v1199, %v1287
      %1289 = vmatmul.bf16.gmra.mxu0 %v791
      %v1290 = vpop.f32.mrf.mxu0
      %v1291 = vadd.f32 %v1202, %v1290
      %v1292 = vpop.f32.mrf.mxu0
      %v1293 = vadd.f32 %v1204, %v1292
      %1294 = vmatmul.bf16.gmra.mxu0 %v792
      %v1295 = vpop.f32.mrf.mxu0
      %v1296 = vadd.f32 %v1207, %v1295
      %v1297 = vpop.f32.mrf.mxu0
      %v1298 = vadd.f32 %v1209, %v1297
      %1299 = vdwg.mxu0
      %v1348 = vunpack.c.l.b16 %v793
      %v1349 = vunpack.c.l.b16 %v794
      %v1350 = vunpack.c.l.b16 %v795
      %v1351 = vunpack.c.l.b16 %v796
      %v1352 = vunpack.c.l.b16 %v797
      %v1353 = vunpack.c.l.b16 %v798
      %v1354 = vunpack.c.l.b16 %v799
      %v1355 = vunpack.c.l.b16 %v800
      %v1356 = vunpack.c.l.b16 %v801
      %v1357 = vunpack.c.l.b16 %v802
      %v1358 = vunpack.c.l.b16 %v803
      %v1359 = vunpack.c.l.b16 %v804
      %v1360 = vunpack.c.l.b16 %v805
      %v1361 = vunpack.c.l.b16 %v806
      %v1362 = vunpack.c.l.b16 %v807
      %v1363 = vunpack.c.l.b16 %v808
      %v1364 = vunpack.c.l.b16 %v809
      %v1365 = vunpack.c.l.b16 %v810
      %v1366 = vunpack.c.l.b16 %v811
      %v1367 = vunpack.c.l.b16 %v812
      %v1368 = vunpack.c.l.b16 %v813
      %v1369 = vunpack.c.l.b16 %v814
      %v1370 = vunpack.c.l.b16 %v815
      %v1371 = vunpack.c.l.b16 %v816
      %v1372 = vunpack.c.l.b16 %v817
      %v1373 = vunpack.c.l.b16 %v818
      %v1374 = vunpack.c.l.b16 %v819
      %v1375 = vunpack.c.l.b16 %v820
      %v1376 = vunpack.c.l.b16 %v821
      %v1377 = vunpack.c.l.b16 %v822
      %v1378 = vunpack.c.l.b16 %v823
      %v1379 = vunpack.c.l.b16 %v824
      %v1380 = vunpack.c.l.b16 %v825
      %v1381 = vunpack.c.l.b16 %v826
      %v1382 = vunpack.c.l.b16 %v827
      %v1383 = vunpack.c.l.b16 %v828
      %v1384 = vunpack.c.l.b16 %v829
      %v1385 = vunpack.c.l.b16 %v830
      %v1386 = vunpack.c.l.b16 %v831
      %v1387 = vunpack.c.l.b16 %v832
      %v1388 = vunpack.c.l.b16 %v833
      %v1389 = vunpack.c.l.b16 %v834
      %v1390 = vunpack.c.l.b16 %v835
      %v1391 = vunpack.c.l.b16 %v836
      %v1392 = vunpack.c.l.b16 %v837
      %v1393 = vunpack.c.l.b16 %v838
      %v1394 = vunpack.c.l.b16 %v839
      %v1395 = vunpack.c.l.b16 %v840
      %v1396 = vpack.c.b16 %v1349, %v1348
      %v1397 = vpack.c.b16 %v1351, %v1350
      %v1398 = vpack.c.b16 %v1353, %v1352
      %v1399 = vpack.c.b16 %v1355, %v1354
      %v1400 = vpack.c.b16 %v1357, %v1356
      %v1401 = vpack.c.b16 %v1359, %v1358
      %v1402 = vpack.c.b16 %v1361, %v1360
      %v1403 = vpack.c.b16 %v1363, %v1362
      %v1404 = vpack.c.b16 %v1365, %v1364
      %v1405 = vpack.c.b16 %v1367, %v1366
      %v1406 = vpack.c.b16 %v1369, %v1368
      %v1407 = vpack.c.b16 %v1371, %v1370
      %v1408 = vpack.c.b16 %v1373, %v1372
      %v1409 = vpack.c.b16 %v1375, %v1374
      %v1410 = vpack.c.b16 %v1377, %v1376
      %v1411 = vpack.c.b16 %v1379, %v1378
      %v1412 = vpack.c.b16 %v1381, %v1380
      %v1413 = vpack.c.b16 %v1383, %v1382
      %v1414 = vpack.c.b16 %v1385, %v1384
      %v1415 = vpack.c.b16 %v1387, %v1386
      %v1416 = vpack.c.b16 %v1389, %v1388
      %v1417 = vpack.c.b16 %v1391, %v1390
      %v1418 = vpack.c.b16 %v1393, %v1392
      %v1419 = vpack.c.b16 %v1395, %v1394
      %1444 = vmatpush.bf16.msra.mxu0 %v1403
      %1445 = vmatpush.bf16.msra.mxu0 %v1402
      %1446 = vmatpush.bf16.msra.mxu0 %v1401
      %1447 = vmatpush.bf16.msra.mxu0 %v1400
      %1448 = vmatpush.bf16.msra.mxu0 %v1399
      %1449 = vmatpush.bf16.msra.mxu0 %v1398
      %1450 = vmatpush.bf16.msra.mxu0 %v1397
      %1451 = vmatpush.bf16.msra.mxu0 %v1396
      %1452 = vmatmul.bf16.gmra.mxu0 %v705
      %v1453 = vpop.f32.mrf.mxu0
      %v1454 = vadd.f32 %v1221, %v1453
      %v1455 = vpop.f32.mrf.mxu0
      %v1456 = vadd.f32 %v1223, %v1455
      %1457 = vmatmul.bf16.gmra.mxu0 %v706
      %v1458 = vpop.f32.mrf.mxu0
      %v1459 = vadd.f32 %v1226, %v1458
      %v1460 = vpop.f32.mrf.mxu0
      %v1461 = vadd.f32 %v1228, %v1460
      %1462 = vmatmul.bf16.gmra.mxu0 %v707
      %v1463 = vpop.f32.mrf.mxu0
      %v1464 = vadd.f32 %v1231, %v1463
      %v1465 = vpop.f32.mrf.mxu0
      %v1466 = vadd.f32 %v1233, %v1465
      %1467 = vmatmul.bf16.gmra.mxu0 %v708
      %v1468 = vpop.f32.mrf.mxu0
      %v1469 = vadd.f32 %v1236, %v1468
      %v1470 = vpop.f32.mrf.mxu0
      %v1471 = vadd.f32 %v1238, %v1470
      %1472 = vmatmul.bf16.gmra.mxu0 %v709
      %v1473 = vpop.f32.mrf.mxu0
      %v1474 = vadd.f32 %v1241, %v1473
      %v1475 = vpop.f32.mrf.mxu0
      %v1476 = vadd.f32 %v1243, %v1475
      %1477 = vmatmul.bf16.gmra.mxu0 %v710
      %v1478 = vpop.f32.mrf.mxu0
      %v1479 = vadd.f32 %v1246, %v1478
      %v1480 = vpop.f32.mrf.mxu0
      %v1481 = vadd.f32 %v1248, %v1480
      %1482 = vmatmul.bf16.gmra.mxu0 %v711
      %v1483 = vpop.f32.mrf.mxu0
      %v1484 = vadd.f32 %v1251, %v1483
      %v1485 = vpop.f32.mrf.mxu0
      %v1486 = vadd.f32 %v1253, %v1485
      %1487 = vmatmul.bf16.gmra.mxu0 %v712
      %v1488 = vpop.f32.mrf.mxu0
      %v1489 = vadd.f32 %v1256, %v1488
      %v1490 = vpop.f32.mrf.mxu0
      %v1491 = vadd.f32 %v1258, %v1490
      %1492 = vmatmul.bf16.gmra.mxu0 %v713
      %v1493 = vpop.f32.mrf.mxu0
      %v1494 = vadd.f32 %v1261, %v1493
      %v1495 = vpop.f32.mrf.mxu0
      %v1496 = vadd.f32 %v1263, %v1495
      %1497 = vmatmul.bf16.gmra.mxu0 %v714
      %v1498 = vpop.f32.mrf.mxu0
      %v1499 = vadd.f32 %v1266, %v1498
      %v1500 = vpop.f32.mrf.mxu0
      %v1501 = vadd.f32 %v1268, %v1500
      %1502 = vmatmul.bf16.gmra.mxu0 %v715
      %v1503 = vpop.f32.mrf.mxu0
      %v1504 = vadd.f32 %v1271, %v1503
      %v1505 = vpop.f32.mrf.mxu0
      %v1506 = vadd.f32 %v1273, %v1505
      %1507 = vmatmul.bf16.gmra.mxu0 %v716
      %v1508 = vpop.f32.mrf.mxu0
      %v1509 = vadd.f32 %v1276, %v1508
      %v1510 = vpop.f32.mrf.mxu0
      %v1511 = vadd.f32 %v1278, %v1510
      %1512 = vmatmul.bf16.gmra.mxu0 %v717
      %v1513 = vpop.f32.mrf.mxu0
      %v1514 = vadd.f32 %v1281, %v1513
      %v1515 = vpop.f32.mrf.mxu0
      %v1516 = vadd.f32 %v1283, %v1515
      %1517 = vmatmul.bf16.gmra.mxu0 %v718
      %v1518 = vpop.f32.mrf.mxu0
      %v1519 = vadd.f32 %v1286, %v1518
      %v1520 = vpop.f32.mrf.mxu0
      %v1521 = vadd.f32 %v1288, %v1520
      %1522 = vmatmul.bf16.gmra.mxu0 %v719
      %v1523 = vpop.f32.mrf.mxu0
      %v1524 = vadd.f32 %v1291, %v1523
      %v1525 = vpop.f32.mrf.mxu0
      %v1526 = vadd.f32 %v1293, %v1525
      %1527 = vmatmul.bf16.gmra.mxu0 %v720
      %v1528 = vpop.f32.mrf.mxu0
      %v1529 = vadd.f32 %v1296, %v1528
      %v1530 = vpop.f32.mrf.mxu0
      %v1531 = vadd.f32 %v1298, %v1530
      %1532 = vdwg.mxu0
      %1533 = vmatpush.bf16.msra.mxu0 %v1411
      %1534 = vmatpush.bf16.msra.mxu0 %v1410
      %1535 = vmatpush.bf16.msra.mxu0 %v1409
      %1536 = vmatpush.bf16.msra.mxu0 %v1408
      %1537 = vmatpush.bf16.msra.mxu0 %v1407
      %1538 = vmatpush.bf16.msra.mxu0 %v1406
      %1539 = vmatpush.bf16.msra.mxu0 %v1405
      %1540 = vmatpush.bf16.msra.mxu0 %v1404
      %1541 = vmatmul.bf16.gmra.mxu0 0
      %v1542 = vpop.f32.mrf.mxu0
      %v1543 = vadd.f32 %v1454, %v1542
      %v1544 = vpop.f32.mrf.mxu0
      %v1545 = vadd.f32 %v1456, %v1544
      %1546 = vmatmul.bf16.gmra.mxu0 %v534
      %v1547 = vpop.f32.mrf.mxu0
      %v1548 = vadd.f32 %v1459, %v1547
      %v1549 = vpop.f32.mrf.mxu0
      %v1550 = vadd.f32 %v1461, %v1549
      %1551 = vmatmul.bf16.gmra.mxu0 %v535
      %v1552 = vpop.f32.mrf.mxu0
      %v1553 = vadd.f32 %v1464, %v1552
      %v1554 = vpop.f32.mrf.mxu0
      %v1555 = vadd.f32 %v1466, %v1554
      %1556 = vmatmul.bf16.gmra.mxu0 %v536
      %v1557 = vpop.f32.mrf.mxu0
      %v1558 = vadd.f32 %v1469, %v1557
      %v1559 = vpop.f32.mrf.mxu0
      %v1560 = vadd.f32 %v1471, %v1559
      %1561 = vmatmul.bf16.gmra.mxu0 %v537
      %v1562 = vpop.f32.mrf.mxu0
      %v1563 = vadd.f32 %v1474, %v1562
      %v1564 = vpop.f32.mrf.mxu0
      %v1565 = vadd.f32 %v1476, %v1564
      %1566 = vmatmul.bf16.gmra.mxu0 %v538
      %v1567 = vpop.f32.mrf.mxu0
      %v1568 = vadd.f32 %v1479, %v1567
      %v1569 = vpop.f32.mrf.mxu0
      %v1570 = vadd.f32 %v1481, %v1569
      %1571 = vmatmul.bf16.gmra.mxu0 %v539
      %v1572 = vpop.f32.mrf.mxu0
      %v1573 = vadd.f32 %v1484, %v1572
      %v1574 = vpop.f32.mrf.mxu0
      %v1575 = vadd.f32 %v1486, %v1574
      %1576 = vmatmul.bf16.gmra.mxu0 %v540
      %v1577 = vpop.f32.mrf.mxu0
      %v1578 = vadd.f32 %v1489, %v1577
      %v1579 = vpop.f32.mrf.mxu0
      %v1580 = vadd.f32 %v1491, %v1579
      %1581 = vmatmul.bf16.gmra.mxu0 %v541
      %v1582 = vpop.f32.mrf.mxu0
      %v1583 = vadd.f32 %v1494, %v1582
      %v1584 = vpop.f32.mrf.mxu0
      %v1585 = vadd.f32 %v1496, %v1584
      %1586 = vmatmul.bf16.gmra.mxu0 %v542
      %v1587 = vpop.f32.mrf.mxu0
      %v1588 = vadd.f32 %v1499, %v1587
      %v1589 = vpop.f32.mrf.mxu0
      %v1590 = vadd.f32 %v1501, %v1589
      %1591 = vmatmul.bf16.gmra.mxu0 %v543
      %v1592 = vpop.f32.mrf.mxu0
      %v1593 = vadd.f32 %v1504, %v1592
      %v1594 = vpop.f32.mrf.mxu0
      %v1595 = vadd.f32 %v1506, %v1594
      %1596 = vmatmul.bf16.gmra.mxu0 %v544
      %v1597 = vpop.f32.mrf.mxu0
      %v1598 = vadd.f32 %v1509, %v1597
      %v1599 = vpop.f32.mrf.mxu0
      %v1600 = vadd.f32 %v1511, %v1599
      %1601 = vmatmul.bf16.gmra.mxu0 %v545
      %v1602 = vpop.f32.mrf.mxu0
      %v1603 = vadd.f32 %v1514, %v1602
      %v1604 = vpop.f32.mrf.mxu0
      %v1605 = vadd.f32 %v1516, %v1604
      %1606 = vmatmul.bf16.gmra.mxu0 %v546
      %v1607 = vpop.f32.mrf.mxu0
      %v1608 = vadd.f32 %v1519, %v1607
      %v1609 = vpop.f32.mrf.mxu0
      %v1610 = vadd.f32 %v1521, %v1609
      %1611 = vmatmul.bf16.gmra.mxu0 %v547
      %v1612 = vpop.f32.mrf.mxu0
      %v1613 = vadd.f32 %v1524, %v1612
      %v1614 = vpop.f32.mrf.mxu0
      %v1615 = vadd.f32 %v1526, %v1614
      %1616 = vmatmul.bf16.gmra.mxu0 %v548
      %v1617 = vpop.f32.mrf.mxu0
      %v1618 = vadd.f32 %v1529, %v1617
      %v1619 = vpop.f32.mrf.mxu0
      %v1620 = vadd.f32 %v1531, %v1619
      %1621 = vdwg.mxu0
      %1622 = vmatpush.bf16.msra.mxu0 %v1419
      %1623 = vmatpush.bf16.msra.mxu0 %v1418
      %1624 = vmatpush.bf16.msra.mxu0 %v1417
      %1625 = vmatpush.bf16.msra.mxu0 %v1416
      %1626 = vmatpush.bf16.msra.mxu0 %v1415
      %1627 = vmatpush.bf16.msra.mxu0 %v1414
      %1628 = vmatpush.bf16.msra.mxu0 %v1413
      %1629 = vmatpush.bf16.msra.mxu0 %v1412
      %1630 = vmatmul.bf16.gmra.mxu0 %v776
      %v1631 = vpop.f32.mrf.mxu0
      %v1632 = vadd.f32 %v1543, %v1631
      %v1633 = vpop.f32.mrf.mxu0
      %v1634 = vadd.f32 %v1545, %v1633
      %1635 = vmatmul.bf16.gmra.mxu0 %v777
      %v1636 = vpop.f32.mrf.mxu0
      %v1637 = vadd.f32 %v1548, %v1636
      %v1638 = vpop.f32.mrf.mxu0
      %v1639 = vadd.f32 %v1550, %v1638
      %1640 = vmatmul.bf16.gmra.mxu0 %v778
      %v1641 = vpop.f32.mrf.mxu0
      %v1642 = vadd.f32 %v1553, %v1641
      %v1643 = vpop.f32.mrf.mxu0
      %v1644 = vadd.f32 %v1555, %v1643
      %1645 = vmatmul.bf16.gmra.mxu0 %v779
      %v1646 = vpop.f32.mrf.mxu0
      %v1647 = vadd.f32 %v1558, %v1646
      %v1648 = vpop.f32.mrf.mxu0
      %v1649 = vadd.f32 %v1560, %v1648
      %1650 = vmatmul.bf16.gmra.mxu0 %v780
      %v1651 = vpop.f32.mrf.mxu0
      %v1652 = vadd.f32 %v1563, %v1651
      %v1653 = vpop.f32.mrf.mxu0
      %v1654 = vadd.f32 %v1565, %v1653
      %1655 = vmatmul.bf16.gmra.mxu0 %v781
      %v1656 = vpop.f32.mrf.mxu0
      %v1657 = vadd.f32 %v1568, %v1656
      %v1658 = vpop.f32.mrf.mxu0
      %v1659 = vadd.f32 %v1570, %v1658
      %1660 = vmatmul.bf16.gmra.mxu0 %v782
      %v1661 = vpop.f32.mrf.mxu0
      %v1662 = vadd.f32 %v1573, %v1661
      %v1663 = vpop.f32.mrf.mxu0
      %v1664 = vadd.f32 %v1575, %v1663
      %1665 = vmatmul.bf16.gmra.mxu0 %v783
      %v1666 = vpop.f32.mrf.mxu0
      %v1667 = vadd.f32 %v1578, %v1666
      %v1668 = vpop.f32.mrf.mxu0
      %v1669 = vadd.f32 %v1580, %v1668
      %1670 = vmatmul.bf16.gmra.mxu0 %v784
      %v1671 = vpop.f32.mrf.mxu0
      %v1672 = vadd.f32 %v1583, %v1671
      %v1673 = vpop.f32.mrf.mxu0
      %v1674 = vadd.f32 %v1585, %v1673
      %1675 = vmatmul.bf16.gmra.mxu0 %v785
      %v1676 = vpop.f32.mrf.mxu0
      %v1677 = vadd.f32 %v1588, %v1676
      %v1678 = vpop.f32.mrf.mxu0
      %v1679 = vadd.f32 %v1590, %v1678
      %1680 = vmatmul.bf16.gmra.mxu0 %v786
      %v1681 = vpop.f32.mrf.mxu0
      %v1682 = vadd.f32 %v1593, %v1681
      %v1683 = vpop.f32.mrf.mxu0
      %v1684 = vadd.f32 %v1595, %v1683
      %1685 = vmatmul.bf16.gmra.mxu0 %v787
      %v1686 = vpop.f32.mrf.mxu0
      %v1687 = vadd.f32 %v1598, %v1686
      %v1688 = vpop.f32.mrf.mxu0
      %v1689 = vadd.f32 %v1600, %v1688
      %1690 = vmatmul.bf16.gmra.mxu0 %v788
      %v1691 = vpop.f32.mrf.mxu0
      %v1692 = vadd.f32 %v1603, %v1691
      %v1693 = vpop.f32.mrf.mxu0
      %v1694 = vadd.f32 %v1605, %v1693
      %1695 = vmatmul.bf16.gmra.mxu0 %v789
      %v1696 = vpop.f32.mrf.mxu0
      %v1697 = vadd.f32 %v1608, %v1696
      %v1698 = vpop.f32.mrf.mxu0
      %v1699 = vadd.f32 %v1610, %v1698
      %1700 = vmatmul.bf16.gmra.mxu0 %v790
      %v1701 = vpop.f32.mrf.mxu0
      %v1702 = vadd.f32 %v1613, %v1701
      %v1703 = vpop.f32.mrf.mxu0
      %v1704 = vadd.f32 %v1615, %v1703
      %1705 = vmatmul.bf16.gmra.mxu0 %v791
      %v1706 = vpop.f32.mrf.mxu0
      %v1707 = vadd.f32 %v1618, %v1706
      %v1708 = vpop.f32.mrf.mxu0
      %v1709 = vadd.f32 %v1620, %v1708
      %1710 = vdwg.mxu0
      %v1711 = vld [vmem:[%s3 + $0x180] sm:$0xf]
      %v1712 = vld [vmem:[%s3 + $0x184] sm:$0xf]
      %v1713 = vld [vmem:[%s3 + $0x188] sm:$0xf]
      %v1714 = vld [vmem:[%s3 + $0x18c] sm:$0xf]
      %v1715 = vld [vmem:[%s3 + $0x190] sm:$0xf]
      %v1716 = vld [vmem:[%s3 + $0x194] sm:$0xf]
      %v1717 = vld [vmem:[%s3 + $0x198] sm:$0xf]
      %v1718 = vld [vmem:[%s3 + $0x19c] sm:$0xf]
      %v1719 = vld [vmem:[%s3 + $0x1a0] sm:$0xf]
      %v1720 = vld [vmem:[%s3 + $0x1a4] sm:$0xf]
      %v1721 = vld [vmem:[%s3 + $0x1a8] sm:$0xf]
      %v1722 = vld [vmem:[%s3 + $0x1ac] sm:$0xf]
      %v1723 = vld [vmem:[%s3 + $0x1b0] sm:$0xf]
      %v1724 = vld [vmem:[%s3 + $0x1b4] sm:$0xf]
      %v1725 = vld [vmem:[%s3 + $0x1b8] sm:$0xf]
      %v1726 = vld [vmem:[%s3 + $0x1bc] sm:$0xf]
      %v1727 = vld [vmem:[%s3 + $0x1c0] sm:$0xf]
      %v1728 = vld [vmem:[%s3 + $0x1c4] sm:$0xf]
      %v1729 = vld [vmem:[%s3 + $0x1c8] sm:$0xf]
      %v1730 = vld [vmem:[%s3 + $0x1cc] sm:$0xf]
      %v1731 = vld [vmem:[%s3 + $0x1d0] sm:$0xf]
      %v1732 = vld [vmem:[%s3 + $0x1d4] sm:$0xf]
      %v1733 = vld [vmem:[%s3 + $0x1d8] sm:$0xf]
      %v1734 = vld [vmem:[%s3 + $0x1dc] sm:$0xf]
      %v1735 = vld [vmem:[%s3 + $0x1e0] sm:$0xf]
      %v1736 = vld [vmem:[%s3 + $0x1e4] sm:$0xf]
      %v1737 = vld [vmem:[%s3 + $0x1e8] sm:$0xf]
      %v1738 = vld [vmem:[%s3 + $0x1ec] sm:$0xf]
      %v1739 = vld [vmem:[%s3 + $0x1f0] sm:$0xf]
      %v1740 = vld [vmem:[%s3 + $0x1f4] sm:$0xf]
      %v1741 = vld [vmem:[%s3 + $0x1f8] sm:$0xf]
      %v1742 = vld [vmem:[%s3 + $0x1fc] sm:$0xf]
      %v1743 = vld [vmem:[%s3 + $0x200] sm:$0xf]
      %v1744 = vld [vmem:[%s3 + $0x204] sm:$0xf]
      %v1745 = vld [vmem:[%s3 + $0x208] sm:$0xf]
      %v1746 = vld [vmem:[%s3 + $0x20c] sm:$0xf]
      %v1747 = vld [vmem:[%s3 + $0x210] sm:$0xf]
      %v1748 = vld [vmem:[%s3 + $0x214] sm:$0xf]
      %v1749 = vld [vmem:[%s3 + $0x218] sm:$0xf]
      %v1750 = vld [vmem:[%s3 + $0x21c] sm:$0xf]
      %v1751 = vld [vmem:[%s3 + $0x220] sm:$0xf]
      %v1752 = vld [vmem:[%s3 + $0x224] sm:$0xf]
      %v1753 = vld [vmem:[%s3 + $0x228] sm:$0xf]
      %v1754 = vld [vmem:[%s3 + $0x22c] sm:$0xf]
      %v1755 = vld [vmem:[%s3 + $0x230] sm:$0xf]
      %v1756 = vld [vmem:[%s3 + $0x234] sm:$0xf]
      %v1757 = vld [vmem:[%s3 + $0x238] sm:$0xf]
      %v1758 = vld [vmem:[%s3 + $0x23c] sm:$0xf]
      %v1807 = vunpack.c.l.b16 %v1711
      %v1808 = vunpack.c.l.b16 %v1712
      %v1809 = vunpack.c.l.b16 %v1713
      %v1810 = vunpack.c.l.b16 %v1714
      %v1811 = vunpack.c.l.b16 %v1715
      %v1812 = vunpack.c.l.b16 %v1716
      %v1813 = vunpack.c.l.b16 %v1717
      %v1814 = vunpack.c.l.b16 %v1718
      %v1815 = vunpack.c.l.b16 %v1719
      %v1816 = vunpack.c.l.b16 %v1720
      %v1817 = vunpack.c.l.b16 %v1721
      %v1818 = vunpack.c.l.b16 %v1722
      %v1819 = vunpack.c.l.b16 %v1723
      %v1820 = vunpack.c.l.b16 %v1724
      %v1821 = vunpack.c.l.b16 %v1725
      %v1822 = vunpack.c.l.b16 %v1726
      %v1823 = vunpack.c.l.b16 %v1727
      %v1824 = vunpack.c.l.b16 %v1728
      %v1825 = vunpack.c.l.b16 %v1729
      %v1826 = vunpack.c.l.b16 %v1730
      %v1827 = vunpack.c.l.b16 %v1731
      %v1828 = vunpack.c.l.b16 %v1732
      %v1829 = vunpack.c.l.b16 %v1733
      %v1830 = vunpack.c.l.b16 %v1734
      %v1831 = vunpack.c.l.b16 %v1735
      %v1832 = vunpack.c.l.b16 %v1736
      %v1833 = vunpack.c.l.b16 %v1737
      %v1834 = vunpack.c.l.b16 %v1738
      %v1835 = vunpack.c.l.b16 %v1739
      %v1836 = vunpack.c.l.b16 %v1740
      %v1837 = vunpack.c.l.b16 %v1741
      %v1838 = vunpack.c.l.b16 %v1742
      %v1839 = vunpack.c.l.b16 %v1743
      %v1840 = vunpack.c.l.b16 %v1744
      %v1841 = vunpack.c.l.b16 %v1745
      %v1842 = vunpack.c.l.b16 %v1746
      %v1843 = vunpack.c.l.b16 %v1747
      %v1844 = vunpack.c.l.b16 %v1748
      %v1845 = vunpack.c.l.b16 %v1749
      %v1846 = vunpack.c.l.b16 %v1750
      %v1847 = vunpack.c.l.b16 %v1751
      %v1848 = vunpack.c.l.b16 %v1752
      %v1849 = vunpack.c.l.b16 %v1753
      %v1850 = vunpack.c.l.b16 %v1754
      %v1851 = vunpack.c.l.b16 %v1755
      %v1852 = vunpack.c.l.b16 %v1756
      %v1853 = vunpack.c.l.b16 %v1757
      %v1854 = vunpack.c.l.b16 %v1758
      %v1855 = vpack.c.b16 %v1808, %v1807
      %v1856 = vpack.c.b16 %v1810, %v1809
      %v1857 = vpack.c.b16 %v1812, %v1811
      %v1858 = vpack.c.b16 %v1814, %v1813
      %v1859 = vpack.c.b16 %v1816, %v1815
      %v1860 = vpack.c.b16 %v1818, %v1817
      %v1861 = vpack.c.b16 %v1820, %v1819
      %v1862 = vpack.c.b16 %v1822, %v1821
      %v1863 = vpack.c.b16 %v1824, %v1823
      %v1864 = vpack.c.b16 %v1826, %v1825
      %v1865 = vpack.c.b16 %v1828, %v1827
      %v1866 = vpack.c.b16 %v1830, %v1829
      %v1867 = vpack.c.b16 %v1832, %v1831
      %v1868 = vpack.c.b16 %v1834, %v1833
      %v1869 = vpack.c.b16 %v1836, %v1835
      %v1870 = vpack.c.b16 %v1838, %v1837
      %v1871 = vpack.c.b16 %v1840, %v1839
      %v1872 = vpack.c.b16 %v1842, %v1841
      %v1873 = vpack.c.b16 %v1844, %v1843
      %v1874 = vpack.c.b16 %v1846, %v1845
      %v1875 = vpack.c.b16 %v1848, %v1847
      %v1876 = vpack.c.b16 %v1850, %v1849
      %v1877 = vpack.c.b16 %v1852, %v1851
      %v1878 = vpack.c.b16 %v1854, %v1853
      %1903 = vmatpush.bf16.msra.mxu0 %v1862
      %1904 = vmatpush.bf16.msra.mxu0 %v1861
      %1905 = vmatpush.bf16.msra.mxu0 %v1860
      %1906 = vmatpush.bf16.msra.mxu0 %v1859
      %1907 = vmatpush.bf16.msra.mxu0 %v1858
      %1908 = vmatpush.bf16.msra.mxu0 %v1857
      %1909 = vmatpush.bf16.msra.mxu0 %v1856
      %1910 = vmatpush.bf16.msra.mxu0 %v1855
      %1911 = vmatmul.bf16.gmra.mxu0 %v707
      %v1912 = vpop.f32.mrf.mxu0
      %v1913 = vadd.f32 0.0, %v1912
      %v1914 = vpop.f32.mrf.mxu0
      %v1915 = vadd.f32 0.0, %v1914
      %1916 = vmatmul.bf16.gmra.mxu0 %v708
      %v1917 = vpop.f32.mrf.mxu0
      %v1918 = vadd.f32 0.0, %v1917
      %v1919 = vpop.f32.mrf.mxu0
      %v1920 = vadd.f32 0.0, %v1919
      %1921 = vmatmul.bf16.gmra.mxu0 %v709
      %v1922 = vpop.f32.mrf.mxu0
      %v1923 = vadd.f32 0.0, %v1922
      %v1924 = vpop.f32.mrf.mxu0
      %v1925 = vadd.f32 0.0, %v1924
      %1926 = vmatmul.bf16.gmra.mxu0 %v710
      %v1927 = vpop.f32.mrf.mxu0
      %v1928 = vadd.f32 0.0, %v1927
      %v1929 = vpop.f32.mrf.mxu0
      %v1930 = vadd.f32 0.0, %v1929
      %1931 = vmatmul.bf16.gmra.mxu0 %v711
      %v1932 = vpop.f32.mrf.mxu0
      %v1933 = vadd.f32 0.0, %v1932
      %v1934 = vpop.f32.mrf.mxu0
      %v1935 = vadd.f32 0.0, %v1934
      %1936 = vmatmul.bf16.gmra.mxu0 %v712
      %v1937 = vpop.f32.mrf.mxu0
      %v1938 = vadd.f32 0.0, %v1937
      %v1939 = vpop.f32.mrf.mxu0
      %v1940 = vadd.f32 0.0, %v1939
      %1941 = vmatmul.bf16.gmra.mxu0 %v713
      %v1942 = vpop.f32.mrf.mxu0
      %v1943 = vadd.f32 0.0, %v1942
      %v1944 = vpop.f32.mrf.mxu0
      %v1945 = vadd.f32 0.0, %v1944
      %1946 = vmatmul.bf16.gmra.mxu0 %v714
      %v1947 = vpop.f32.mrf.mxu0
      %v1948 = vadd.f32 0.0, %v1947
      %v1949 = vpop.f32.mrf.mxu0
      %v1950 = vadd.f32 0.0, %v1949
      %1951 = vmatmul.bf16.gmra.mxu0 %v715
      %v1952 = vpop.f32.mrf.mxu0
      %v1953 = vadd.f32 0.0, %v1952
      %v1954 = vpop.f32.mrf.mxu0
      %v1955 = vadd.f32 0.0, %v1954
      %1956 = vmatmul.bf16.gmra.mxu0 %v716
      %v1957 = vpop.f32.mrf.mxu0
      %v1958 = vadd.f32 0.0, %v1957
      %v1959 = vpop.f32.mrf.mxu0
      %v1960 = vadd.f32 0.0, %v1959
      %1961 = vmatmul.bf16.gmra.mxu0 %v717
      %v1962 = vpop.f32.mrf.mxu0
      %v1963 = vadd.f32 0.0, %v1962
      %v1964 = vpop.f32.mrf.mxu0
      %v1965 = vadd.f32 0.0, %v1964
      %1966 = vmatmul.bf16.gmra.mxu0 %v718
      %v1967 = vpop.f32.mrf.mxu0
      %v1968 = vadd.f32 0.0, %v1967
      %v1969 = vpop.f32.mrf.mxu0
      %v1970 = vadd.f32 0.0, %v1969
      %1971 = vmatmul.bf16.gmra.mxu0 %v719
      %v1972 = vpop.f32.mrf.mxu0
      %v1973 = vadd.f32 0.0, %v1972
      %v1974 = vpop.f32.mrf.mxu0
      %v1975 = vadd.f32 0.0, %v1974
      %1976 = vmatmul.bf16.gmra.mxu0 %v720
      %v1977 = vpop.f32.mrf.mxu0
      %v1978 = vadd.f32 0.0, %v1977
      %v1979 = vpop.f32.mrf.mxu0
      %v1980 = vadd.f32 0.0, %v1979
      %1981 = vmatmul.bf16.gmra.mxu0 %v721
      %v1982 = vpop.f32.mrf.mxu0
      %v1983 = vadd.f32 0.0, %v1982
      %v1984 = vpop.f32.mrf.mxu0
      %v1985 = vadd.f32 0.0, %v1984
      %1986 = vmatmul.bf16.gmra.mxu0 %v705
      %v1987 = vpop.f32.mrf.mxu0
      %v1988 = vadd.f32 0.0, %v1987
      %v1989 = vpop.f32.mrf.mxu0
      %v1990 = vadd.f32 0.0, %v1989
      %1991 = vdwg.mxu0
      %1992 = vmatpush.bf16.msra.mxu0 %v1870
      %1993 = vmatpush.bf16.msra.mxu0 %v1869
      %1994 = vmatpush.bf16.msra.mxu0 %v1868
      %1995 = vmatpush.bf16.msra.mxu0 %v1867
      %1996 = vmatpush.bf16.msra.mxu0 %v1866
      %1997 = vmatpush.bf16.msra.mxu0 %v1865
      %1998 = vmatpush.bf16.msra.mxu0 %v1864
      %1999 = vmatpush.bf16.msra.mxu0 %v1863
      %2000 = vmatmul.bf16.gmra.mxu0 %v535
      %v2001 = vpop.f32.mrf.mxu0
      %v2002 = vadd.f32 %v1913, %v2001
      %v2003 = vpop.f32.mrf.mxu0
      %v2004 = vadd.f32 %v1915, %v2003
      %2005 = vmatmul.bf16.gmra.mxu0 %v536
      %v2006 = vpop.f32.mrf.mxu0
      %v2007 = vadd.f32 %v1918, %v2006
      %v2008 = vpop.f32.mrf.mxu0
      %v2009 = vadd.f32 %v1920, %v2008
      %2010 = vmatmul.bf16.gmra.mxu0 %v537
      %v2011 = vpop.f32.mrf.mxu0
      %v2012 = vadd.f32 %v1923, %v2011
      %v2013 = vpop.f32.mrf.mxu0
      %v2014 = vadd.f32 %v1925, %v2013
      %2015 = vmatmul.bf16.gmra.mxu0 %v538
      %v2016 = vpop.f32.mrf.mxu0
      %v2017 = vadd.f32 %v1928, %v2016
      %v2018 = vpop.f32.mrf.mxu0
      %v2019 = vadd.f32 %v1930, %v2018
      %2020 = vmatmul.bf16.gmra.mxu0 %v539
      %v2021 = vpop.f32.mrf.mxu0
      %v2022 = vadd.f32 %v1933, %v2021
      %v2023 = vpop.f32.mrf.mxu0
      %v2024 = vadd.f32 %v1935, %v2023
      %2025 = vmatmul.bf16.gmra.mxu0 %v540
      %v2026 = vpop.f32.mrf.mxu0
      %v2027 = vadd.f32 %v1938, %v2026
      %v2028 = vpop.f32.mrf.mxu0
      %v2029 = vadd.f32 %v1940, %v2028
      %2030 = vmatmul.bf16.gmra.mxu0 %v541
      %v2031 = vpop.f32.mrf.mxu0
      %v2032 = vadd.f32 %v1943, %v2031
      %v2033 = vpop.f32.mrf.mxu0
      %v2034 = vadd.f32 %v1945, %v2033
      %2035 = vmatmul.bf16.gmra.mxu0 %v542
      %v2036 = vpop.f32.mrf.mxu0
      %v2037 = vadd.f32 %v1948, %v2036
      %v2038 = vpop.f32.mrf.mxu0
      %v2039 = vadd.f32 %v1950, %v2038
      %2040 = vmatmul.bf16.gmra.mxu0 %v543
      %v2041 = vpop.f32.mrf.mxu0
      %v2042 = vadd.f32 %v1953, %v2041
      %v2043 = vpop.f32.mrf.mxu0
      %v2044 = vadd.f32 %v1955, %v2043
      %2045 = vmatmul.bf16.gmra.mxu0 %v544
      %v2046 = vpop.f32.mrf.mxu0
      %v2047 = vadd.f32 %v1958, %v2046
      %v2048 = vpop.f32.mrf.mxu0
      %v2049 = vadd.f32 %v1960, %v2048
      %2050 = vmatmul.bf16.gmra.mxu0 %v545
      %v2051 = vpop.f32.mrf.mxu0
      %v2052 = vadd.f32 %v1963, %v2051
      %v2053 = vpop.f32.mrf.mxu0
      %v2054 = vadd.f32 %v1965, %v2053
      %2055 = vmatmul.bf16.gmra.mxu0 %v546
      %v2056 = vpop.f32.mrf.mxu0
      %v2057 = vadd.f32 %v1968, %v2056
      %v2058 = vpop.f32.mrf.mxu0
      %v2059 = vadd.f32 %v1970, %v2058
      %2060 = vmatmul.bf16.gmra.mxu0 %v547
      %v2061 = vpop.f32.mrf.mxu0
      %v2062 = vadd.f32 %v1973, %v2061
      %v2063 = vpop.f32.mrf.mxu0
      %v2064 = vadd.f32 %v1975, %v2063
      %2065 = vmatmul.bf16.gmra.mxu0 %v548
      %v2066 = vpop.f32.mrf.mxu0
      %v2067 = vadd.f32 %v1978, %v2066
      %v2068 = vpop.f32.mrf.mxu0
      %v2069 = vadd.f32 %v1980, %v2068
      %2070 = vmatmul.bf16.gmra.mxu0 %v549
      %v2071 = vpop.f32.mrf.mxu0
      %v2072 = vadd.f32 %v1983, %v2071
      %v2073 = vpop.f32.mrf.mxu0
      %v2074 = vadd.f32 %v1985, %v2073
      %2075 = vmatmul.bf16.gmra.mxu0 0
      %v2076 = vpop.f32.mrf.mxu0
      %v2077 = vadd.f32 %v1988, %v2076
      %v2078 = vpop.f32.mrf.mxu0
      %v2079 = vadd.f32 %v1990, %v2078
      %2080 = vdwg.mxu0
      %2081 = vmatpush.bf16.msra.mxu0 %v1878
      %2082 = vmatpush.bf16.msra.mxu0 %v1877
      %2083 = vmatpush.bf16.msra.mxu0 %v1876
      %2084 = vmatpush.bf16.msra.mxu0 %v1875
      %2085 = vmatpush.bf16.msra.mxu0 %v1874
      %2086 = vmatpush.bf16.msra.mxu0 %v1873
      %2087 = vmatpush.bf16.msra.mxu0 %v1872
      %2088 = vmatpush.bf16.msra.mxu0 %v1871
      %2089 = vmatmul.bf16.gmra.mxu0 %v778
      %v2090 = vpop.f32.mrf.mxu0
      %v2091 = vadd.f32 %v2002, %v2090
      %v2092 = vpop.f32.mrf.mxu0
      %v2093 = vadd.f32 %v2004, %v2092
      %2094 = vmatmul.bf16.gmra.mxu0 %v779
      %v2095 = vpop.f32.mrf.mxu0
      %v2096 = vadd.f32 %v2007, %v2095
      %v2097 = vpop.f32.mrf.mxu0
      %v2098 = vadd.f32 %v2009, %v2097
      %2099 = vmatmul.bf16.gmra.mxu0 %v780
      %v2100 = vpop.f32.mrf.mxu0
      %v2101 = vadd.f32 %v2012, %v2100
      %v2102 = vpop.f32.mrf.mxu0
      %v2103 = vadd.f32 %v2014, %v2102
      %2104 = vmatmul.bf16.gmra.mxu0 %v781
      %v2105 = vpop.f32.mrf.mxu0
      %v2106 = vadd.f32 %v2017, %v2105
      %v2107 = vpop.f32.mrf.mxu0
      %v2108 = vadd.f32 %v2019, %v2107
      %2109 = vmatmul.bf16.gmra.mxu0 %v782
      %v2110 = vpop.f32.mrf.mxu0
      %v2111 = vadd.f32 %v2022, %v2110
      %v2112 = vpop.f32.mrf.mxu0
      %v2113 = vadd.f32 %v2024, %v2112
      %2114 = vmatmul.bf16.gmra.mxu0 %v783
      %v2115 = vpop.f32.mrf.mxu0
      %v2116 = vadd.f32 %v2027, %v2115
      %v2117 = vpop.f32.mrf.mxu0
      %v2118 = vadd.f32 %v2029, %v2117
      %2119 = vmatmul.bf16.gmra.mxu0 %v784
      %v2120 = vpop.f32.mrf.mxu0
      %v2121 = vadd.f32 %v2032, %v2120
      %v2122 = vpop.f32.mrf.mxu0
      %v2123 = vadd.f32 %v2034, %v2122
      %2124 = vmatmul.bf16.gmra.mxu0 %v785
      %v2125 = vpop.f32.mrf.mxu0
      %v2126 = vadd.f32 %v2037, %v2125
      %v2127 = vpop.f32.mrf.mxu0
      %v2128 = vadd.f32 %v2039, %v2127
      %2129 = vmatmul.bf16.gmra.mxu0 %v786
      %v2130 = vpop.f32.mrf.mxu0
      %v2131 = vadd.f32 %v2042, %v2130
      %v2132 = vpop.f32.mrf.mxu0
      %v2133 = vadd.f32 %v2044, %v2132
      %2134 = vmatmul.bf16.gmra.mxu0 %v787
      %v2135 = vpop.f32.mrf.mxu0
      %v2136 = vadd.f32 %v2047, %v2135
      %v2137 = vpop.f32.mrf.mxu0
      %v2138 = vadd.f32 %v2049, %v2137
      %2139 = vmatmul.bf16.gmra.mxu0 %v788
      %v2140 = vpop.f32.mrf.mxu0
      %v2141 = vadd.f32 %v2052, %v2140
      %v2142 = vpop.f32.mrf.mxu0
      %v2143 = vadd.f32 %v2054, %v2142
      %2144 = vmatmul.bf16.gmra.mxu0 %v789
      %v2145 = vpop.f32.mrf.mxu0
      %v2146 = vadd.f32 %v2057, %v2145
      %v2147 = vpop.f32.mrf.mxu0
      %v2148 = vadd.f32 %v2059, %v2147
      %2149 = vmatmul.bf16.gmra.mxu0 %v790
      %v2150 = vpop.f32.mrf.mxu0
      %v2151 = vadd.f32 %v2062, %v2150
      %v2152 = vpop.f32.mrf.mxu0
      %v2153 = vadd.f32 %v2064, %v2152
      %2154 = vmatmul.bf16.gmra.mxu0 %v791
      %v2155 = vpop.f32.mrf.mxu0
      %v2156 = vadd.f32 %v2067, %v2155
      %v2157 = vpop.f32.mrf.mxu0
      %v2158 = vadd.f32 %v2069, %v2157
      %2159 = vmatmul.bf16.gmra.mxu0 %v792
      %v2160 = vpop.f32.mrf.mxu0
      %v2161 = vadd.f32 %v2072, %v2160
      %v2162 = vpop.f32.mrf.mxu0
      %v2163 = vadd.f32 %v2074, %v2162
      %2164 = vmatmul.bf16.gmra.mxu0 %v776
      %v2165 = vpop.f32.mrf.mxu0
      %v2166 = vadd.f32 %v2077, %v2165
      %v2167 = vpop.f32.mrf.mxu0
      %v2168 = vadd.f32 %v2079, %v2167
      %2169 = vdwg.mxu0
      %v2170 = vadd.f32 %v1632, %v2091
      %v2171 = vadd.f32 %v1634, %v2093
      %v2172 = vadd.f32 %v1637, %v2096
      %v2173 = vadd.f32 %v1639, %v2098
      %v2174 = vadd.f32 %v1642, %v2101
      %v2175 = vadd.f32 %v1644, %v2103
      %v2176 = vadd.f32 %v1647, %v2106
      %v2177 = vadd.f32 %v1649, %v2108
      %v2178 = vadd.f32 %v1652, %v2111
      %v2179 = vadd.f32 %v1654, %v2113
      %v2180 = vadd.f32 %v1657, %v2116
      %v2181 = vadd.f32 %v1659, %v2118
      %v2182 = vadd.f32 %v1662, %v2121
      %v2183 = vadd.f32 %v1664, %v2123
      %v2184 = vadd.f32 %v1667, %v2126
      %v2185 = vadd.f32 %v1669, %v2128
      %v2186 = vadd.f32 %v1672, %v2131
      %v2187 = vadd.f32 %v1674, %v2133
      %v2188 = vadd.f32 %v1677, %v2136
      %v2189 = vadd.f32 %v1679, %v2138
      %v2190 = vadd.f32 %v1682, %v2141
      %v2191 = vadd.f32 %v1684, %v2143
      %v2192 = vadd.f32 %v1687, %v2146
      %v2193 = vadd.f32 %v1689, %v2148
      %v2194 = vadd.f32 %v1692, %v2151
      %v2195 = vadd.f32 %v1694, %v2153
      %v2196 = vadd.f32 %v1697, %v2156
      %v2197 = vadd.f32 %v1699, %v2158
      %v2198 = vadd.f32 %v1702, %v2161
      %v2199 = vadd.f32 %v1704, %v2163
      %v2200 = vadd.f32 %v1707, %v2166
      %v2201 = vadd.f32 %v1709, %v2168
      %v2202 = vpack.c.bf16 %v2170, %v2170
      %v2203 = vpack.c.bf16 %v2171, %v2171
      %v2204 = vpack.c.bf16 %v2172, %v2172
      %v2205 = vpack.c.bf16 %v2173, %v2173
      %v2206 = vpack.c.bf16 %v2174, %v2174
      %v2207 = vpack.c.bf16 %v2175, %v2175
      %v2208 = vpack.c.bf16 %v2176, %v2176
      %v2209 = vpack.c.bf16 %v2177, %v2177
      %v2210 = vpack.c.bf16 %v2178, %v2178
      %v2211 = vpack.c.bf16 %v2179, %v2179
      %v2212 = vpack.c.bf16 %v2180, %v2180
      %v2213 = vpack.c.bf16 %v2181, %v2181
      %v2214 = vpack.c.bf16 %v2182, %v2182
      %v2215 = vpack.c.bf16 %v2183, %v2183
      %v2216 = vpack.c.bf16 %v2184, %v2184
      %v2217 = vpack.c.bf16 %v2185, %v2185
      %v2218 = vpack.c.bf16 %v2186, %v2186
      %v2219 = vpack.c.bf16 %v2187, %v2187
      %v2220 = vpack.c.bf16 %v2188, %v2188
      %v2221 = vpack.c.bf16 %v2189, %v2189
      %v2222 = vpack.c.bf16 %v2190, %v2190
      %v2223 = vpack.c.bf16 %v2191, %v2191
      %v2224 = vpack.c.bf16 %v2192, %v2192
      %v2225 = vpack.c.bf16 %v2193, %v2193
      %v2226 = vpack.c.bf16 %v2194, %v2194
      %v2227 = vpack.c.bf16 %v2195, %v2195
      %v2228 = vpack.c.bf16 %v2196, %v2196
      %v2229 = vpack.c.bf16 %v2197, %v2197
      %v2230 = vpack.c.bf16 %v2198, %v2198
      %v2231 = vpack.c.bf16 %v2199, %v2199
      %v2232 = vpack.c.bf16 %v2200, %v2200
      %v2233 = vpack.c.bf16 %v2201, %v2201
      %2234 = vst [vmem:[%s262] sm:$0xf] %v2202
      %2235 = vst [vmem:[%s262 + $0x4] sm:$0xf] %v2203
      %2236 = vst [vmem:[%s262 + $0x8] sm:$0xf] %v2204
      %2237 = vst [vmem:[%s262 + $0xc] sm:$0xf] %v2205
      %2238 = vst [vmem:[%s262 + $0x10] sm:$0xf] %v2206
      %2239 = vst [vmem:[%s262 + $0x14] sm:$0xf] %v2207
      %2240 = vst [vmem:[%s262 + $0x18] sm:$0xf] %v2208
      %2241 = vst [vmem:[%s262 + $0x1c] sm:$0xf] %v2209
      %2242 = vst [vmem:[%s262 + $0x20] sm:$0xf] %v2210
      %2243 = vst [vmem:[%s262 + $0x24] sm:$0xf] %v2211
      %2244 = vst [vmem:[%s262 + $0x28] sm:$0xf] %v2212
      %2245 = vst [vmem:[%s262 + $0x2c] sm:$0xf] %v2213
      %2246 = vst [vmem:[%s262 + $0x30] sm:$0xf] %v2214
      %2247 = vst [vmem:[%s262 + $0x34] sm:$0xf] %v2215
      %2248 = vst [vmem:[%s262 + $0x38] sm:$0xf] %v2216
      %2249 = vst [vmem:[%s262 + $0x3c] sm:$0xf] %v2217
      %2250 = vst [vmem:[%s262 + $0x40] sm:$0xf] %v2218
      %2251 = vst [vmem:[%s262 + $0x44] sm:$0xf] %v2219
      %2252 = vst [vmem:[%s262 + $0x48] sm:$0xf] %v2220
      %2253 = vst [vmem:[%s262 + $0x4c] sm:$0xf] %v2221
      %2254 = vst [vmem:[%s262 + $0x50] sm:$0xf] %v2222
      %2255 = vst [vmem:[%s262 + $0x54] sm:$0xf] %v2223
      %2256 = vst [vmem:[%s262 + $0x58] sm:$0xf] %v2224
      %2257 = vst [vmem:[%s262 + $0x5c] sm:$0xf] %v2225
      %2258 = vst [vmem:[%s262 + $0x60] sm:$0xf] %v2226
      %2259 = vst [vmem:[%s262 + $0x64] sm:$0xf] %v2227
      %2260 = vst [vmem:[%s262 + $0x68] sm:$0xf] %v2228
      %2261 = vst [vmem:[%s262 + $0x6c] sm:$0xf] %v2229
      %2262 = vst [vmem:[%s262 + $0x70] sm:$0xf] %v2230
      %2263 = vst [vmem:[%s262 + $0x74] sm:$0xf] %v2231
      %2264 = vst [vmem:[%s262 + $0x78] sm:$0xf] %v2232
      %2265 = vst [vmem:[%s262 + $0x7c] sm:$0xf] %v2233
      %v2266 = vadd.f32 %v2170, %v2171
      %v2267 = vadd.f32 %v2266, %v2172
      %v2268 = vadd.f32 %v2267, %v2173
      %v2269 = vadd.f32 %v2268, %v2174
      %v2270 = vadd.f32 %v2269, %v2175
      %v2271 = vadd.f32 %v2270, %v2176
      %v2272 = vadd.f32 %v2271, %v2177
      %v2273 = vadd.f32 %v2272, %v2178
      %v2274 = vadd.f32 %v2273, %v2179
      %v2275 = vadd.f32 %v2274, %v2180
      %v2276 = vadd.f32 %v2275, %v2181
      %v2277 = vadd.f32 %v2276, %v2182
      %v2278 = vadd.f32 %v2277, %v2183
      %v2279 = vadd.f32 %v2278, %v2184
      %v2280 = vadd.f32 %v2279, %v2185
      %v2281 = vadd.f32 %v2280, %v2186
      %v2282 = vadd.f32 %v2281, %v2187
      %v2283 = vadd.f32 %v2282, %v2188
      %v2284 = vadd.f32 %v2283, %v2189
      %v2285 = vadd.f32 %v2284, %v2190
      %v2286 = vadd.f32 %v2285, %v2191
      %v2287 = vadd.f32 %v2286, %v2192
      %v2288 = vadd.f32 %v2287, %v2193
      %v2289 = vadd.f32 %v2288, %v2194
      %v2290 = vadd.f32 %v2289, %v2195
      %v2291 = vadd.f32 %v2290, %v2196
      %v2292 = vadd.f32 %v2291, %v2197
      %v2293 = vadd.f32 %v2292, %v2198
      %v2294 = vadd.f32 %v2293, %v2199
      %v2295 = vadd.f32 %v2294, %v2200
      %v2296 = vadd.f32 %v2295, %v2201
      %v2297 = vrot.slane %v2296, 4
      %v2298 = vadd.f32 %v2296, %v2297
      %v2299 = vrot.slane %v2298, 2
      %v2300 = vadd.f32 %v2298, %v2299
      %v2301 = vrot.slane %v2300, 1
      %v2302 = vadd.f32 %v2300, %v2301
      %2303 = vst [vmem:[%s265] sm:$0x1] %v2302
      %v2304 = vmul.f32 %v2170, %v2170
      %v2305 = vmul.f32 %v2171, %v2171
      %v2306 = vmul.f32 %v2172, %v2172
      %v2307 = vmul.f32 %v2173, %v2173
      %v2308 = vmul.f32 %v2174, %v2174
      %v2309 = vmul.f32 %v2175, %v2175
      %v2310 = vmul.f32 %v2176, %v2176
      %v2311 = vmul.f32 %v2177, %v2177
      %v2312 = vmul.f32 %v2178, %v2178
      %v2313 = vmul.f32 %v2179, %v2179
      %v2314 = vmul.f32 %v2180, %v2180
      %v2315 = vmul.f32 %v2181, %v2181
      %v2316 = vmul.f32 %v2182, %v2182
      %v2317 = vmul.f32 %v2183, %v2183
      %v2318 = vmul.f32 %v2184, %v2184
      %v2319 = vmul.f32 %v2185, %v2185
      %v2320 = vmul.f32 %v2186, %v2186
      %v2321 = vmul.f32 %v2187, %v2187
      %v2322 = vmul.f32 %v2188, %v2188
      %v2323 = vmul.f32 %v2189, %v2189
      %v2324 = vmul.f32 %v2190, %v2190
      %v2325 = vmul.f32 %v2191, %v2191
      %v2326 = vmul.f32 %v2192, %v2192
      %v2327 = vmul.f32 %v2193, %v2193
      %v2328 = vmul.f32 %v2194, %v2194
      %v2329 = vmul.f32 %v2195, %v2195
      %v2330 = vmul.f32 %v2196, %v2196
      %v2331 = vmul.f32 %v2197, %v2197
      %v2332 = vmul.f32 %v2198, %v2198
      %v2333 = vmul.f32 %v2199, %v2199
      %v2334 = vmul.f32 %v2200, %v2200
      %v2335 = vmul.f32 %v2201, %v2201
      %v2336 = vadd.f32 %v2304, %v2305
      %v2337 = vadd.f32 %v2336, %v2306
      %v2338 = vadd.f32 %v2337, %v2307
      %v2339 = vadd.f32 %v2338, %v2308
      %v2340 = vadd.f32 %v2339, %v2309
      %v2341 = vadd.f32 %v2340, %v2310
      %v2342 = vadd.f32 %v2341, %v2311
      %v2343 = vadd.f32 %v2342, %v2312
      %v2344 = vadd.f32 %v2343, %v2313
      %v2345 = vadd.f32 %v2344, %v2314
      %v2346 = vadd.f32 %v2345, %v2315
      %v2347 = vadd.f32 %v2346, %v2316
      %v2348 = vadd.f32 %v2347, %v2317
      %v2349 = vadd.f32 %v2348, %v2318
      %v2350 = vadd.f32 %v2349, %v2319
      %v2351 = vadd.f32 %v2350, %v2320
      %v2352 = vadd.f32 %v2351, %v2321
      %v2353 = vadd.f32 %v2352, %v2322
      %v2354 = vadd.f32 %v2353, %v2323
      %v2355 = vadd.f32 %v2354, %v2324
      %v2356 = vadd.f32 %v2355, %v2325
      %v2357 = vadd.f32 %v2356, %v2326
      %v2358 = vadd.f32 %v2357, %v2327
      %v2359 = vadd.f32 %v2358, %v2328
      %v2360 = vadd.f32 %v2359, %v2329
      %v2361 = vadd.f32 %v2360, %v2330
      %v2362 = vadd.f32 %v2361, %v2331
      %v2363 = vadd.f32 %v2362, %v2332
      %v2364 = vadd.f32 %v2363, %v2333
      %v2365 = vadd.f32 %v2364, %v2334
      %v2366 = vadd.f32 %v2365, %v2335
      %v2367 = vrot.slane %v2366, 4
      %v2368 = vadd.f32 %v2366, %v2367
      %v2369 = vrot.slane %v2368, 2
      %v2370 = vadd.f32 %v2368, %v2369
      %v2371 = vrot.slane %v2370, 1
      %v2372 = vadd.f32 %v2370, %v2371
      %2373 = vst [vmem:[%s268] sm:$0x1] %v2372
      %p2374 = scmp.lt.s32.totalorder %s18, 1
      %s2375 = scalar_select %p2374, %s18, 1
      %s2376 = smul.addr %s2375, 32
      %s2377 = smul.addr %s2376, 4
      %s2378 = scalar_lea.vmem %s4, %s2377
      %p2379 = scmp.lt.s32.totalorder %s18, 1
      %s2380 = scalar_select %p2379, %s18, 1
      %s2381 = scalar_lea.vmem %s5, %s2380
      %p2382 = scmp.lt.s32.totalorder %s18, 1
      %s2383 = scalar_select %p2382, %s18, 1
      %s2384 = scalar_lea.vmem %s6, %s2383
      // Predicated region
      $region37: #{conv_bottle_forward.5} parent=35 // pred_check
        %p2385 = pneg %p125
      $region38: #{conv_bottle_forward.5} parent=35 // pred_check_branch
        %2387 = sbr.rel (%p2385) target = $region40
      $region39: #{conv_bottle_forward.5} parent=35 // pred_region
        _
      $region40: #{conv_bottle_forward.5} parent=35 // pred_fallthru
        _
      // Predicated region
      $region41: #{conv_bottle_forward.5} parent=35 // pred_check
        %p2388 = pneg %p151
      $region42: #{conv_bottle_forward.5} parent=35 // pred_check_branch
        %2390 = sbr.rel (%p2388) target = $region44
      $region43: #{conv_bottle_forward.5} parent=35 // pred_region
        _
      $region44: #{conv_bottle_forward.5} parent=35 // pred_fallthru
        _
      // Predicated region
      $region45: #{conv_bottle_forward.5} parent=35 // pred_check
        %p2391 = pneg %p177
      $region46: #{conv_bottle_forward.5} parent=35 // pred_check_branch
        %2393 = sbr.rel (%p2391) target = $region48
      $region47: #{conv_bottle_forward.5} parent=35 // pred_region
        _
      $region48: #{conv_bottle_forward.5} parent=35 // pred_fallthru
        _
    $region36: #{conv_bottle_forward.5} parent=5 // pred_fallthru
      _
    %p2394 = scmp.le.s32.totalorder 2, %s13
    // Predicated region
    $region49: #{conv_bottle_forward.5} parent=5 // pred_check
      %p2395 = pneg %p2394
    $region50: #{conv_bottle_forward.5} parent=5 // pred_check_branch
      %2397 = sbr.rel (%p2395) target = $region52
    $region51: #{conv_bottle_forward.5} parent=5 // pred_region
      %s2398 = ssub.s32 %s13, 2
      // Predicated region
      $region53: #{conv_bottle_forward.5} parent=51 // pred_check
        %p2399 = pneg %p131
      $region54: #{conv_bottle_forward.5} parent=51 // pred_check_branch
        %2401 = sbr.rel (%p2399) target = $region56
      $region55: #{conv_bottle_forward.5} parent=51 // pred_region
        %p2402 = scmp.lt.s32.totalorder %s19, 1
        %s2403 = scalar_select %p2402, %s19, 1
        %s2404 = smul.addr %s2403, 32
        %s2405 = smul.addr %s2404, 4
        %s2406 = scalar_lea.vmem %s4, %s2405
      $region56: #{conv_bottle_forward.5} parent=51 // pred_fallthru
        _
      // Predicated region
      $region57: #{conv_bottle_forward.5} parent=51 // pred_check
        %p2407 = pneg %p157
      $region58: #{conv_bottle_forward.5} parent=51 // pred_check_branch
        %2409 = sbr.rel (%p2407) target = $region60
      $region59: #{conv_bottle_forward.5} parent=51 // pred_region
        %p2410 = scmp.lt.s32.totalorder %s19, 1
        %s2411 = scalar_select %p2410, %s19, 1
        %s2412 = scalar_lea.vmem %s5, %s2411
      $region60: #{conv_bottle_forward.5} parent=51 // pred_fallthru
        _
      // Predicated region
      $region61: #{conv_bottle_forward.5} parent=51 // pred_check
        %p2413 = pneg %p183
      $region62: #{conv_bottle_forward.5} parent=51 // pred_check_branch
        %2415 = sbr.rel (%p2413) target = $region64
      $region63: #{conv_bottle_forward.5} parent=51 // pred_region
        %p2416 = scmp.lt.s32.totalorder %s19, 1
        %s2417 = scalar_select %p2416, %s19, 1
        %s2418 = scalar_lea.vmem %s6, %s2417
      $region64: #{conv_bottle_forward.5} parent=51 // pred_fallthru
        _
    $region52: #{conv_bottle_forward.5} parent=5 // pred_fallthru
      _
  $region6: #{conv_bottle_forward.5} parent=0 // loop_footer
    %s17 = sadd.s32 1, %s13
  $region7: #{conv_bottle_forward.5} parent=0 // loop_footer_branch
    %12 = sbr.rel target = $region3
  $region8: #{conv_bottle_forward.5} parent=0 // loop_exit
    _

</llo_original>
